<compile_context>
chip_gen: v5e
topology: v5e:2x2
jax: 0.10.0
libtpu: 0.0.40
codegen_flags: <defaults>
</compile_context>

<pallas_src>
import functools

import jax
import jax.numpy as jnp
from jax.experimental import pallas as pl
from jax.experimental.pallas import tpu as pltpu

LANE = 128


def _round_up(x, m):
    return (x + m - 1) // m * m


# ----------------------------------------------------------------------------
# Fused Pallas kernel: T decode steps, each = embedding gather + LSTM stack +
# vocab projection.  Weights / state are VMEM-resident across the whole grid.
# ----------------------------------------------------------------------------
def _decoder_seq_kernel(ids_ref, h0_ref, c0_ref, emb_hbm, w_ref, b_ref,
                        fcw_ref, fcb_ref,
                        pred_ref, h_out_ref, c_out_ref,
                        x_gather, gather_sem, h_state):
    """One grid step == one decode step.

    ids_ref : (T, B)        int32  token ids, SMEM-resident
    h0_ref  : (L, B, F)     f32    initial hidden state
    c0_ref  : (L, B, F)     f32    initial cell state
    emb_hbm : (V, 1, F)     f32    embedding table, stays in HBM (pl.ANY)
    w_ref   : (L, 2F, 4F)   bf16   [W_ih^T ; W_hh^T], gate-blocked cols [i|f|g|o]
    b_ref   : (L, 1, 4F)    f32    b_ih + b_hh, gate-blocked
    fcw_ref : (F, Vp)       bf16   fc_out.weight^T
    fcb_ref : (1, Vp)       f32    fc_out.bias (pad lanes = -1e9)
    pred_ref: (1, B, Vp)    f32    logits for this step
    h_out_ref, c_out_ref : (L, B, F) f32   final (and running) state
    x_gather: (2, B, F)     f32    double-buffered gathered embedding rows
    gather_sem : DMA sems (2, B)
    h_state : (L, B, F)     bf16   bf16 shadow of h for the recurrent matmul
    """
    t = pl.program_id(0)
    num_steps = pl.num_programs(0)
    n_layers, B, F = h_out_ref.shape

    # ---- manual HBM row-gather of the embedding (only B rows per step) -----
    def start_gather(step, slot):
        for b in range(B):
            tok = ids_ref[step, b]
            pltpu.make_async_copy(
                emb_hbm.at[tok],                       # (1, F) row in HBM
                x_gather.at[slot, pl.ds(b, 1)],        # (1, F) in VMEM
                gather_sem.at[slot, b],
            ).start()

    def wait_gather(slot):
        for b in range(B):
            pltpu.make_async_copy(
                emb_hbm.at[0],
                x_gather.at[slot, pl.ds(b, 1)],
                gather_sem.at[slot, b],
            ).wait()

    @pl.when(t == 0)
    def _():
        # Initialize the recurrent state and prime the gather pipeline.
        h_state[...] = h0_ref[...].astype(jnp.bfloat16)
        c_out_ref[...] = c0_ref[...]
        start_gather(0, 0)

    slot = t % 2

    @pl.when(t + 1 < num_steps)
    def _():
        # Prefetch next step's embedding rows while we compute this step.
        start_gather(t + 1, 1 - slot)

    wait_gather(slot)
    x_b16 = x_gather[slot].astype(jnp.bfloat16)        # (B, F)

    # ---- LSTM stack, one timestep, statically unrolled over layers ---------
    for layer in range(n_layers):
        h_prev = h_state[layer]                        # (B, F)  bf16
        c_prev = c_out_ref[layer]                      # (B, F)  f32

        # Fused gate matmul: [x | h_prev] @ [W_ih^T ; W_hh^T]  (K = 2F)
        xh = jnp.concatenate([x_b16, h_prev], axis=-1)         # (B, 2F) bf16
        gates = jnp.dot(xh, w_ref[layer],
                        preferred_element_type=jnp.float32) + b_ref[layer]

        # PyTorch gate order i, f, g, o; each slice is 128-lane aligned.
        i_g = jax.nn.sigmoid(gates[:, 0 * F:1 * F])
        f_g = jax.nn.sigmoid(gates[:, 1 * F:2 * F])
        g_g = jnp.tanh(gates[:, 2 * F:3 * F])
        o_g = jax.nn.sigmoid(gates[:, 3 * F:4 * F])

        c_new = f_g * c_prev + i_g * g_g
        h_new = o_g * jnp.tanh(c_new)

        c_out_ref[layer] = c_new                       # f32 state (also output)
        h_out_ref[layer] = h_new                       # f32 output
        h_b16 = h_new.astype(jnp.bfloat16)
        h_state[layer] = h_b16                         # bf16 recurrent shadow
        x_b16 = h_b16                                  # feeds next layer

    # ---- vocab projection for this step -------------------------------------
    pred_ref[0] = (jnp.dot(x_b16, fcw_ref[...],
                           preferred_element_type=jnp.float32) + fcb_ref[...])


# ----------------------------------------------------------------------------
# Parameters
# ----------------------------------------------------------------------------
def init_decoder_params(key, output_dim, embedding_dim, hidden_dim, n_layers):
    """Raw parameters with the same shapes as the PyTorch module."""
    params = {}
    k = key
    k, sub = jax.random.split(k)
    params["embedding"] = 0.1 * jax.random.normal(
        sub, (output_dim, embedding_dim), jnp.float32)

    params["lstm"] = []
    for layer in range(n_layers):
        in_dim = embedding_dim if layer == 0 else hidden_dim
        k, k1, k2, k3, k4 = jax.random.split(k, 5)
        params["lstm"].append(dict(
            w_ih=0.1 * jax.random.normal(k1, (4 * hidden_dim, in_dim), jnp.float32),
            w_hh=0.1 * jax.random.normal(k2, (4 * hidden_dim, hidden_dim), jnp.float32),
            b_ih=0.1 * jax.random.normal(k3, (4 * hidden_dim,), jnp.float32),
            b_hh=0.1 * jax.random.normal(k4, (4 * hidden_dim,), jnp.float32),
        ))

    k, k1, k2 = jax.random.split(k, 3)
    params["fc_w"] = 0.1 * jax.random.normal(k1, (output_dim, hidden_dim), jnp.float32)
    params["fc_b"] = 0.1 * jax.random.normal(k2, (output_dim,), jnp.float32)
    return params


def pack_decoder_params(raw, output_dim, embedding_dim, hidden_dim, n_layers):
    """One-time pre-fold: transpose, fuse W_ih/W_hh along K, fold biases,
    pad to lane-dense 128 tiles, cast matmul weights to bf16."""
    F = _round_up(max(embedding_dim, hidden_dim), LANE)
    v_pad = _round_up(output_dim, LANE)
    H = hidden_dim

    # Embedding table stays f32 and stays in HBM; lane-padded so gathered rows
    # are (1, F).  Shape (V, 1, F) so the gather DMA indexes a leading axis.
    emb = jnp.zeros((output_dim, 1, F), jnp.float32)
    emb = emb.at[:, 0, :embedding_dim].set(raw["embedding"].astype(jnp.float32))

    # Fused gate weights: rows [0:F) = W_ih^T (in_dim used), rows [F:2F) = W_hh^T.
    w_cat = jnp.zeros((n_layers, 2 * F, 4 * F), jnp.bfloat16)
    bias = jnp.zeros((n_layers, 1, 4 * F), jnp.float32)
    for layer in range(n_layers):
        in_dim = embedding_dim if layer == 0 else hidden_dim
        p = raw["lstm"][layer]

        wt = p["w_ih"].T.reshape(in_dim, 4, H)                 # gate-blocked
        wt = jnp.pad(wt, ((0, 0), (0, 0), (0, F - H))).reshape(in_dim, 4 * F)
        w_cat = w_cat.at[layer, :in_dim, :].set(wt.astype(jnp.bfloat16))

        ut = p["w_hh"].T.reshape(H, 4, H)
        ut = jnp.pad(ut, ((0, 0), (0, 0), (0, F - H))).reshape(H, 4 * F)
        w_cat = w_cat.at[layer, F:F + H, :].set(ut.astype(jnp.bfloat16))

        b = (p["b_ih"] + p["b_hh"]).reshape(4, H)
        b = jnp.pad(b, ((0, 0), (0, F - H))).reshape(1, 4 * F)
        bias = bias.at[layer].set(b.astype(jnp.float32))

    fc_w_t = jnp.zeros((F, v_pad), jnp.bfloat16)
    fc_w_t = fc_w_t.at[:H, :output_dim].set(raw["fc_w"].T.astype(jnp.bfloat16))
    # Pad vocab lanes get a large negative bias so pad logits can never win an
    # argmax/softmax if someone consumes the padded logits directly.
    fc_b = jnp.full((1, v_pad), -1e9, jnp.float32)
    fc_b = fc_b.at[0, :output_dim].set(raw["fc_b"].astype(jnp.float32))

    return dict(emb=emb, w_cat=w_cat, bias=bias, fc_w_t=fc_w_t, fc_b=fc_b)


# ----------------------------------------------------------------------------
# Multi-step decode (teacher forced): one pallas_call, weights resident over T.
# T = 1 is exactly Decoder.forward.
# ----------------------------------------------------------------------------
@functools.partial(jax.jit, static_argnames=("output_dim",))
def decoder_decode_steps(packed, token_ids_seq, hidden, cell, *, output_dim):
    """token_ids_seq: (T, B) int   hidden, cell: (n_layers, B, H)
    returns (predictions (T, B, V), hidden (L, B, H), cell (L, B, H))."""
    T, B = token_ids_seq.shape
    n_layers, _, H = hidden.shape
    F = packed["w_cat"].shape[1] // 2
    v_pad = packed["fc_b"].shape[1]

    ids = token_ids_seq.astype(jnp.int32)
    # Pad the state ONCE per call (not per token).
    h_pad = jnp.pad(hidden.astype(jnp.float32), ((0, 0), (0, 0), (0, F - H)))
    c_pad = jnp.pad(cell.astype(jnp.float32), ((0, 0), (0, 0), (0, F - H)))

    # --- explicit VMEM budget (v7x has only 64 MiB physical) -----------------
    def nbytes(*arrs):
        return sum(int(a.size) * a.dtype.itemsize for a in arrs)
    resident = nbytes(packed["w_cat"], packed["bias"], packed["fc_w_t"],
                      packed["fc_b"], h_pad, c_pad) * 2       # in + out copies
    per_step = (B * v_pad * 4 * 2        # double-buffered logits block
                + 2 * B * F * 4          # gather double buffer
                + n_layers * B * F * 2)  # bf16 h shadow
    vmem_budget = min(2 * (resident + per_step) + (4 << 20), 48 << 20)

    # --- advisory cost estimate for the XLA scheduler -------------------------
    flops = T * (n_layers * 2 * B * (2 * F) * (4 * F) + 2 * B * F * v_pad)
    transc = T * n_layers * 5 * B * F
    bytes_acc = (nbytes(packed["w_cat"], packed["bias"], packed["fc_w_t"],
                        packed["fc_b"]) + 2 * nbytes(h_pad, c_pad)
                 + T * B * (F * 4 + v_pad * 4 + 4))

    const3 = lambda t: (0, 0, 0)
    const2 = lambda t: (0, 0)

    preds, h_out, c_out = pl.pallas_call(
        _decoder_seq_kernel,
        grid=(T,),
        out_shape=(
            jax.ShapeDtypeStruct((T, B, v_pad), jnp.float32),
            jax.ShapeDtypeStruct((n_layers, B, F), jnp.float32),
            jax.ShapeDtypeStruct((n_layers, B, F), jnp.float32),
        ),
        in_specs=[
            pl.BlockSpec(memory_space=pltpu.MemorySpace.SMEM),   # ids (T, B)
            pl.BlockSpec((n_layers, B, F), const3),              # h0
            pl.BlockSpec((n_layers, B, F), const3),              # c0
            pl.BlockSpec(memory_space=pl.ANY),                   # emb table (HBM)
            pl.BlockSpec((n_layers, 2 * F, 4 * F), const3),      # fused gate W
            pl.BlockSpec((n_layers, 1, 4 * F), const3),          # fused bias
            pl.BlockSpec((F, v_pad), const2),                    # fc_out.weight^T
            pl.BlockSpec((1, v_pad), const2),                    # fc_out.bias
        ],
        out_specs=(
            pl.BlockSpec((1, B, v_pad), lambda t: (t, 0, 0)),    # per-step logits
            pl.BlockSpec((n_layers, B, F), const3),              # h (resident)
            pl.BlockSpec((n_layers, B, F), const3),              # c (resident)
        ),
        scratch_shapes=[
            pltpu.VMEM((2, B, F), jnp.float32),        # gathered embedding rows
            pltpu.SemaphoreType.DMA((2, B)),           # per-row gather sems
            pltpu.VMEM((n_layers, B, F), jnp.bfloat16),  # bf16 shadow of h
        ],
        # h_pad -> h_out, c_pad -> c_out (same shape/dtype): no fresh HBM outs.
        input_output_aliases={1: 1, 2: 2},
        compiler_params=pltpu.CompilerParams(
            dimension_semantics=("arbitrary",),        # time is sequential
            vmem_limit_bytes=int(vmem_budget)),
        cost_estimate=pl.CostEstimate(flops=int(flops),
                                      transcendentals=int(transc),
                                      bytes_accessed=int(bytes_acc)),
    )(ids, h_pad, c_pad, packed["emb"], packed["w_cat"], packed["bias"],
      packed["fc_w_t"], packed["fc_b"])

    return preds[:, :, :output_dim], h_out[:, :, :H], c_out[:, :, :H]


def decoder_forward(packed, token_ids, hidden, cell, *, output_dim):
    """Exact equivalent of Decoder.forward (single step, eval mode)."""
    preds, h, c = decoder_decode_steps(packed, token_ids[None, :], hidden, cell,
                                       output_dim=output_dim)
    return preds[0], h, c


# ----------------------------------------------------------------------------
# Pure-JAX f32 reference (mirrors the PyTorch module, eval mode)
# ----------------------------------------------------------------------------
def reference_decoder_steps(raw, ids_seq, h0, c0):
    emb = raw["embedding"]
    h, c = h0, c0
    preds = []
    for t in range(ids_seq.shape[0]):
        x = emb[ids_seq[t]]                                    # (B, E)
        new_h, new_c = [], []
        for layer, p in enumerate(raw["lstm"]):
            gates = (x @ p["w_ih"].T + h[layer] @ p["w_hh"].T
                     + p["b_ih"] + p["b_hh"])
            i_g, f_g, g_g, o_g = jnp.split(gates, 4, axis=-1)
            c_l = jax.nn.sigmoid(f_g) * c[layer] + jax.nn.sigmoid(i_g) * jnp.tanh(g_g)
            h_l = jax.nn.sigmoid(o_g) * jnp.tanh(c_l)
            new_h.append(h_l)
            new_c.append(c_l)
            x = h_l
        h, c = jnp.stack(new_h), jnp.stack(new_c)
        preds.append(x @ raw["fc_w"].T + raw["fc_b"])
    return jnp.stack(preds), h, c


# ----------------------------------------------------------------------------
# Example run
# ----------------------------------------------------------------------------
if __name__ == "__main__":
    OUTPUT_DIM = 16      # vocab size
    EMBEDDING_DIM = 32
    HIDDEN_DIM = 32
    N_LAYERS = 2
    BATCH = 8
    T_STEPS = 6

    key = jax.random.PRNGKey(0)
    k_params, k_tok, k_h, k_c = jax.random.split(key, 4)

    raw = init_decoder_params(k_params, OUTPUT_DIM, EMBEDDING_DIM,
                              HIDDEN_DIM, N_LAYERS)
    packed = pack_decoder_params(raw, OUTPUT_DIM, EMBEDDING_DIM,
                                 HIDDEN_DIM, N_LAYERS)

    ids_seq = jax.random.randint(k_tok, (T_STEPS, BATCH), 0, OUTPUT_DIM,
                                 dtype=jnp.int32)
    hidden = jax.random.normal(k_h, (N_LAYERS, BATCH, HIDDEN_DIM), jnp.float32)
    cell = jax.random.normal(k_c, (N_LAYERS, BATCH, HIDDEN_DIM), jnp.float32)

    # Multi-step teacher-forced decode: single pallas_call, weights resident.
    preds, h_out, c_out = decoder_decode_steps(packed, ids_seq, hidden, cell,
                                               output_dim=OUTPUT_DIM)
    jax.block_until_ready((preds, h_out, c_out))

    # Single decode step (== Decoder.forward).
    pred1, h1, c1 = decoder_forward(packed, ids_seq[0], hidden, cell,
                                    output_dim=OUTPUT_DIM)
    jax.block_until_ready((pred1, h1, c1))

    # Reference check (bf16 weights in the kernel -> loose tolerance).
    ref_preds, ref_h, ref_c = reference_decoder_steps(raw, ids_seq, hidden, cell)

    assert preds.shape == (T_STEPS, BATCH, OUTPUT_DIM)
    assert h_out.shape == (N_LAYERS, BATCH, HIDDEN_DIM)
    assert c_out.shape == (N_LAYERS, BATCH, HIDDEN_DIM)
    assert pred1.shape == (BATCH, OUTPUT_DIM)
    assert bool(jnp.all(jnp.isfinite(preds)))
    assert bool(jnp.all(jnp.isfinite(h_out)))
    assert bool(jnp.all(jnp.isfinite(c_out)))

    err_p = float(jnp.max(jnp.abs(preds - ref_preds)))
    err_h = float(jnp.max(jnp.abs(h_out - ref_h)))
    err_c = float(jnp.max(jnp.abs(c_out - ref_c)))
    err_1 = float(jnp.max(jnp.abs(pred1 - ref_preds[0])))
    assert err_p < 5e-2, f"pred mismatch {err_p}"
    assert err_h < 5e-2, f"hidden mismatch {err_h}"
    assert err_c < 5e-2, f"cell mismatch {err_c}"
    assert err_1 < 5e-2, f"single-step mismatch {err_1}"

    print("KERNEL_OK")
</pallas_src>

<mosaic_0001>
module attributes {stable_mosaic.version = 11 : i64} {
  func.func @_decoder_seq_kernel(%arg0: i32, %arg1: memref<6x8xi32, #tpu.memory_space<smem>>, %arg2: memref<2x8x128xf32, #tpu.memory_space<vmem>>, %arg3: memref<2x8x128xf32, #tpu.memory_space<vmem>>, %arg4: memref<16x1x128xf32, #tpu.memory_space<any>>, %arg5: memref<2x256x512xbf16, #tpu.memory_space<vmem>>, %arg6: memref<2x1x512xf32, #tpu.memory_space<vmem>>, %arg7: memref<128x128xbf16, #tpu.memory_space<vmem>>, %arg8: memref<1x128xf32, #tpu.memory_space<vmem>>, %arg9: memref<1x8x128xf32, #tpu.memory_space<vmem>>, %arg10: memref<2x8x128xf32, #tpu.memory_space<vmem>>, %arg11: memref<2x8x128xf32, #tpu.memory_space<vmem>>, %arg12: memref<2x8x128xf32, #tpu.memory_space<vmem>>, %arg13: memref<2x8x!tpu.dma_semaphore, #tpu.memory_space<semaphore_mem>>, %arg14: memref<2x8x128xbf16, #tpu.memory_space<vmem>>) attributes {dimension_semantics = [#tpu.dimension_semantics<arbitrary>], iteration_bounds = array<i64: 6>, scalar_prefetch = 0 : i64, scratch_operands = 3 : i64, tpu.core_type = #tpu.core_type<tc>, window_params = [{transform_indices = @transform_0, window_bounds = array<i64: 6, 8>}, {pipeline_mode = #tpu.pipeline_mode<synchronous>, transform_indices = @transform_1, window_bounds = array<i64: 2, 8, 128>}, {pipeline_mode = #tpu.pipeline_mode<synchronous>, transform_indices = @transform_2, window_bounds = array<i64: 2, 8, 128>}, {}, {pipeline_mode = #tpu.pipeline_mode<synchronous>, transform_indices = @transform_4, window_bounds = array<i64: 2, 256, 512>}, {pipeline_mode = #tpu.pipeline_mode<synchronous>, transform_indices = @transform_5, window_bounds = array<i64: 2, 1, 512>}, {pipeline_mode = #tpu.pipeline_mode<synchronous>, transform_indices = @transform_6, window_bounds = array<i64: 128, 128>}, {pipeline_mode = #tpu.pipeline_mode<synchronous>, transform_indices = @transform_7, window_bounds = array<i64: 1, 128>}, {transform_indices = @transform_8, window_bounds = array<i64: 1, 8, 128>}, {pipeline_mode = #tpu.pipeline_mode<synchronous>, transform_indices = @transform_9, window_bounds = array<i64: 2, 8, 128>}, {pipeline_mode = #tpu.pipeline_mode<synchronous>, transform_indices = @transform_10, window_bounds = array<i64: 2, 8, 128>}]} {
    %c0_i32 = arith.constant 0 : i32
    %0 = arith.cmpi eq, %arg0, %c0_i32 : i32
    %1 = arith.extui %0 : i1 to i32
    %c0_i32_0 = arith.constant 0 : i32
    %2 = arith.cmpi ne, %1, %c0_i32_0 : i32
    scf.if %2 {
      %c0_108 = arith.constant 0 : index
      %c0_109 = arith.constant 0 : index
      %c0_110 = arith.constant 0 : index
      %171 = vector.load %arg2[%c0_108, %c0_109, %c0_110] : memref<2x8x128xf32, #tpu.memory_space<vmem>>, vector<2x8x128xf32>
      %172 = arith.truncf %171 : vector<2x8x128xf32> to vector<2x8x128xbf16>
      %c0_111 = arith.constant 0 : index
      %c0_112 = arith.constant 0 : index
      %c0_113 = arith.constant 0 : index
      %173 = vector.load %arg14[%c0_111, %c0_112, %c0_113] : memref<2x8x128xbf16, #tpu.memory_space<vmem>>, vector<2x8x128xbf16>
      tpu.vector_store %arg14[%c0_111, %c0_112, %c0_113], %172 {strides = array<i32>} : memref<2x8x128xbf16, #tpu.memory_space<vmem>>, vector<2x8x128xbf16>,
      %c0_114 = arith.constant 0 : index
      %c0_115 = arith.constant 0 : index
      %c0_116 = arith.constant 0 : index
      %174 = vector.load %arg3[%c0_114, %c0_115, %c0_116] : memref<2x8x128xf32, #tpu.memory_space<vmem>>, vector<2x8x128xf32>
      %c0_117 = arith.constant 0 : index
      %c0_118 = arith.constant 0 : index
      %c0_119 = arith.constant 0 : index
      %175 = vector.load %arg11[%c0_117, %c0_118, %c0_119] : memref<2x8x128xf32, #tpu.memory_space<vmem>>, vector<2x8x128xf32>
      tpu.vector_store %arg11[%c0_117, %c0_118, %c0_119], %174 {strides = array<i32>} : memref<2x8x128xf32, #tpu.memory_space<vmem>>, vector<2x8x128xf32>,
      %c0_120 = arith.constant 0 : index
      %c0_121 = arith.constant 0 : index
      %176 = memref.load %arg1[%c0_120, %c0_121] : memref<6x8xi32, #tpu.memory_space<smem>>
      %c0_i32_122 = arith.constant 0 : i32
      %c0_i32_123 = arith.constant 0 : i32
      %c0_i32_124 = arith.constant 0 : i32
      %c0_i32_125 = arith.constant 0 : i32
      %c0_i32_126 = arith.constant 0 : i32
      %177 = tpu.memref_slice %arg4[%176, %c0_i32_125, %c0_i32_126] : memref<16x1x128xf32, #tpu.memory_space<any>> -> memref<1x1x128xf32, #tpu.memory_space<any>>
      %178 = tpu.memref_squeeze %177 : memref<1x1x128xf32, #tpu.memory_space<any>> -> memref<1x128xf32, #tpu.memory_space<any>>
      %c0_i32_127 = arith.constant 0 : i32
      %c0_i32_128 = arith.constant 0 : i32
      %179 = tpu.memref_slice %arg12[%c0_i32_122, %c0_i32_127, %c0_i32_128] : memref<2x8x128xf32, #tpu.memory_space<vmem>> -> memref<1x1x128xf32, #tpu.memory_space<vmem>>
      %180 = tpu.memref_squeeze %179 : memref<1x1x128xf32, #tpu.memory_space<vmem>> -> memref<1x128xf32, #tpu.memory_space<vmem>>
      %181 = tpu.memref_slice %arg13[%c0_i32_123, %c0_i32_124] : memref<2x8x!tpu.dma_semaphore, #tpu.memory_space<semaphore_mem>> -> memref<1x1x!tpu.dma_semaphore, #tpu.memory_space<semaphore_mem>>
      %182 = tpu.memref_squeeze %181 : memref<1x1x!tpu.dma_semaphore, #tpu.memory_space<semaphore_mem>> -> memref<!tpu.dma_semaphore, #tpu.memory_space<semaphore_mem>>
      tpu.enqueue_dma source(%178 : memref<1x128xf32, #tpu.memory_space<any>>) target(%180 : memref<1x128xf32, #tpu.memory_space<vmem>>) target_semaphore(%182 : memref<!tpu.dma_semaphore, #tpu.memory_space<semaphore_mem>>)
      %c0_129 = arith.constant 0 : index
      %c1_130 = arith.constant 1 : index
      %183 = memref.load %arg1[%c0_129, %c1_130] : memref<6x8xi32, #tpu.memory_space<smem>>
      %c0_i32_131 = arith.constant 0 : i32
      %c0_i32_132 = arith.constant 0 : i32
      %c1_i32_133 = arith.constant 1 : i32
      %c0_i32_134 = arith.constant 0 : i32
      %c0_i32_135 = arith.constant 0 : i32
      %184 = tpu.memref_slice %arg4[%183, %c0_i32_134, %c0_i32_135] : memref<16x1x128xf32, #tpu.memory_space<any>> -> memref<1x1x128xf32, #tpu.memory_space<any>>
      %185 = tpu.memref_squeeze %184 : memref<1x1x128xf32, #tpu.memory_space<any>> -> memref<1x128xf32, #tpu.memory_space<any>>
      %c1_i32_136 = arith.constant 1 : i32
      %c0_i32_137 = arith.constant 0 : i32
      %186 = tpu.memref_slice %arg12[%c0_i32_131, %c1_i32_136, %c0_i32_137] : memref<2x8x128xf32, #tpu.memory_space<vmem>> -> memref<1x1x128xf32, #tpu.memory_space<vmem>>
      %187 = tpu.memref_squeeze %186 : memref<1x1x128xf32, #tpu.memory_space<vmem>> -> memref<1x128xf32, #tpu.memory_space<vmem>>
      %188 = tpu.memref_slice %arg13[%c0_i32_132, %c1_i32_133] : memref<2x8x!tpu.dma_semaphore, #tpu.memory_space<semaphore_mem>> -> memref<1x1x!tpu.dma_semaphore, #tpu.memory_space<semaphore_mem>>
      %189 = tpu.memref_squeeze %188 : memref<1x1x!tpu.dma_semaphore, #tpu.memory_space<semaphore_mem>> -> memref<!tpu.dma_semaphore, #tpu.memory_space<semaphore_mem>>
      tpu.enqueue_dma source(%185 : memref<1x128xf32, #tpu.memory_space<any>>) target(%187 : memref<1x128xf32, #tpu.memory_space<vmem>>) target_semaphore(%189 : memref<!tpu.dma_semaphore, #tpu.memory_space<semaphore_mem>>)
      %c0_138 = arith.constant 0 : index
      %c2 = arith.constant 2 : index
      %190 = memref.load %arg1[%c0_138, %c2] : memref<6x8xi32, #tpu.memory_space<smem>>
      %c0_i32_139 = arith.constant 0 : i32
      %c0_i32_140 = arith.constant 0 : i32
      %c2_i32_141 = arith.constant 2 : i32
      %c0_i32_142 = arith.constant 0 : i32
      %c0_i32_143 = arith.constant 0 : i32
      %191 = tpu.memref_slice %arg4[%190, %c0_i32_142, %c0_i32_143] : memref<16x1x128xf32, #tpu.memory_space<any>> -> memref<1x1x128xf32, #tpu.memory_space<any>>
      %192 = tpu.memref_squeeze %191 : memref<1x1x128xf32, #tpu.memory_space<any>> -> memref<1x128xf32, #tpu.memory_space<any>>
      %c2_i32_144 = arith.constant 2 : i32
      %c0_i32_145 = arith.constant 0 : i32
      %193 = tpu.memref_slice %arg12[%c0_i32_139, %c2_i32_144, %c0_i32_145] : memref<2x8x128xf32, #tpu.memory_space<vmem>> -> memref<1x1x128xf32, #tpu.memory_space<vmem>>
      %194 = tpu.memref_squeeze %193 : memref<1x1x128xf32, #tpu.memory_space<vmem>> -> memref<1x128xf32, #tpu.memory_space<vmem>>
      %195 = tpu.memref_slice %arg13[%c0_i32_140, %c2_i32_141] : memref<2x8x!tpu.dma_semaphore, #tpu.memory_space<semaphore_mem>> -> memref<1x1x!tpu.dma_semaphore, #tpu.memory_space<semaphore_mem>>
      %196 = tpu.memref_squeeze %195 : memref<1x1x!tpu.dma_semaphore, #tpu.memory_space<semaphore_mem>> -> memref<!tpu.dma_semaphore, #tpu.memory_space<semaphore_mem>>
      tpu.enqueue_dma source(%192 : memref<1x128xf32, #tpu.memory_space<any>>) target(%194 : memref<1x128xf32, #tpu.memory_space<vmem>>) target_semaphore(%196 : memref<!tpu.dma_semaphore, #tpu.memory_space<semaphore_mem>>)
      %c0_146 = arith.constant 0 : index
      %c3 = arith.constant 3 : index
      %197 = memref.load %arg1[%c0_146, %c3] : memref<6x8xi32, #tpu.memory_space<smem>>
      %c0_i32_147 = arith.constant 0 : i32
      %c0_i32_148 = arith.constant 0 : i32
      %c3_i32_149 = arith.constant 3 : i32
      %c0_i32_150 = arith.constant 0 : i32
      %c0_i32_151 = arith.constant 0 : i32
      %198 = tpu.memref_slice %arg4[%197, %c0_i32_150, %c0_i32_151] : memref<16x1x128xf32, #tpu.memory_space<any>> -> memref<1x1x128xf32, #tpu.memory_space<any>>
      %199 = tpu.memref_squeeze %198 : memref<1x1x128xf32, #tpu.memory_space<any>> -> memref<1x128xf32, #tpu.memory_space<any>>
      %c3_i32_152 = arith.constant 3 : i32
      %c0_i32_153 = arith.constant 0 : i32
      %200 = tpu.memref_slice %arg12[%c0_i32_147, %c3_i32_152, %c0_i32_153] : memref<2x8x128xf32, #tpu.memory_space<vmem>> -> memref<1x1x128xf32, #tpu.memory_space<vmem>>
      %201 = tpu.memref_squeeze %200 : memref<1x1x128xf32, #tpu.memory_space<vmem>> -> memref<1x128xf32, #tpu.memory_space<vmem>>
      %202 = tpu.memref_slice %arg13[%c0_i32_148, %c3_i32_149] : memref<2x8x!tpu.dma_semaphore, #tpu.memory_space<semaphore_mem>> -> memref<1x1x!tpu.dma_semaphore, #tpu.memory_space<semaphore_mem>>
      %203 = tpu.memref_squeeze %202 : memref<1x1x!tpu.dma_semaphore, #tpu.memory_space<semaphore_mem>> -> memref<!tpu.dma_semaphore, #tpu.memory_space<semaphore_mem>>
      tpu.enqueue_dma source(%199 : memref<1x128xf32, #tpu.memory_space<any>>) target(%201 : memref<1x128xf32, #tpu.memory_space<vmem>>) target_semaphore(%203 : memref<!tpu.dma_semaphore, #tpu.memory_space<semaphore_mem>>)
      %c0_154 = arith.constant 0 : index
      %c4 = arith.constant 4 : index
      %204 = memref.load %arg1[%c0_154, %c4] : memref<6x8xi32, #tpu.memory_space<smem>>
      %c0_i32_155 = arith.constant 0 : i32
      %c0_i32_156 = arith.constant 0 : i32
      %c4_i32_157 = arith.constant 4 : i32
      %c0_i32_158 = arith.constant 0 : i32
      %c0_i32_159 = arith.constant 0 : i32
      %205 = tpu.memref_slice %arg4[%204, %c0_i32_158, %c0_i32_159] : memref<16x1x128xf32, #tpu.memory_space<any>> -> memref<1x1x128xf32, #tpu.memory_space<any>>
      %206 = tpu.memref_squeeze %205 : memref<1x1x128xf32, #tpu.memory_space<any>> -> memref<1x128xf32, #tpu.memory_space<any>>
      %c4_i32_160 = arith.constant 4 : i32
      %c0_i32_161 = arith.constant 0 : i32
      %207 = tpu.memref_slice %arg12[%c0_i32_155, %c4_i32_160, %c0_i32_161] : memref<2x8x128xf32, #tpu.memory_space<vmem>> -> memref<1x1x128xf32, #tpu.memory_space<vmem>>
      %208 = tpu.memref_squeeze %207 : memref<1x1x128xf32, #tpu.memory_space<vmem>> -> memref<1x128xf32, #tpu.memory_space<vmem>>
      %209 = tpu.memref_slice %arg13[%c0_i32_156, %c4_i32_157] : memref<2x8x!tpu.dma_semaphore, #tpu.memory_space<semaphore_mem>> -> memref<1x1x!tpu.dma_semaphore, #tpu.memory_space<semaphore_mem>>
      %210 = tpu.memref_squeeze %209 : memref<1x1x!tpu.dma_semaphore, #tpu.memory_space<semaphore_mem>> -> memref<!tpu.dma_semaphore, #tpu.memory_space<semaphore_mem>>
      tpu.enqueue_dma source(%206 : memref<1x128xf32, #tpu.memory_space<any>>) target(%208 : memref<1x128xf32, #tpu.memory_space<vmem>>) target_semaphore(%210 : memref<!tpu.dma_semaphore, #tpu.memory_space<semaphore_mem>>)
      %c0_162 = arith.constant 0 : index
      %c5 = arith.constant 5 : index
      %211 = memref.load %arg1[%c0_162, %c5] : memref<6x8xi32, #tpu.memory_space<smem>>
      %c0_i32_163 = arith.constant 0 : i32
      %c0_i32_164 = arith.constant 0 : i32
      %c5_i32_165 = arith.constant 5 : i32
      %c0_i32_166 = arith.constant 0 : i32
      %c0_i32_167 = arith.constant 0 : i32
      %212 = tpu.memref_slice %arg4[%211, %c0_i32_166, %c0_i32_167] : memref<16x1x128xf32, #tpu.memory_space<any>> -> memref<1x1x128xf32, #tpu.memory_space<any>>
      %213 = tpu.memref_squeeze %212 : memref<1x1x128xf32, #tpu.memory_space<any>> -> memref<1x128xf32, #tpu.memory_space<any>>
      %c5_i32_168 = arith.constant 5 : i32
      %c0_i32_169 = arith.constant 0 : i32
      %214 = tpu.memref_slice %arg12[%c0_i32_163, %c5_i32_168, %c0_i32_169] : memref<2x8x128xf32, #tpu.memory_space<vmem>> -> memref<1x1x128xf32, #tpu.memory_space<vmem>>
      %215 = tpu.memref_squeeze %214 : memref<1x1x128xf32, #tpu.memory_space<vmem>> -> memref<1x128xf32, #tpu.memory_space<vmem>>
      %216 = tpu.memref_slice %arg13[%c0_i32_164, %c5_i32_165] : memref<2x8x!tpu.dma_semaphore, #tpu.memory_space<semaphore_mem>> -> memref<1x1x!tpu.dma_semaphore, #tpu.memory_space<semaphore_mem>>
      %217 = tpu.memref_squeeze %216 : memref<1x1x!tpu.dma_semaphore, #tpu.memory_space<semaphore_mem>> -> memref<!tpu.dma_semaphore, #tpu.memory_space<semaphore_mem>>
      tpu.enqueue_dma source(%213 : memref<1x128xf32, #tpu.memory_space<any>>) target(%215 : memref<1x128xf32, #tpu.memory_space<vmem>>) target_semaphore(%217 : memref<!tpu.dma_semaphore, #tpu.memory_space<semaphore_mem>>)
      %c0_170 = arith.constant 0 : index
      %c6 = arith.constant 6 : index
      %218 = memref.load %arg1[%c0_170, %c6] : memref<6x8xi32, #tpu.memory_space<smem>>
      %c0_i32_171 = arith.constant 0 : i32
      %c0_i32_172 = arith.constant 0 : i32
      %c6_i32_173 = arith.constant 6 : i32
      %c0_i32_174 = arith.constant 0 : i32
      %c0_i32_175 = arith.constant 0 : i32
      %219 = tpu.memref_slice %arg4[%218, %c0_i32_174, %c0_i32_175] : memref<16x1x128xf32, #tpu.memory_space<any>> -> memref<1x1x128xf32, #tpu.memory_space<any>>
      %220 = tpu.memref_squeeze %219 : memref<1x1x128xf32, #tpu.memory_space<any>> -> memref<1x128xf32, #tpu.memory_space<any>>
      %c6_i32_176 = arith.constant 6 : i32
      %c0_i32_177 = arith.constant 0 : i32
      %221 = tpu.memref_slice %arg12[%c0_i32_171, %c6_i32_176, %c0_i32_177] : memref<2x8x128xf32, #tpu.memory_space<vmem>> -> memref<1x1x128xf32, #tpu.memory_space<vmem>>
      %222 = tpu.memref_squeeze %221 : memref<1x1x128xf32, #tpu.memory_space<vmem>> -> memref<1x128xf32, #tpu.memory_space<vmem>>
      %223 = tpu.memref_slice %arg13[%c0_i32_172, %c6_i32_173] : memref<2x8x!tpu.dma_semaphore, #tpu.memory_space<semaphore_mem>> -> memref<1x1x!tpu.dma_semaphore, #tpu.memory_space<semaphore_mem>>
      %224 = tpu.memref_squeeze %223 : memref<1x1x!tpu.dma_semaphore, #tpu.memory_space<semaphore_mem>> -> memref<!tpu.dma_semaphore, #tpu.memory_space<semaphore_mem>>
      tpu.enqueue_dma source(%220 : memref<1x128xf32, #tpu.memory_space<any>>) target(%222 : memref<1x128xf32, #tpu.memory_space<vmem>>) target_semaphore(%224 : memref<!tpu.dma_semaphore, #tpu.memory_space<semaphore_mem>>)
      %c0_178 = arith.constant 0 : index
      %c7 = arith.constant 7 : index
      %225 = memref.load %arg1[%c0_178, %c7] : memref<6x8xi32, #tpu.memory_space<smem>>
      %c0_i32_179 = arith.constant 0 : i32
      %c0_i32_180 = arith.constant 0 : i32
      %c7_i32_181 = arith.constant 7 : i32
      %c0_i32_182 = arith.constant 0 : i32
      %c0_i32_183 = arith.constant 0 : i32
      %226 = tpu.memref_slice %arg4[%225, %c0_i32_182, %c0_i32_183] : memref<16x1x128xf32, #tpu.memory_space<any>> -> memref<1x1x128xf32, #tpu.memory_space<any>>
      %227 = tpu.memref_squeeze %226 : memref<1x1x128xf32, #tpu.memory_space<any>> -> memref<1x128xf32, #tpu.memory_space<any>>
      %c7_i32_184 = arith.constant 7 : i32
      %c0_i32_185 = arith.constant 0 : i32
      %228 = tpu.memref_slice %arg12[%c0_i32_179, %c7_i32_184, %c0_i32_185] : memref<2x8x128xf32, #tpu.memory_space<vmem>> -> memref<1x1x128xf32, #tpu.memory_space<vmem>>
      %229 = tpu.memref_squeeze %228 : memref<1x1x128xf32, #tpu.memory_space<vmem>> -> memref<1x128xf32, #tpu.memory_space<vmem>>
      %230 = tpu.memref_slice %arg13[%c0_i32_180, %c7_i32_181] : memref<2x8x!tpu.dma_semaphore, #tpu.memory_space<semaphore_mem>> -> memref<1x1x!tpu.dma_semaphore, #tpu.memory_space<semaphore_mem>>
      %231 = tpu.memref_squeeze %230 : memref<1x1x!tpu.dma_semaphore, #tpu.memory_space<semaphore_mem>> -> memref<!tpu.dma_semaphore, #tpu.memory_space<semaphore_mem>>
      tpu.enqueue_dma source(%227 : memref<1x128xf32, #tpu.memory_space<any>>) target(%229 : memref<1x128xf32, #tpu.memory_space<vmem>>) target_semaphore(%231 : memref<!tpu.dma_semaphore, #tpu.memory_space<semaphore_mem>>)
    } else {
    }
    %c2_i32 = arith.constant 2 : i32
    %c0_i32_1 = arith.constant 0 : i32
    %3 = arith.cmpi eq, %c2_i32, %c0_i32_1 : i32
    %c1_i32 = arith.constant 1 : i32
    %4 = arith.select %3, %c1_i32, %c2_i32 : i32
    %5 = arith.remsi %arg0, %4 : i32
    %c0_i32_2 = arith.constant 0 : i32
    %6 = arith.cmpi ne, %5, %c0_i32_2 : i32
    %c0_i32_3 = arith.constant 0 : i32
    %7 = arith.cmpi slt, %5, %c0_i32_3 : i32
    %c0_i32_4 = arith.constant 0 : i32
    %8 = arith.cmpi slt, %4, %c0_i32_4 : i32
    %9 = arith.xori %7, %8 : i1
    %10 = arith.andi %9, %6 : i1
    %11 = arith.addi %5, %4 : i32
    %12 = arith.select %10, %11, %5 : i32
    %c1_i32_5 = arith.constant 1 : i32
    %13 = arith.addi %arg0, %c1_i32_5 : i32
    %c6_i32 = arith.constant 6 : i32
    %14 = arith.cmpi slt, %13, %c6_i32 : i32
    %15 = arith.extui %14 : i1 to i32
    %c0_i32_6 = arith.constant 0 : i32
    %16 = arith.cmpi ne, %15, %c0_i32_6 : i32
    scf.if %16 {
      %c1_i32_108 = arith.constant 1 : i32
      %171 = arith.addi %arg0, %c1_i32_108 : i32
      %c1_i32_109 = arith.constant 1 : i32
      %172 = arith.subi %c1_i32_109, %12 : i32
      %173 = arith.index_cast %171 : i32 to index
      %c0_110 = arith.constant 0 : index
      %174 = memref.load %arg1[%173, %c0_110] : memref<6x8xi32, #tpu.memory_space<smem>>
      %c0_i32_111 = arith.constant 0 : i32
      %c0_i32_112 = arith.constant 0 : i32
      %c0_i32_113 = arith.constant 0 : i32
      %175 = tpu.memref_slice %arg4[%174, %c0_i32_112, %c0_i32_113] : memref<16x1x128xf32, #tpu.memory_space<any>> -> memref<1x1x128xf32, #tpu.memory_space<any>>
      %176 = tpu.memref_squeeze %175 : memref<1x1x128xf32, #tpu.memory_space<any>> -> memref<1x128xf32, #tpu.memory_space<any>>
      %c0_i32_114 = arith.constant 0 : i32
      %c0_i32_115 = arith.constant 0 : i32
      %177 = tpu.memref_slice %arg12[%172, %c0_i32_114, %c0_i32_115] : memref<2x8x128xf32, #tpu.memory_space<vmem>> -> memref<1x1x128xf32, #tpu.memory_space<vmem>>
      %178 = tpu.memref_squeeze %177 : memref<1x1x128xf32, #tpu.memory_space<vmem>> -> memref<1x128xf32, #tpu.memory_space<vmem>>
      %179 = tpu.memref_slice %arg13[%172, %c0_i32_111] : memref<2x8x!tpu.dma_semaphore, #tpu.memory_space<semaphore_mem>> -> memref<1x1x!tpu.dma_semaphore, #tpu.memory_space<semaphore_mem>>
      %180 = tpu.memref_squeeze %179 : memref<1x1x!tpu.dma_semaphore, #tpu.memory_space<semaphore_mem>> -> memref<!tpu.dma_semaphore, #tpu.memory_space<semaphore_mem>>
      tpu.enqueue_dma source(%176 : memref<1x128xf32, #tpu.memory_space<any>>) target(%178 : memref<1x128xf32, #tpu.memory_space<vmem>>) target_semaphore(%180 : memref<!tpu.dma_semaphore, #tpu.memory_space<semaphore_mem>>)
      %181 = arith.index_cast %171 : i32 to index
      %c1_116 = arith.constant 1 : index
      %182 = memref.load %arg1[%181, %c1_116] : memref<6x8xi32, #tpu.memory_space<smem>>
      %c1_i32_117 = arith.constant 1 : i32
      %c0_i32_118 = arith.constant 0 : i32
      %c0_i32_119 = arith.constant 0 : i32
      %183 = tpu.memref_slice %arg4[%182, %c0_i32_118, %c0_i32_119] : memref<16x1x128xf32, #tpu.memory_space<any>> -> memref<1x1x128xf32, #tpu.memory_space<any>>
      %184 = tpu.memref_squeeze %183 : memref<1x1x128xf32, #tpu.memory_space<any>> -> memref<1x128xf32, #tpu.memory_space<any>>
      %c1_i32_120 = arith.constant 1 : i32
      %c0_i32_121 = arith.constant 0 : i32
      %185 = tpu.memref_slice %arg12[%172, %c1_i32_120, %c0_i32_121] : memref<2x8x128xf32, #tpu.memory_space<vmem>> -> memref<1x1x128xf32, #tpu.memory_space<vmem>>
      %186 = tpu.memref_squeeze %185 : memref<1x1x128xf32, #tpu.memory_space<vmem>> -> memref<1x128xf32, #tpu.memory_space<vmem>>
      %187 = tpu.memref_slice %arg13[%172, %c1_i32_117] : memref<2x8x!tpu.dma_semaphore, #tpu.memory_space<semaphore_mem>> -> memref<1x1x!tpu.dma_semaphore, #tpu.memory_space<semaphore_mem>>
      %188 = tpu.memref_squeeze %187 : memref<1x1x!tpu.dma_semaphore, #tpu.memory_space<semaphore_mem>> -> memref<!tpu.dma_semaphore, #tpu.memory_space<semaphore_mem>>
      tpu.enqueue_dma source(%184 : memref<1x128xf32, #tpu.memory_space<any>>) target(%186 : memref<1x128xf32, #tpu.memory_space<vmem>>) target_semaphore(%188 : memref<!tpu.dma_semaphore, #tpu.memory_space<semaphore_mem>>)
      %189 = arith.index_cast %171 : i32 to index
      %c2 = arith.constant 2 : index
      %190 = memref.load %arg1[%189, %c2] : memref<6x8xi32, #tpu.memory_space<smem>>
      %c2_i32_122 = arith.constant 2 : i32
      %c0_i32_123 = arith.constant 0 : i32
      %c0_i32_124 = arith.constant 0 : i32
      %191 = tpu.memref_slice %arg4[%190, %c0_i32_123, %c0_i32_124] : memref<16x1x128xf32, #tpu.memory_space<any>> -> memref<1x1x128xf32, #tpu.memory_space<any>>
      %192 = tpu.memref_squeeze %191 : memref<1x1x128xf32, #tpu.memory_space<any>> -> memref<1x128xf32, #tpu.memory_space<any>>
      %c2_i32_125 = arith.constant 2 : i32
      %c0_i32_126 = arith.constant 0 : i32
      %193 = tpu.memref_slice %arg12[%172, %c2_i32_125, %c0_i32_126] : memref<2x8x128xf32, #tpu.memory_space<vmem>> -> memref<1x1x128xf32, #tpu.memory_space<vmem>>
      %194 = tpu.memref_squeeze %193 : memref<1x1x128xf32, #tpu.memory_space<vmem>> -> memref<1x128xf32, #tpu.memory_space<vmem>>
      %195 = tpu.memref_slice %arg13[%172, %c2_i32_122] : memref<2x8x!tpu.dma_semaphore, #tpu.memory_space<semaphore_mem>> -> memref<1x1x!tpu.dma_semaphore, #tpu.memory_space<semaphore_mem>>
      %196 = tpu.memref_squeeze %195 : memref<1x1x!tpu.dma_semaphore, #tpu.memory_space<semaphore_mem>> -> memref<!tpu.dma_semaphore, #tpu.memory_space<semaphore_mem>>
      tpu.enqueue_dma source(%192 : memref<1x128xf32, #tpu.memory_space<any>>) target(%194 : memref<1x128xf32, #tpu.memory_space<vmem>>) target_semaphore(%196 : memref<!tpu.dma_semaphore, #tpu.memory_space<semaphore_mem>>)
      %197 = arith.index_cast %171 : i32 to index
      %c3 = arith.constant 3 : index
      %198 = memref.load %arg1[%197, %c3] : memref<6x8xi32, #tpu.memory_space<smem>>
      %c3_i32_127 = arith.constant 3 : i32
      %c0_i32_128 = arith.constant 0 : i32
      %c0_i32_129 = arith.constant 0 : i32
      %199 = tpu.memref_slice %arg4[%198, %c0_i32_128, %c0_i32_129] : memref<16x1x128xf32, #tpu.memory_space<any>> -> memref<1x1x128xf32, #tpu.memory_space<any>>
      %200 = tpu.memref_squeeze %199 : memref<1x1x128xf32, #tpu.memory_space<any>> -> memref<1x128xf32, #tpu.memory_space<any>>
      %c3_i32_130 = arith.constant 3 : i32
      %c0_i32_131 = arith.constant 0 : i32
      %201 = tpu.memref_slice %arg12[%172, %c3_i32_130, %c0_i32_131] : memref<2x8x128xf32, #tpu.memory_space<vmem>> -> memref<1x1x128xf32, #tpu.memory_space<vmem>>
      %202 = tpu.memref_squeeze %201 : memref<1x1x128xf32, #tpu.memory_space<vmem>> -> memref<1x128xf32, #tpu.memory_space<vmem>>
      %203 = tpu.memref_slice %arg13[%172, %c3_i32_127] : memref<2x8x!tpu.dma_semaphore, #tpu.memory_space<semaphore_mem>> -> memref<1x1x!tpu.dma_semaphore, #tpu.memory_space<semaphore_mem>>
      %204 = tpu.memref_squeeze %203 : memref<1x1x!tpu.dma_semaphore, #tpu.memory_space<semaphore_mem>> -> memref<!tpu.dma_semaphore, #tpu.memory_space<semaphore_mem>>
      tpu.enqueue_dma source(%200 : memref<1x128xf32, #tpu.memory_space<any>>) target(%202 : memref<1x128xf32, #tpu.memory_space<vmem>>) target_semaphore(%204 : memref<!tpu.dma_semaphore, #tpu.memory_space<semaphore_mem>>)
      %205 = arith.index_cast %171 : i32 to index
      %c4 = arith.constant 4 : index
      %206 = memref.load %arg1[%205, %c4] : memref<6x8xi32, #tpu.memory_space<smem>>
      %c4_i32_132 = arith.constant 4 : i32
      %c0_i32_133 = arith.constant 0 : i32
      %c0_i32_134 = arith.constant 0 : i32
      %207 = tpu.memref_slice %arg4[%206, %c0_i32_133, %c0_i32_134] : memref<16x1x128xf32, #tpu.memory_space<any>> -> memref<1x1x128xf32, #tpu.memory_space<any>>
      %208 = tpu.memref_squeeze %207 : memref<1x1x128xf32, #tpu.memory_space<any>> -> memref<1x128xf32, #tpu.memory_space<any>>
      %c4_i32_135 = arith.constant 4 : i32
      %c0_i32_136 = arith.constant 0 : i32
      %209 = tpu.memref_slice %arg12[%172, %c4_i32_135, %c0_i32_136] : memref<2x8x128xf32, #tpu.memory_space<vmem>> -> memref<1x1x128xf32, #tpu.memory_space<vmem>>
      %210 = tpu.memref_squeeze %209 : memref<1x1x128xf32, #tpu.memory_space<vmem>> -> memref<1x128xf32, #tpu.memory_space<vmem>>
      %211 = tpu.memref_slice %arg13[%172, %c4_i32_132] : memref<2x8x!tpu.dma_semaphore, #tpu.memory_space<semaphore_mem>> -> memref<1x1x!tpu.dma_semaphore, #tpu.memory_space<semaphore_mem>>
      %212 = tpu.memref_squeeze %211 : memref<1x1x!tpu.dma_semaphore, #tpu.memory_space<semaphore_mem>> -> memref<!tpu.dma_semaphore, #tpu.memory_space<semaphore_mem>>
      tpu.enqueue_dma source(%208 : memref<1x128xf32, #tpu.memory_space<any>>) target(%210 : memref<1x128xf32, #tpu.memory_space<vmem>>) target_semaphore(%212 : memref<!tpu.dma_semaphore, #tpu.memory_space<semaphore_mem>>)
      %213 = arith.index_cast %171 : i32 to index
      %c5 = arith.constant 5 : index
      %214 = memref.load %arg1[%213, %c5] : memref<6x8xi32, #tpu.memory_space<smem>>
      %c5_i32_137 = arith.constant 5 : i32
      %c0_i32_138 = arith.constant 0 : i32
      %c0_i32_139 = arith.constant 0 : i32
      %215 = tpu.memref_slice %arg4[%214, %c0_i32_138, %c0_i32_139] : memref<16x1x128xf32, #tpu.memory_space<any>> -> memref<1x1x128xf32, #tpu.memory_space<any>>
      %216 = tpu.memref_squeeze %215 : memref<1x1x128xf32, #tpu.memory_space<any>> -> memref<1x128xf32, #tpu.memory_space<any>>
      %c5_i32_140 = arith.constant 5 : i32
      %c0_i32_141 = arith.constant 0 : i32
      %217 = tpu.memref_slice %arg12[%172, %c5_i32_140, %c0_i32_141] : memref<2x8x128xf32, #tpu.memory_space<vmem>> -> memref<1x1x128xf32, #tpu.memory_space<vmem>>
      %218 = tpu.memref_squeeze %217 : memref<1x1x128xf32, #tpu.memory_space<vmem>> -> memref<1x128xf32, #tpu.memory_space<vmem>>
      %219 = tpu.memref_slice %arg13[%172, %c5_i32_137] : memref<2x8x!tpu.dma_semaphore, #tpu.memory_space<semaphore_mem>> -> memref<1x1x!tpu.dma_semaphore, #tpu.memory_space<semaphore_mem>>
      %220 = tpu.memref_squeeze %219 : memref<1x1x!tpu.dma_semaphore, #tpu.memory_space<semaphore_mem>> -> memref<!tpu.dma_semaphore, #tpu.memory_space<semaphore_mem>>
      tpu.enqueue_dma source(%216 : memref<1x128xf32, #tpu.memory_space<any>>) target(%218 : memref<1x128xf32, #tpu.memory_space<vmem>>) target_semaphore(%220 : memref<!tpu.dma_semaphore, #tpu.memory_space<semaphore_mem>>)
      %221 = arith.index_cast %171 : i32 to index
      %c6 = arith.constant 6 : index
      %222 = memref.load %arg1[%221, %c6] : memref<6x8xi32, #tpu.memory_space<smem>>
      %c6_i32_142 = arith.constant 6 : i32
      %c0_i32_143 = arith.constant 0 : i32
      %c0_i32_144 = arith.constant 0 : i32
      %223 = tpu.memref_slice %arg4[%222, %c0_i32_143, %c0_i32_144] : memref<16x1x128xf32, #tpu.memory_space<any>> -> memref<1x1x128xf32, #tpu.memory_space<any>>
      %224 = tpu.memref_squeeze %223 : memref<1x1x128xf32, #tpu.memory_space<any>> -> memref<1x128xf32, #tpu.memory_space<any>>
      %c6_i32_145 = arith.constant 6 : i32
      %c0_i32_146 = arith.constant 0 : i32
      %225 = tpu.memref_slice %arg12[%172, %c6_i32_145, %c0_i32_146] : memref<2x8x128xf32, #tpu.memory_space<vmem>> -> memref<1x1x128xf32, #tpu.memory_space<vmem>>
      %226 = tpu.memref_squeeze %225 : memref<1x1x128xf32, #tpu.memory_space<vmem>> -> memref<1x128xf32, #tpu.memory_space<vmem>>
      %227 = tpu.memref_slice %arg13[%172, %c6_i32_142] : memref<2x8x!tpu.dma_semaphore, #tpu.memory_space<semaphore_mem>> -> memref<1x1x!tpu.dma_semaphore, #tpu.memory_space<semaphore_mem>>
      %228 = tpu.memref_squeeze %227 : memref<1x1x!tpu.dma_semaphore, #tpu.memory_space<semaphore_mem>> -> memref<!tpu.dma_semaphore, #tpu.memory_space<semaphore_mem>>
      tpu.enqueue_dma source(%224 : memref<1x128xf32, #tpu.memory_space<any>>) target(%226 : memref<1x128xf32, #tpu.memory_space<vmem>>) target_semaphore(%228 : memref<!tpu.dma_semaphore, #tpu.memory_space<semaphore_mem>>)
      %229 = arith.index_cast %171 : i32 to index
      %c7 = arith.constant 7 : index
      %230 = memref.load %arg1[%229, %c7] : memref<6x8xi32, #tpu.memory_space<smem>>
      %c7_i32_147 = arith.constant 7 : i32
      %c0_i32_148 = arith.constant 0 : i32
      %c0_i32_149 = arith.constant 0 : i32
      %231 = tpu.memref_slice %arg4[%230, %c0_i32_148, %c0_i32_149] : memref<16x1x128xf32, #tpu.memory_space<any>> -> memref<1x1x128xf32, #tpu.memory_space<any>>
      %232 = tpu.memref_squeeze %231 : memref<1x1x128xf32, #tpu.memory_space<any>> -> memref<1x128xf32, #tpu.memory_space<any>>
      %c7_i32_150 = arith.constant 7 : i32
      %c0_i32_151 = arith.constant 0 : i32
      %233 = tpu.memref_slice %arg12[%172, %c7_i32_150, %c0_i32_151] : memref<2x8x128xf32, #tpu.memory_space<vmem>> -> memref<1x1x128xf32, #tpu.memory_space<vmem>>
      %234 = tpu.memref_squeeze %233 : memref<1x1x128xf32, #tpu.memory_space<vmem>> -> memref<1x128xf32, #tpu.memory_space<vmem>>
      %235 = tpu.memref_slice %arg13[%172, %c7_i32_147] : memref<2x8x!tpu.dma_semaphore, #tpu.memory_space<semaphore_mem>> -> memref<1x1x!tpu.dma_semaphore, #tpu.memory_space<semaphore_mem>>
      %236 = tpu.memref_squeeze %235 : memref<1x1x!tpu.dma_semaphore, #tpu.memory_space<semaphore_mem>> -> memref<!tpu.dma_semaphore, #tpu.memory_space<semaphore_mem>>
      tpu.enqueue_dma source(%232 : memref<1x128xf32, #tpu.memory_space<any>>) target(%234 : memref<1x128xf32, #tpu.memory_space<vmem>>) target_semaphore(%236 : memref<!tpu.dma_semaphore, #tpu.memory_space<semaphore_mem>>)
    } else {
    }
    %c0_i32_7 = arith.constant 0 : i32
    %c0_i32_8 = arith.constant 0 : i32
    %c0_i32_9 = arith.constant 0 : i32
    %c0_i32_10 = arith.constant 0 : i32
    %17 = tpu.memref_slice %arg4[%c0_i32_7, %c0_i32_9, %c0_i32_10] : memref<16x1x128xf32, #tpu.memory_space<any>> -> memref<1x1x128xf32, #tpu.memory_space<any>>
    %18 = tpu.memref_squeeze %17 : memref<1x1x128xf32, #tpu.memory_space<any>> -> memref<1x128xf32, #tpu.memory_space<any>>
    %c0_i32_11 = arith.constant 0 : i32
    %c0_i32_12 = arith.constant 0 : i32
    %19 = tpu.memref_slice %arg12[%12, %c0_i32_11, %c0_i32_12] : memref<2x8x128xf32, #tpu.memory_space<vmem>> -> memref<1x1x128xf32, #tpu.memory_space<vmem>>
    %20 = tpu.memref_squeeze %19 : memref<1x1x128xf32, #tpu.memory_space<vmem>> -> memref<1x128xf32, #tpu.memory_space<vmem>>
    %21 = tpu.memref_slice %arg13[%12, %c0_i32_8] : memref<2x8x!tpu.dma_semaphore, #tpu.memory_space<semaphore_mem>> -> memref<1x1x!tpu.dma_semaphore, #tpu.memory_space<semaphore_mem>>
    %22 = tpu.memref_squeeze %21 : memref<1x1x!tpu.dma_semaphore, #tpu.memory_space<semaphore_mem>> -> memref<!tpu.dma_semaphore, #tpu.memory_space<semaphore_mem>>
    tpu.wait_dma2 semaphore(%22 : memref<!tpu.dma_semaphore, #tpu.memory_space<semaphore_mem>>) src(%18 : memref<1x128xf32, #tpu.memory_space<any>>) dst(%20 : memref<1x128xf32, #tpu.memory_space<vmem>>)
    %c0_i32_13 = arith.constant 0 : i32
    %c1_i32_14 = arith.constant 1 : i32
    %c0_i32_15 = arith.constant 0 : i32
    %c0_i32_16 = arith.constant 0 : i32
    %23 = tpu.memref_slice %arg4[%c0_i32_13, %c0_i32_15, %c0_i32_16] : memref<16x1x128xf32, #tpu.memory_space<any>> -> memref<1x1x128xf32, #tpu.memory_space<any>>
    %24 = tpu.memref_squeeze %23 : memref<1x1x128xf32, #tpu.memory_space<any>> -> memref<1x128xf32, #tpu.memory_space<any>>
    %c1_i32_17 = arith.constant 1 : i32
    %c0_i32_18 = arith.constant 0 : i32
    %25 = tpu.memref_slice %arg12[%12, %c1_i32_17, %c0_i32_18] : memref<2x8x128xf32, #tpu.memory_space<vmem>> -> memref<1x1x128xf32, #tpu.memory_space<vmem>>
    %26 = tpu.memref_squeeze %25 : memref<1x1x128xf32, #tpu.memory_space<vmem>> -> memref<1x128xf32, #tpu.memory_space<vmem>>
    %27 = tpu.memref_slice %arg13[%12, %c1_i32_14] : memref<2x8x!tpu.dma_semaphore, #tpu.memory_space<semaphore_mem>> -> memref<1x1x!tpu.dma_semaphore, #tpu.memory_space<semaphore_mem>>
    %28 = tpu.memref_squeeze %27 : memref<1x1x!tpu.dma_semaphore, #tpu.memory_space<semaphore_mem>> -> memref<!tpu.dma_semaphore, #tpu.memory_space<semaphore_mem>>
    tpu.wait_dma2 semaphore(%28 : memref<!tpu.dma_semaphore, #tpu.memory_space<semaphore_mem>>) src(%24 : memref<1x128xf32, #tpu.memory_space<any>>) dst(%26 : memref<1x128xf32, #tpu.memory_space<vmem>>)
    %c0_i32_19 = arith.constant 0 : i32
    %c2_i32_20 = arith.constant 2 : i32
    %c0_i32_21 = arith.constant 0 : i32
    %c0_i32_22 = arith.constant 0 : i32
    %29 = tpu.memref_slice %arg4[%c0_i32_19, %c0_i32_21, %c0_i32_22] : memref<16x1x128xf32, #tpu.memory_space<any>> -> memref<1x1x128xf32, #tpu.memory_space<any>>
    %30 = tpu.memref_squeeze %29 : memref<1x1x128xf32, #tpu.memory_space<any>> -> memref<1x128xf32, #tpu.memory_space<any>>
    %c2_i32_23 = arith.constant 2 : i32
    %c0_i32_24 = arith.constant 0 : i32
    %31 = tpu.memref_slice %arg12[%12, %c2_i32_23, %c0_i32_24] : memref<2x8x128xf32, #tpu.memory_space<vmem>> -> memref<1x1x128xf32, #tpu.memory_space<vmem>>
    %32 = tpu.memref_squeeze %31 : memref<1x1x128xf32, #tpu.memory_space<vmem>> -> memref<1x128xf32, #tpu.memory_space<vmem>>
    %33 = tpu.memref_slice %arg13[%12, %c2_i32_20] : memref<2x8x!tpu.dma_semaphore, #tpu.memory_space<semaphore_mem>> -> memref<1x1x!tpu.dma_semaphore, #tpu.memory_space<semaphore_mem>>
    %34 = tpu.memref_squeeze %33 : memref<1x1x!tpu.dma_semaphore, #tpu.memory_space<semaphore_mem>> -> memref<!tpu.dma_semaphore, #tpu.memory_space<semaphore_mem>>
    tpu.wait_dma2 semaphore(%34 : memref<!tpu.dma_semaphore, #tpu.memory_space<semaphore_mem>>) src(%30 : memref<1x128xf32, #tpu.memory_space<any>>) dst(%32 : memref<1x128xf32, #tpu.memory_space<vmem>>)
    %c0_i32_25 = arith.constant 0 : i32
    %c3_i32 = arith.constant 3 : i32
    %c0_i32_26 = arith.constant 0 : i32
    %c0_i32_27 = arith.constant 0 : i32
    %35 = tpu.memref_slice %arg4[%c0_i32_25, %c0_i32_26, %c0_i32_27] : memref<16x1x128xf32, #tpu.memory_space<any>> -> memref<1x1x128xf32, #tpu.memory_space<any>>
    %36 = tpu.memref_squeeze %35 : memref<1x1x128xf32, #tpu.memory_space<any>> -> memref<1x128xf32, #tpu.memory_space<any>>
    %c3_i32_28 = arith.constant 3 : i32
    %c0_i32_29 = arith.constant 0 : i32
    %37 = tpu.memref_slice %arg12[%12, %c3_i32_28, %c0_i32_29] : memref<2x8x128xf32, #tpu.memory_space<vmem>> -> memref<1x1x128xf32, #tpu.memory_space<vmem>>
    %38 = tpu.memref_squeeze %37 : memref<1x1x128xf32, #tpu.memory_space<vmem>> -> memref<1x128xf32, #tpu.memory_space<vmem>>
    %39 = tpu.memref_slice %arg13[%12, %c3_i32] : memref<2x8x!tpu.dma_semaphore, #tpu.memory_space<semaphore_mem>> -> memref<1x1x!tpu.dma_semaphore, #tpu.memory_space<semaphore_mem>>
    %40 = tpu.memref_squeeze %39 : memref<1x1x!tpu.dma_semaphore, #tpu.memory_space<semaphore_mem>> -> memref<!tpu.dma_semaphore, #tpu.memory_space<semaphore_mem>>
    tpu.wait_dma2 semaphore(%40 : memref<!tpu.dma_semaphore, #tpu.memory_space<semaphore_mem>>) src(%36 : memref<1x128xf32, #tpu.memory_space<any>>) dst(%38 : memref<1x128xf32, #tpu.memory_space<vmem>>)
    %c0_i32_30 = arith.constant 0 : i32
    %c4_i32 = arith.constant 4 : i32
    %c0_i32_31 = arith.constant 0 : i32
    %c0_i32_32 = arith.constant 0 : i32
    %41 = tpu.memref_slice %arg4[%c0_i32_30, %c0_i32_31, %c0_i32_32] : memref<16x1x128xf32, #tpu.memory_space<any>> -> memref<1x1x128xf32, #tpu.memory_space<any>>
    %42 = tpu.memref_squeeze %41 : memref<1x1x128xf32, #tpu.memory_space<any>> -> memref<1x128xf32, #tpu.memory_space<any>>
    %c4_i32_33 = arith.constant 4 : i32
    %c0_i32_34 = arith.constant 0 : i32
    %43 = tpu.memref_slice %arg12[%12, %c4_i32_33, %c0_i32_34] : memref<2x8x128xf32, #tpu.memory_space<vmem>> -> memref<1x1x128xf32, #tpu.memory_space<vmem>>
    %44 = tpu.memref_squeeze %43 : memref<1x1x128xf32, #tpu.memory_space<vmem>> -> memref<1x128xf32, #tpu.memory_space<vmem>>
    %45 = tpu.memref_slice %arg13[%12, %c4_i32] : memref<2x8x!tpu.dma_semaphore, #tpu.memory_space<semaphore_mem>> -> memref<1x1x!tpu.dma_semaphore, #tpu.memory_space<semaphore_mem>>
    %46 = tpu.memref_squeeze %45 : memref<1x1x!tpu.dma_semaphore, #tpu.memory_space<semaphore_mem>> -> memref<!tpu.dma_semaphore, #tpu.memory_space<semaphore_mem>>
    tpu.wait_dma2 semaphore(%46 : memref<!tpu.dma_semaphore, #tpu.memory_space<semaphore_mem>>) src(%42 : memref<1x128xf32, #tpu.memory_space<any>>) dst(%44 : memref<1x128xf32, #tpu.memory_space<vmem>>)
    %c0_i32_35 = arith.constant 0 : i32
    %c5_i32 = arith.constant 5 : i32
    %c0_i32_36 = arith.constant 0 : i32
    %c0_i32_37 = arith.constant 0 : i32
    %47 = tpu.memref_slice %arg4[%c0_i32_35, %c0_i32_36, %c0_i32_37] : memref<16x1x128xf32, #tpu.memory_space<any>> -> memref<1x1x128xf32, #tpu.memory_space<any>>
    %48 = tpu.memref_squeeze %47 : memref<1x1x128xf32, #tpu.memory_space<any>> -> memref<1x128xf32, #tpu.memory_space<any>>
    %c5_i32_38 = arith.constant 5 : i32
    %c0_i32_39 = arith.constant 0 : i32
    %49 = tpu.memref_slice %arg12[%12, %c5_i32_38, %c0_i32_39] : memref<2x8x128xf32, #tpu.memory_space<vmem>> -> memref<1x1x128xf32, #tpu.memory_space<vmem>>
    %50 = tpu.memref_squeeze %49 : memref<1x1x128xf32, #tpu.memory_space<vmem>> -> memref<1x128xf32, #tpu.memory_space<vmem>>
    %51 = tpu.memref_slice %arg13[%12, %c5_i32] : memref<2x8x!tpu.dma_semaphore, #tpu.memory_space<semaphore_mem>> -> memref<1x1x!tpu.dma_semaphore, #tpu.memory_space<semaphore_mem>>
    %52 = tpu.memref_squeeze %51 : memref<1x1x!tpu.dma_semaphore, #tpu.memory_space<semaphore_mem>> -> memref<!tpu.dma_semaphore, #tpu.memory_space<semaphore_mem>>
    tpu.wait_dma2 semaphore(%52 : memref<!tpu.dma_semaphore, #tpu.memory_space<semaphore_mem>>) src(%48 : memref<1x128xf32, #tpu.memory_space<any>>) dst(%50 : memref<1x128xf32, #tpu.memory_space<vmem>>)
    %c0_i32_40 = arith.constant 0 : i32
    %c6_i32_41 = arith.constant 6 : i32
    %c0_i32_42 = arith.constant 0 : i32
    %c0_i32_43 = arith.constant 0 : i32
    %53 = tpu.memref_slice %arg4[%c0_i32_40, %c0_i32_42, %c0_i32_43] : memref<16x1x128xf32, #tpu.memory_space<any>> -> memref<1x1x128xf32, #tpu.memory_space<any>>
    %54 = tpu.memref_squeeze %53 : memref<1x1x128xf32, #tpu.memory_space<any>> -> memref<1x128xf32, #tpu.memory_space<any>>
    %c6_i32_44 = arith.constant 6 : i32
    %c0_i32_45 = arith.constant 0 : i32
    %55 = tpu.memref_slice %arg12[%12, %c6_i32_44, %c0_i32_45] : memref<2x8x128xf32, #tpu.memory_space<vmem>> -> memref<1x1x128xf32, #tpu.memory_space<vmem>>
    %56 = tpu.memref_squeeze %55 : memref<1x1x128xf32, #tpu.memory_space<vmem>> -> memref<1x128xf32, #tpu.memory_space<vmem>>
    %57 = tpu.memref_slice %arg13[%12, %c6_i32_41] : memref<2x8x!tpu.dma_semaphore, #tpu.memory_space<semaphore_mem>> -> memref<1x1x!tpu.dma_semaphore, #tpu.memory_space<semaphore_mem>>
    %58 = tpu.memref_squeeze %57 : memref<1x1x!tpu.dma_semaphore, #tpu.memory_space<semaphore_mem>> -> memref<!tpu.dma_semaphore, #tpu.memory_space<semaphore_mem>>
    tpu.wait_dma2 semaphore(%58 : memref<!tpu.dma_semaphore, #tpu.memory_space<semaphore_mem>>) src(%54 : memref<1x128xf32, #tpu.memory_space<any>>) dst(%56 : memref<1x128xf32, #tpu.memory_space<vmem>>)
    %c0_i32_46 = arith.constant 0 : i32
    %c7_i32 = arith.constant 7 : i32
    %c0_i32_47 = arith.constant 0 : i32
    %c0_i32_48 = arith.constant 0 : i32
    %59 = tpu.memref_slice %arg4[%c0_i32_46, %c0_i32_47, %c0_i32_48] : memref<16x1x128xf32, #tpu.memory_space<any>> -> memref<1x1x128xf32, #tpu.memory_space<any>>
    %60 = tpu.memref_squeeze %59 : memref<1x1x128xf32, #tpu.memory_space<any>> -> memref<1x128xf32, #tpu.memory_space<any>>
    %c7_i32_49 = arith.constant 7 : i32
    %c0_i32_50 = arith.constant 0 : i32
    %61 = tpu.memref_slice %arg12[%12, %c7_i32_49, %c0_i32_50] : memref<2x8x128xf32, #tpu.memory_space<vmem>> -> memref<1x1x128xf32, #tpu.memory_space<vmem>>
    %62 = tpu.memref_squeeze %61 : memref<1x1x128xf32, #tpu.memory_space<vmem>> -> memref<1x128xf32, #tpu.memory_space<vmem>>
    %63 = tpu.memref_slice %arg13[%12, %c7_i32] : memref<2x8x!tpu.dma_semaphore, #tpu.memory_space<semaphore_mem>> -> memref<1x1x!tpu.dma_semaphore, #tpu.memory_space<semaphore_mem>>
    %64 = tpu.memref_squeeze %63 : memref<1x1x!tpu.dma_semaphore, #tpu.memory_space<semaphore_mem>> -> memref<!tpu.dma_semaphore, #tpu.memory_space<semaphore_mem>>
    tpu.wait_dma2 semaphore(%64 : memref<!tpu.dma_semaphore, #tpu.memory_space<semaphore_mem>>) src(%60 : memref<1x128xf32, #tpu.memory_space<any>>) dst(%62 : memref<1x128xf32, #tpu.memory_space<vmem>>)
    %65 = arith.index_cast %12 : i32 to index
    %c0 = arith.constant 0 : index
    %c0_51 = arith.constant 0 : index
    %66 = vector.load %arg12[%65, %c0, %c0_51] : memref<2x8x128xf32, #tpu.memory_space<vmem>>, vector<1x8x128xf32>
    %67 = vector.shape_cast %66 : vector<1x8x128xf32> to vector<8x128xf32>
    %68 = arith.truncf %67 : vector<8x128xf32> to vector<8x128xbf16>
    %c0_52 = arith.constant 0 : index
    %c0_53 = arith.constant 0 : index
    %c0_54 = arith.constant 0 : index
    %69 = vector.load %arg14[%c0_52, %c0_53, %c0_54] : memref<2x8x128xbf16, #tpu.memory_space<vmem>>, vector<1x8x128xbf16>
    %70 = vector.shape_cast %69 : vector<1x8x128xbf16> to vector<8x128xbf16>
    %c0_55 = arith.constant 0 : index
    %c0_56 = arith.constant 0 : index
    %c0_57 = arith.constant 0 : index
    %71 = vector.load %arg11[%c0_55, %c0_56, %c0_57] : memref<2x8x128xf32, #tpu.memory_space<vmem>>, vector<1x8x128xf32>
    %72 = vector.shape_cast %71 : vector<1x8x128xf32> to vector<8x128xf32>
    %73 = tpu.concatenate %68, %70 in 1 : vector<8x128xbf16>, vector<8x128xbf16> -> vector<8x256xbf16>
    %c0_58 = arith.constant 0 : index
    %c0_59 = arith.constant 0 : index
    %c0_60 = arith.constant 0 : index
    %74 = vector.load %arg5[%c0_58, %c0_59, %c0_60] : memref<2x256x512xbf16, #tpu.memory_space<vmem>>, vector<1x256x512xbf16>
    %75 = vector.shape_cast %74 : vector<1x256x512xbf16> to vector<256x512xbf16>
    %cst = arith.constant dense<0.000000e+00> : vector<8x512xf32>
    %76 = tpu.matmul %73, %75, %cst {dimension_numbers = #tpu.dot_dimension_numbers<[1], [0], [0], [1], [0, 0, 1, 1], [], []>} : vector<8x256xbf16>, vector<256x512xbf16>, vector<8x512xf32> -> vector<8x512xf32>
    %c0_61 = arith.constant 0 : index
    %c0_62 = arith.constant 0 : index
    %c0_63 = arith.constant 0 : index
    %77 = vector.load %arg6[%c0_61, %c0_62, %c0_63] : memref<2x1x512xf32, #tpu.memory_space<vmem>>, vector<1x1x512xf32>
    %78 = vector.shape_cast %77 : vector<1x1x512xf32> to vector<1x512xf32>
    %79 = vector.broadcast %78 : vector<1x512xf32> to vector<8x512xf32>
    %80 = arith.addf %76, %79 : vector<8x512xf32>
    %81 = vector.extract_strided_slice %80 {offsets = [0, 0], sizes = [8, 128], strides = [1, 1]} : vector<8x512xf32> to vector<8x128xf32>
    %82 = arith.negf %81 : vector<8x128xf32>
    %83 = math.exp %82 : vector<8x128xf32>
    %cst_64 = arith.constant 1.000000e+00 : f32
    %84 = vector.broadcast %cst_64 : f32 to vector<8x128xf32>
    %85 = arith.addf %84, %83 : vector<8x128xf32>
    %86 = arith.divf %84, %85 : vector<8x128xf32>
    %87 = vector.extract_strided_slice %80 {offsets = [0, 128], sizes = [8, 128], strides = [1, 1]} : vector<8x512xf32> to vector<8x128xf32>
    %88 = arith.negf %87 : vector<8x128xf32>
    %89 = math.exp %88 : vector<8x128xf32>
    %cst_65 = arith.constant 1.000000e+00 : f32
    %90 = vector.broadcast %cst_65 : f32 to vector<8x128xf32>
    %91 = arith.addf %90, %89 : vector<8x128xf32>
    %92 = arith.divf %90, %91 : vector<8x128xf32>
    %93 = vector.extract_strided_slice %80 {offsets = [0, 256], sizes = [8, 128], strides = [1, 1]} : vector<8x512xf32> to vector<8x128xf32>
    %94 = math.tanh %93 : vector<8x128xf32>
    %95 = vector.extract_strided_slice %80 {offsets = [0, 384], sizes = [8, 128], strides = [1, 1]} : vector<8x512xf32> to vector<8x128xf32>
    %96 = arith.negf %95 : vector<8x128xf32>
    %97 = math.exp %96 : vector<8x128xf32>
    %cst_66 = arith.constant 1.000000e+00 : f32
    %98 = vector.broadcast %cst_66 : f32 to vector<8x128xf32>
    %99 = arith.addf %98, %97 : vector<8x128xf32>
    %100 = arith.divf %98, %99 : vector<8x128xf32>
    %101 = arith.mulf %92, %72 : vector<8x128xf32>
    %102 = arith.mulf %86, %94 : vector<8x128xf32>
    %103 = arith.addf %101, %102 : vector<8x128xf32>
    %104 = math.tanh %103 : vector<8x128xf32>
    %105 = arith.mulf %100, %104 : vector<8x128xf32>
    %c0_67 = arith.constant 0 : index
    %c0_68 = arith.constant 0 : index
    %c0_69 = arith.constant 0 : index
    %106 = vector.load %arg11[%c0_67, %c0_68, %c0_69] : memref<2x8x128xf32, #tpu.memory_space<vmem>>, vector<1x8x128xf32>
    %107 = vector.shape_cast %106 : vector<1x8x128xf32> to vector<8x128xf32>
    %108 = vector.shape_cast %103 : vector<8x128xf32> to vector<1x8x128xf32>
    tpu.vector_store %arg11[%c0_67, %c0_68, %c0_69], %108 {strides = array<i32>} : memref<2x8x128xf32, #tpu.memory_space<vmem>>, vector<1x8x128xf32>,
    %c0_70 = arith.constant 0 : index
    %c0_71 = arith.constant 0 : index
    %c0_72 = arith.constant 0 : index
    %109 = vector.load %arg10[%c0_70, %c0_71, %c0_72] : memref<2x8x128xf32, #tpu.memory_space<vmem>>, vector<1x8x128xf32>
    %110 = vector.shape_cast %109 : vector<1x8x128xf32> to vector<8x128xf32>
    %111 = vector.shape_cast %105 : vector<8x128xf32> to vector<1x8x128xf32>
    tpu.vector_store %arg10[%c0_70, %c0_71, %c0_72], %111 {strides = array<i32>} : memref<2x8x128xf32, #tpu.memory_space<vmem>>, vector<1x8x128xf32>,
    %112 = arith.truncf %105 : vector<8x128xf32> to vector<8x128xbf16>
    %c0_73 = arith.constant 0 : index
    %c0_74 = arith.constant 0 : index
    %c0_75 = arith.constant 0 : index
    %113 = vector.load %arg14[%c0_73, %c0_74, %c0_75] : memref<2x8x128xbf16, #tpu.memory_space<vmem>>, vector<1x8x128xbf16>
    %114 = vector.shape_cast %113 : vector<1x8x128xbf16> to vector<8x128xbf16>
    %115 = vector.shape_cast %112 : vector<8x128xbf16> to vector<1x8x128xbf16>
    tpu.vector_store %arg14[%c0_73, %c0_74, %c0_75], %115 {strides = array<i32>} : memref<2x8x128xbf16, #tpu.memory_space<vmem>>, vector<1x8x128xbf16>,
    %c1 = arith.constant 1 : index
    %c0_76 = arith.constant 0 : index
    %c0_77 = arith.constant 0 : index
    %116 = vector.load %arg14[%c1, %c0_76, %c0_77] : memref<2x8x128xbf16, #tpu.memory_space<vmem>>, vector<1x8x128xbf16>
    %117 = vector.shape_cast %116 : vector<1x8x128xbf16> to vector<8x128xbf16>
    %c1_78 = arith.constant 1 : index
    %c0_79 = arith.constant 0 : index
    %c0_80 = arith.constant 0 : index
    %118 = vector.load %arg11[%c1_78, %c0_79, %c0_80] : memref<2x8x128xf32, #tpu.memory_space<vmem>>, vector<1x8x128xf32>
    %119 = vector.shape_cast %118 : vector<1x8x128xf32> to vector<8x128xf32>
    %120 = tpu.concatenate %112, %117 in 1 : vector<8x128xbf16>, vector<8x128xbf16> -> vector<8x256xbf16>
    %c1_81 = arith.constant 1 : index
    %c0_82 = arith.constant 0 : index
    %c0_83 = arith.constant 0 : index
    %121 = vector.load %arg5[%c1_81, %c0_82, %c0_83] : memref<2x256x512xbf16, #tpu.memory_space<vmem>>, vector<1x256x512xbf16>
    %122 = vector.shape_cast %121 : vector<1x256x512xbf16> to vector<256x512xbf16>
    %cst_84 = arith.constant dense<0.000000e+00> : vector<8x512xf32>
    %123 = tpu.matmul %120, %122, %cst_84 {dimension_numbers = #tpu.dot_dimension_numbers<[1], [0], [0], [1], [0, 0, 1, 1], [], []>} : vector<8x256xbf16>, vector<256x512xbf16>, vector<8x512xf32> -> vector<8x512xf32>
    %c1_85 = arith.constant 1 : index
    %c0_86 = arith.constant 0 : index
    %c0_87 = arith.constant 0 : index
    %124 = vector.load %arg6[%c1_85, %c0_86, %c0_87] : memref<2x1x512xf32, #tpu.memory_space<vmem>>, vector<1x1x512xf32>
    %125 = vector.shape_cast %124 : vector<1x1x512xf32> to vector<1x512xf32>
    %126 = vector.broadcast %125 : vector<1x512xf32> to vector<8x512xf32>
    %127 = arith.addf %123, %126 : vector<8x512xf32>
    %128 = vector.extract_strided_slice %127 {offsets = [0, 0], sizes = [8, 128], strides = [1, 1]} : vector<8x512xf32> to vector<8x128xf32>
    %129 = arith.negf %128 : vector<8x128xf32>
    %130 = math.exp %129 : vector<8x128xf32>
    %cst_88 = arith.constant 1.000000e+00 : f32
    %131 = vector.broadcast %cst_88 : f32 to vector<8x128xf32>
    %132 = arith.addf %131, %130 : vector<8x128xf32>
    %133 = arith.divf %131, %132 : vector<8x128xf32>
    %134 = vector.extract_strided_slice %127 {offsets = [0, 128], sizes = [8, 128], strides = [1, 1]} : vector<8x512xf32> to vector<8x128xf32>
    %135 = arith.negf %134 : vector<8x128xf32>
    %136 = math.exp %135 : vector<8x128xf32>
    %cst_89 = arith.constant 1.000000e+00 : f32
    %137 = vector.broadcast %cst_89 : f32 to vector<8x128xf32>
    %138 = arith.addf %137, %136 : vector<8x128xf32>
    %139 = arith.divf %137, %138 : vector<8x128xf32>
    %140 = vector.extract_strided_slice %127 {offsets = [0, 256], sizes = [8, 128], strides = [1, 1]} : vector<8x512xf32> to vector<8x128xf32>
    %141 = math.tanh %140 : vector<8x128xf32>
    %142 = vector.extract_strided_slice %127 {offsets = [0, 384], sizes = [8, 128], strides = [1, 1]} : vector<8x512xf32> to vector<8x128xf32>
    %143 = arith.negf %142 : vector<8x128xf32>
    %144 = math.exp %143 : vector<8x128xf32>
    %cst_90 = arith.constant 1.000000e+00 : f32
    %145 = vector.broadcast %cst_90 : f32 to vector<8x128xf32>
    %146 = arith.addf %145, %144 : vector<8x128xf32>
    %147 = arith.divf %145, %146 : vector<8x128xf32>
    %148 = arith.mulf %139, %119 : vector<8x128xf32>
    %149 = arith.mulf %133, %141 : vector<8x128xf32>
    %150 = arith.addf %148, %149 : vector<8x128xf32>
    %151 = math.tanh %150 : vector<8x128xf32>
    %152 = arith.mulf %147, %151 : vector<8x128xf32>
    %c1_91 = arith.constant 1 : index
    %c0_92 = arith.constant 0 : index
    %c0_93 = arith.constant 0 : index
    %153 = vector.load %arg11[%c1_91, %c0_92, %c0_93] : memref<2x8x128xf32, #tpu.memory_space<vmem>>, vector<1x8x128xf32>
    %154 = vector.shape_cast %153 : vector<1x8x128xf32> to vector<8x128xf32>
    %155 = vector.shape_cast %150 : vector<8x128xf32> to vector<1x8x128xf32>
    tpu.vector_store %arg11[%c1_91, %c0_92, %c0_93], %155 {strides = array<i32>} : memref<2x8x128xf32, #tpu.memory_space<vmem>>, vector<1x8x128xf32>,
    %c1_94 = arith.constant 1 : index
    %c0_95 = arith.constant 0 : index
    %c0_96 = arith.constant 0 : index
    %156 = vector.load %arg10[%c1_94, %c0_95, %c0_96] : memref<2x8x128xf32, #tpu.memory_space<vmem>>, vector<1x8x128xf32>
    %157 = vector.shape_cast %156 : vector<1x8x128xf32> to vector<8x128xf32>
    %158 = vector.shape_cast %152 : vector<8x128xf32> to vector<1x8x128xf32>
    tpu.vector_store %arg10[%c1_94, %c0_95, %c0_96], %158 {strides = array<i32>} : memref<2x8x128xf32, #tpu.memory_space<vmem>>, vector<1x8x128xf32>,
    %159 = arith.truncf %152 : vector<8x128xf32> to vector<8x128xbf16>
    %c1_97 = arith.constant 1 : index
    %c0_98 = arith.constant 0 : index
    %c0_99 = arith.constant 0 : index
    %160 = vector.load %arg14[%c1_97, %c0_98, %c0_99] : memref<2x8x128xbf16, #tpu.memory_space<vmem>>, vector<1x8x128xbf16>
    %161 = vector.shape_cast %160 : vector<1x8x128xbf16> to vector<8x128xbf16>
    %162 = vector.shape_cast %159 : vector<8x128xbf16> to vector<1x8x128xbf16>
    tpu.vector_store %arg14[%c1_97, %c0_98, %c0_99], %162 {strides = array<i32>} : memref<2x8x128xbf16, #tpu.memory_space<vmem>>, vector<1x8x128xbf16>,
    %c0_100 = arith.constant 0 : index
    %c0_101 = arith.constant 0 : index
    %163 = vector.load %arg7[%c0_100, %c0_101] : memref<128x128xbf16, #tpu.memory_space<vmem>>, vector<128x128xbf16>
    %cst_102 = arith.constant dense<0.000000e+00> : vector<8x128xf32>
    %164 = tpu.matmul %159, %163, %cst_102 {dimension_numbers = #tpu.dot_dimension_numbers<[1], [0], [0], [1], [0, 0, 1, 1], [], []>} : vector<8x128xbf16>, vector<128x128xbf16>, vector<8x128xf32> -> vector<8x128xf32>
    %c0_103 = arith.constant 0 : index
    %c0_104 = arith.constant 0 : index
    %165 = vector.load %arg8[%c0_103, %c0_104] : memref<1x128xf32, #tpu.memory_space<vmem>>, vector<1x128xf32>
    %166 = vector.broadcast %165 : vector<1x128xf32> to vector<8x128xf32>
    %167 = arith.addf %164, %166 : vector<8x128xf32>
    %c0_105 = arith.constant 0 : index
    %c0_106 = arith.constant 0 : index
    %c0_107 = arith.constant 0 : index
    %168 = vector.load %arg9[%c0_105, %c0_106, %c0_107] : memref<1x8x128xf32, #tpu.memory_space<vmem>>, vector<1x8x128xf32>
    %169 = vector.shape_cast %168 : vector<1x8x128xf32> to vector<8x128xf32>
    %170 = vector.shape_cast %167 : vector<8x128xf32> to vector<1x8x128xf32>
    tpu.vector_store %arg9[%c0_105, %c0_106, %c0_107], %170 {strides = array<i32>} : memref<1x8x128xf32, #tpu.memory_space<vmem>>, vector<1x8x128xf32>,
    return
  }
  func.func @transform_0(%arg0: i32) -> (i32, i32) {
    %c0_i32 = arith.constant 0 : i32
    %c0_i32_0 = arith.constant 0 : i32
    %c0_i32_1 = arith.constant 0 : i32
    return %c0_i32, %c0_i32_0 : i32, i32
  }
  func.func @transform_1(%arg0: i32) -> (i32, i32, i32) {
    %c0_i32 = arith.constant 0 : i32
    %c0_i32_0 = arith.constant 0 : i32
    %c0_i32_1 = arith.constant 0 : i32
    %c0_i32_2 = arith.constant 0 : i32
    return %c0_i32, %c0_i32_0, %c0_i32_1 : i32, i32, i32
  }
  func.func @transform_2(%arg0: i32) -> (i32, i32, i32) {
    %c0_i32 = arith.constant 0 : i32
    %c0_i32_0 = arith.constant 0 : i32
    %c0_i32_1 = arith.constant 0 : i32
    %c0_i32_2 = arith.constant 0 : i32
    return %c0_i32, %c0_i32_0, %c0_i32_1 : i32, i32, i32
  }
  func.func @transform_4(%arg0: i32) -> (i32, i32, i32) {
    %c0_i32 = arith.constant 0 : i32
    %c0_i32_0 = arith.constant 0 : i32
    %c0_i32_1 = arith.constant 0 : i32
    %c0_i32_2 = arith.constant 0 : i32
    return %c0_i32, %c0_i32_0, %c0_i32_1 : i32, i32, i32
  }
  func.func @transform_5(%arg0: i32) -> (i32, i32, i32) {
    %c0_i32 = arith.constant 0 : i32
    %c0_i32_0 = arith.constant 0 : i32
    %c0_i32_1 = arith.constant 0 : i32
    %c0_i32_2 = arith.constant 0 : i32
    return %c0_i32, %c0_i32_0, %c0_i32_1 : i32, i32, i32
  }
  func.func @transform_6(%arg0: i32) -> (i32, i32) {
    %c0_i32 = arith.constant 0 : i32
    %c0_i32_0 = arith.constant 0 : i32
    %c0_i32_1 = arith.constant 0 : i32
    return %c0_i32, %c0_i32_0 : i32, i32
  }
  func.func @transform_7(%arg0: i32) -> (i32, i32) {
    %c0_i32 = arith.constant 0 : i32
    %c0_i32_0 = arith.constant 0 : i32
    %c0_i32_1 = arith.constant 0 : i32
    return %c0_i32, %c0_i32_0 : i32, i32
  }
  func.func @transform_8(%arg0: i32) -> (i32, i32, i32) {
    %c0_i32 = arith.constant 0 : i32
    %c0_i32_0 = arith.constant 0 : i32
    %c0_i32_1 = arith.constant 0 : i32
    return %arg0, %c0_i32, %c0_i32_0 : i32, i32, i32
  }
  func.func @transform_9(%arg0: i32) -> (i32, i32, i32) {
    %c0_i32 = arith.constant 0 : i32
    %c0_i32_0 = arith.constant 0 : i32
    %c0_i32_1 = arith.constant 0 : i32
    %c0_i32_2 = arith.constant 0 : i32
    return %c0_i32, %c0_i32_0, %c0_i32_1 : i32, i32, i32
  }
  func.func @transform_10(%arg0: i32) -> (i32, i32, i32) {
    %c0_i32 = arith.constant 0 : i32
    %c0_i32_0 = arith.constant 0 : i32
    %c0_i32_1 = arith.constant 0 : i32
    %c0_i32_2 = arith.constant 0 : i32
    return %c0_i32, %c0_i32_0, %c0_i32_1 : i32, i32, i32
  }
}

</mosaic_0001>

<llo_original>
// kernel: decoder_decode_steps.1
$region0: #{decoder_decode_steps.1}
  #allocation0 [shape = 'u32[]', space=smem, size = 0x4, offset = 0x4, fixed_abs, tag = 'smem constant byte address 0x4 - core index']
  #allocation1 [shape = 'u32[72,128]{1,0:T(1,128)}', space=vmem, size = 0x9000, scoped, tag = 'internal scratch']
  #allocation2 [shape = 'f32[2,8,128]{2,1,0:T(8,128)}', space=vmem, size = 0x2000, scoped, tag = 'scratch operand']
  #allocation3 [shape = 's32[16]{0}', space=sflag, size = 0x40, scoped, tag = 'scratch operand']
  #allocation4 [shape = 'bf16[2,8,128]{2,1,0:T(8,128)(2,1)}', space=vmem, size = 0x1000, scoped, tag = 'scratch operand']
  #allocation13 [shape = 's32[]', space=sflag, size = 0x4, offset = 0, fixed_abs, tag = 'sflag constant byte address 0x0 - dummy sync flag']
  #allocation14 [shape = 's32[]', space=sflag, size = 0x4, offset = 0, fixed_abs, tag = 'sflag constant byte address 0x0 - dummy sync flag']
  #allocation15 [shape = 'u32[]', space=smem, size = 0x4, offset = 0x44, fixed_abs, tag = 'smem constant byte address 0x44 - assertion arg 0']
  #allocation16 [shape = 'u32[]', space=smem, size = 0x4, offset = 0x48, fixed_abs, tag = 'smem constant byte address 0x48 - assertion arg 1']
  #allocation17 [shape = 's32[]', space=sflag, size = 0x4, offset = 0, fixed_abs, tag = 'sflag constant byte address 0x0 - dummy sync flag']
  #allocation18 [shape = 's32[]', space=sflag, size = 0x4, offset = 0, fixed_abs, tag = 'sflag constant byte address 0x0 - dummy sync flag']
  #allocation19 [shape = 's32[]', space=sflag, size = 0x4, offset = 0, fixed_abs, tag = 'sflag constant byte address 0x0 - dummy sync flag']
  #allocation20 [shape = 's32[]', space=sflag, size = 0x4, offset = 0, fixed_abs, tag = 'sflag constant byte address 0x0 - dummy sync flag']
  #allocation21 [shape = 's32[]', space=sflag, size = 0x4, offset = 0, fixed_abs, tag = 'sflag constant byte address 0x0 - dummy sync flag']
  #allocation22 [shape = 's32[]', space=sflag, size = 0x4, offset = 0, fixed_abs, tag = 'sflag constant byte address 0x0 - dummy sync flag']
  #allocation23 [shape = 's32[]', space=sflag, size = 0x4, offset = 0, fixed_abs, tag = 'sflag constant byte address 0x0 - dummy sync flag']
  #allocation24 [shape = 's32[]', space=sflag, size = 0x4, offset = 0, fixed_abs, tag = 'sflag constant byte address 0x0 - dummy sync flag']
  #allocation25 [shape = 's32[]', space=sflag, size = 0x4, offset = 0, fixed_abs, tag = 'sflag constant byte address 0x0 - dummy sync flag']
  #allocation26 [shape = 's32[]', space=sflag, size = 0x4, offset = 0, fixed_abs, tag = 'sflag constant byte address 0x0 - dummy sync flag']
  #allocation27 [shape = 's32[]', space=sflag, size = 0x4, offset = 0, fixed_abs, tag = 'sflag constant byte address 0x0 - dummy sync flag']
  #allocation28 [shape = 's32[]', space=sflag, size = 0x4, offset = 0, fixed_abs, tag = 'sflag constant byte address 0x0 - dummy sync flag']
  #allocation29 [shape = 's32[]', space=sflag, size = 0x4, offset = 0, fixed_abs, tag = 'sflag constant byte address 0x0 - dummy sync flag']
  #allocation30 [shape = 's32[]', space=sflag, size = 0x4, offset = 0, fixed_abs, tag = 'sflag constant byte address 0x0 - dummy sync flag']
  #allocation31 [shape = 's32[]', space=sflag, size = 0x4, offset = 0, fixed_abs, tag = 'sflag constant byte address 0x0 - dummy sync flag']
  #allocation32 [shape = 's32[]', space=sflag, size = 0x4, offset = 0, fixed_abs, tag = 'sflag constant byte address 0x0 - dummy sync flag']
  #allocation33 [shape = 's32[]', space=sflag, size = 0x4, offset = 0, fixed_abs, tag = 'sflag constant byte address 0x0 - dummy sync flag']
  #allocation34 [shape = 's32[]', space=sflag, size = 0x4, offset = 0, fixed_abs, tag = 'sflag constant byte address 0x0 - dummy sync flag']
  #allocation35 [shape = 's32[]', space=sflag, size = 0x4, offset = 0, fixed_abs, tag = 'sflag constant byte address 0x0 - dummy sync flag']
  #allocation36 [shape = 's32[]', space=sflag, size = 0x4, offset = 0, fixed_abs, tag = 'sflag constant byte address 0x0 - dummy sync flag']
  #allocation37 [shape = 's32[]', space=sflag, size = 0x4, offset = 0, fixed_abs, tag = 'sflag constant byte address 0x0 - dummy sync flag']
  #allocation38 [shape = 's32[]', space=sflag, size = 0x4, offset = 0, fixed_abs, tag = 'sflag constant byte address 0x0 - dummy sync flag']
  #allocation39 [shape = 's32[]', space=sflag, size = 0x4, offset = 0, fixed_abs, tag = 'sflag constant byte address 0x0 - dummy sync flag']
  #allocation40 [shape = 's32[]', space=sflag, size = 0x4, offset = 0, fixed_abs, tag = 'sflag constant byte address 0x0 - dummy sync flag']
  #allocation41 [shape = 's32[]', space=sflag, size = 0x4, offset = 0, fixed_abs, tag = 'sflag constant byte address 0x0 - dummy sync flag']
  #allocation42 [shape = 's32[]', space=sflag, size = 0x4, offset = 0, fixed_abs, tag = 'sflag constant byte address 0x0 - dummy sync flag']
  #allocation43 [shape = 's32[]', space=sflag, size = 0x4, offset = 0, fixed_abs, tag = 'sflag constant byte address 0x0 - dummy sync flag']
  #allocation44 [shape = 's32[]', space=sflag, size = 0x4, offset = 0, fixed_abs, tag = 'sflag constant byte address 0x0 - dummy sync flag']
  #allocation45 [shape = 's32[]', space=sflag, size = 0x4, offset = 0, fixed_abs, tag = 'sflag constant byte address 0x0 - dummy sync flag']
  #allocation46 [shape = 's32[]', space=sflag, size = 0x4, offset = 0, fixed_abs, tag = 'sflag constant byte address 0x0 - dummy sync flag']
  %s0 = inlined_call_operand.hbm [shape: s32[6,8], index: 0, kind: input, shape index: {}]
  %s1 = inlined_call_operand.vmem [shape: f32[2,8,128], index: 1, kind: input, shape index: {}, may-alias: {1,9}]
  %s2 = inlined_call_operand.vmem [shape: f32[2,8,128], index: 2, kind: input, shape index: {}, may-alias: {2,10}]
  %s3 = inlined_call_operand.hbm [shape: f32[16,1,128], index: 3, kind: input, shape index: {}]
  %s4 = inlined_call_operand.hbm [shape: bf16[2,256,512], index: 4, kind: input, shape index: {}]
  %s5 = inlined_call_operand.hbm [shape: f32[2,1,512], index: 5, kind: input, shape index: {}]
  %s6 = inlined_call_operand.vmem [shape: bf16[128,128], index: 6, kind: input, shape index: {}]
  %s7 = inlined_call_operand.vmem [shape: f32[1,128], index: 7, kind: input, shape index: {}]
  %s8 = inlined_call_operand.hbm [shape: f32[6,8,128], index: 8, kind: output, shape index: {0}]
  %s9 = inlined_call_operand.vmem [shape: f32[2,8,128], index: 9, kind: output, shape index: {1}, may-alias: {1,9}]
  %s10 = inlined_call_operand.vmem [shape: f32[2,8,128], index: 10, kind: output, shape index: {2}, may-alias: {2,10}]
  %11 = xla_tuple %s8, %s9, %s10
  %s12 = sld [smem:[#allocation0]]
  $region161: #{decoder_decode_steps.1} parent=0
    _
  %s14 = ssub.s32 1, %s12
  %s15 = scalar_select 0, %s14, %s12
  $region1: #{decoder_decode_steps.1} parent=0
    #allocation5 [shape = 'u8[4096]{0}', space=smem, size = 0x1000, scoped, tag = 'input window, operand 0, single buffered']
    #allocation6 [shape = 's32[2]{0}', space=sflag, size = 0x8, scoped, tag = 'scoped memory for decoder_decode_steps.1']
    #allocation7 [shape = 's32[2]{0}', space=sflag, size = 0x8, scoped, tag = 'scoped memory for decoder_decode_steps.1']
    #allocation8 [shape = 's32[2]{0}', space=sflag, size = 0x8, scoped, tag = 'scoped memory for decoder_decode_steps.1']
    #allocation9 [shape = 'u8[524288]{0}', space=vmem, size = 0x80000, scoped, tag = 'input window, operand 4, single buffered']
    #allocation10 [shape = 'u8[4096]{0}', space=vmem, size = 0x1000, scoped, tag = 'input window, operand 5, single buffered']
    #allocation11 [shape = 's32[1]{0}', space=sflag, size = 0x4, scoped, tag = 'scoped memory for decoder_decode_steps.1']
    #allocation12 [shape = 'u8[8192]{0}', space=vmem, size = 0x2000, scoped, tag = 'output window, operand 0']
    %16 = vsyncpa [#allocation8], 0
    %17 = vsyncpa [#allocation6], 0
    %18 = vsyncpa [#allocation11], 0
    %19 = vsyncpa [#allocation7], 0
    %s20 = scalar_lea.sflag [#allocation7], 1
    %21 = vsyncpa %s20, 0
    loop: start=0, step=1, limit=8
    $region2: #{decoder_decode_steps.1} parent=1 // loop_pre_header
      _
    $region3: #{decoder_decode_steps.1} parent=1 // loop_header
      %s23 = sphi 0, %s27
      %p24 = scmp.ge.s32.totalorder %s23, 8
      %s31 = sphi 0, %s31
      %s33 = sphi 0, %s31
      %s34 = sphi 0, %s33
      %s48 = sphi 0, %s34
      %s52 = sphi 0, %s52
      %s54 = sphi 0, %s52
      %s55 = sphi 0, %s54
      %s69 = sphi 0, %s55
      %s73 = sphi 0, %s73
      %s75 = sphi 0, %s73
      %s76 = sphi 0, %s75
      %s90 = sphi 0, %s76
      %s94 = sphi 0, %s94
      %s96 = sphi 0, %s94
      %s97 = sphi 0, %s96
      %s111 = sphi 0, %s97
      %s115 = sphi 0, %s115
      %s117 = sphi 0, %s115
      %s118 = sphi 0, %s117
      %s132 = sphi 0, %s118
      %s136 = sphi 0, %s136
      %s138 = sphi 0, %s136
      %s139 = sphi 0, %s138
      %s153 = sphi 0, %s139
      %s157 = sphi 0, %s157
      %s159 = sphi 0, %s157
      %s160 = sphi 0, %s159
      %s174 = sphi 0, %s160
      %s180 = sphi 0, %s182
      %s183 = sphi 0, %s180
      %s184 = sphi 0, %s183
      %s200 = sphi 0, %s184
      %s204 = sphi 0, %s204
      %s206 = sphi 0, %s204
      %s207 = sphi 0, %s206
      %s221 = sphi 0, %s207
      %s225 = sphi 0, %s225
      %s227 = sphi 0, %s225
      %s228 = sphi 0, %s227
      %s242 = sphi 0, %s228
    $region4: #{decoder_decode_steps.1} parent=1 // loop_header_branch
      %26 = sbr.rel (%p24) target = $region8
    $region5: #{decoder_decode_steps.1} parent=1 // loop_body
      %s28 = ssub.s32 %s23, 1
      %s29 = ssub.s32 %s23, 2
      %s30 = sadd.s32 %s23, 1
      %s32 = sadd.s32 %s31, 1
      %p35 = scmp.eq.s32.totalorder %s23, 5
      %p36 = scmp.ne.s32.totalorder %s31, %s33
      %p37 = scmp.eq.s32.totalorder %s23, 0
      %p38 = por %p36, %p37
      %p39 = scmp.ne.s32.totalorder %s31, %s33
      %p40 = scmp.eq.s32.totalorder %s28, 5
      %p41 = por %p39, %p40
      %p42 = scmp.ne.s32.totalorder %s33, %s34
      %p43 = scmp.eq.s32.totalorder %s28, 0
      %p44 = por %p42, %p43
      %p45 = scmp.ne.s32.totalorder %s33, %s34
      %p46 = scmp.eq.s32.totalorder %s29, 5
      %p47 = por %p45, %p46
      %p49 = scmp.ne.s32.totalorder %s34, %s48
      %p50 = scmp.eq.s32.totalorder %s29, 0
      %p51 = por %p49, %p50
      %s53 = sadd.s32 %s52, 1
      %p56 = scmp.eq.s32.totalorder %s23, 5
      %p57 = scmp.ne.s32.totalorder %s52, %s54
      %p58 = scmp.eq.s32.totalorder %s23, 0
      %p59 = por %p57, %p58
      %p60 = scmp.ne.s32.totalorder %s52, %s54
      %p61 = scmp.eq.s32.totalorder %s28, 5
      %p62 = por %p60, %p61
      %p63 = scmp.ne.s32.totalorder %s54, %s55
      %p64 = scmp.eq.s32.totalorder %s28, 0
      %p65 = por %p63, %p64
      %p66 = scmp.ne.s32.totalorder %s54, %s55
      %p67 = scmp.eq.s32.totalorder %s29, 5
      %p68 = por %p66, %p67
      %p70 = scmp.ne.s32.totalorder %s55, %s69
      %p71 = scmp.eq.s32.totalorder %s29, 0
      %p72 = por %p70, %p71
      %s74 = sadd.s32 %s73, 1
      %p77 = scmp.eq.s32.totalorder %s23, 5
      %p78 = scmp.ne.s32.totalorder %s73, %s75
      %p79 = scmp.eq.s32.totalorder %s23, 0
      %p80 = por %p78, %p79
      %p81 = scmp.ne.s32.totalorder %s73, %s75
      %p82 = scmp.eq.s32.totalorder %s28, 5
      %p83 = por %p81, %p82
      %p84 = scmp.ne.s32.totalorder %s75, %s76
      %p85 = scmp.eq.s32.totalorder %s28, 0
      %p86 = por %p84, %p85
      %p87 = scmp.ne.s32.totalorder %s75, %s76
      %p88 = scmp.eq.s32.totalorder %s29, 5
      %p89 = por %p87, %p88
      %p91 = scmp.ne.s32.totalorder %s76, %s90
      %p92 = scmp.eq.s32.totalorder %s29, 0
      %p93 = por %p91, %p92
      %s95 = sadd.s32 %s94, 1
      %p98 = scmp.eq.s32.totalorder %s23, 5
      %p99 = scmp.ne.s32.totalorder %s94, %s96
      %p100 = scmp.eq.s32.totalorder %s23, 0
      %p101 = por %p99, %p100
      %p102 = scmp.ne.s32.totalorder %s94, %s96
      %p103 = scmp.eq.s32.totalorder %s28, 5
      %p104 = por %p102, %p103
      %p105 = scmp.ne.s32.totalorder %s96, %s97
      %p106 = scmp.eq.s32.totalorder %s28, 0
      %p107 = por %p105, %p106
      %p108 = scmp.ne.s32.totalorder %s96, %s97
      %p109 = scmp.eq.s32.totalorder %s29, 5
      %p110 = por %p108, %p109
      %p112 = scmp.ne.s32.totalorder %s97, %s111
      %p113 = scmp.eq.s32.totalorder %s29, 0
      %p114 = por %p112, %p113
      %s116 = sadd.s32 %s115, 1
      %p119 = scmp.eq.s32.totalorder %s23, 5
      %p120 = scmp.ne.s32.totalorder %s115, %s117
      %p121 = scmp.eq.s32.totalorder %s23, 0
      %p122 = por %p120, %p121
      %p123 = scmp.ne.s32.totalorder %s115, %s117
      %p124 = scmp.eq.s32.totalorder %s28, 5
      %p125 = por %p123, %p124
      %p126 = scmp.ne.s32.totalorder %s117, %s118
      %p127 = scmp.eq.s32.totalorder %s28, 0
      %p128 = por %p126, %p127
      %p129 = scmp.ne.s32.totalorder %s117, %s118
      %p130 = scmp.eq.s32.totalorder %s29, 5
      %p131 = por %p129, %p130
      %p133 = scmp.ne.s32.totalorder %s118, %s132
      %p134 = scmp.eq.s32.totalorder %s29, 0
      %p135 = por %p133, %p134
      %s137 = sadd.s32 %s136, 1
      %p140 = scmp.eq.s32.totalorder %s23, 5
      %p141 = scmp.ne.s32.totalorder %s136, %s138
      %p142 = scmp.eq.s32.totalorder %s23, 0
      %p143 = por %p141, %p142
      %p144 = scmp.ne.s32.totalorder %s136, %s138
      %p145 = scmp.eq.s32.totalorder %s28, 5
      %p146 = por %p144, %p145
      %p147 = scmp.ne.s32.totalorder %s138, %s139
      %p148 = scmp.eq.s32.totalorder %s28, 0
      %p149 = por %p147, %p148
      %p150 = scmp.ne.s32.totalorder %s138, %s139
      %p151 = scmp.eq.s32.totalorder %s29, 5
      %p152 = por %p150, %p151
      %p154 = scmp.ne.s32.totalorder %s139, %s153
      %p155 = scmp.eq.s32.totalorder %s29, 0
      %p156 = por %p154, %p155
      %s158 = sadd.s32 %s157, 1
      %p161 = scmp.eq.s32.totalorder %s23, 5
      %p162 = scmp.ne.s32.totalorder %s157, %s159
      %p163 = scmp.eq.s32.totalorder %s23, 0
      %p164 = por %p162, %p163
      %p165 = scmp.ne.s32.totalorder %s157, %s159
      %p166 = scmp.eq.s32.totalorder %s28, 5
      %p167 = por %p165, %p166
      %p168 = scmp.ne.s32.totalorder %s159, %s160
      %p169 = scmp.eq.s32.totalorder %s28, 0
      %p170 = por %p168, %p169
      %p171 = scmp.ne.s32.totalorder %s159, %s160
      %p172 = scmp.eq.s32.totalorder %s29, 5
      %p173 = por %p171, %p172
      %p175 = scmp.ne.s32.totalorder %s160, %s174
      %p176 = scmp.eq.s32.totalorder %s29, 0
      %p177 = por %p175, %p176
      %s178 = ssub.s32 %s23, %s30
      %p179 = scmp.eq.s32.totalorder %s178, 0
      %s181 = sadd.s32 %s180, 1
      %s182 = scalar_select %p179, %s180, %s181
      %p185 = pneg %p179
      %p186 = scmp.eq.s32.totalorder %s23, 5
      %p187 = por %p185, %p186
      %p188 = scmp.ne.s32.totalorder %s180, %s183
      %p189 = scmp.eq.s32.totalorder %s23, 0
      %p190 = por %p188, %p189
      %p191 = scmp.ne.s32.totalorder %s180, %s183
      %p192 = scmp.eq.s32.totalorder %s28, 5
      %p193 = por %p191, %p192
      %p194 = scmp.ne.s32.totalorder %s183, %s184
      %p195 = scmp.eq.s32.totalorder %s28, 0
      %p196 = por %p194, %p195
      %p197 = scmp.ne.s32.totalorder %s183, %s184
      %p198 = scmp.eq.s32.totalorder %s29, 5
      %p199 = por %p197, %p198
      %p201 = scmp.ne.s32.totalorder %s184, %s200
      %p202 = scmp.eq.s32.totalorder %s29, 0
      %p203 = por %p201, %p202
      %s205 = sadd.s32 %s204, 1
      %p208 = scmp.eq.s32.totalorder %s23, 5
      %p209 = scmp.ne.s32.totalorder %s204, %s206
      %p210 = scmp.eq.s32.totalorder %s23, 0
      %p211 = por %p209, %p210
      %p212 = scmp.ne.s32.totalorder %s204, %s206
      %p213 = scmp.eq.s32.totalorder %s28, 5
      %p214 = por %p212, %p213
      %p215 = scmp.ne.s32.totalorder %s206, %s207
      %p216 = scmp.eq.s32.totalorder %s28, 0
      %p217 = por %p215, %p216
      %p218 = scmp.ne.s32.totalorder %s206, %s207
      %p219 = scmp.eq.s32.totalorder %s29, 5
      %p220 = por %p218, %p219
      %p222 = scmp.ne.s32.totalorder %s207, %s221
      %p223 = scmp.eq.s32.totalorder %s29, 0
      %p224 = por %p222, %p223
      %s226 = sadd.s32 %s225, 1
      %p229 = scmp.eq.s32.totalorder %s23, 5
      %p230 = scmp.ne.s32.totalorder %s225, %s227
      %p231 = scmp.eq.s32.totalorder %s23, 0
      %p232 = por %p230, %p231
      %p233 = scmp.ne.s32.totalorder %s225, %s227
      %p234 = scmp.eq.s32.totalorder %s28, 5
      %p235 = por %p233, %p234
      %p236 = scmp.ne.s32.totalorder %s227, %s228
      %p237 = scmp.eq.s32.totalorder %s28, 0
      %p238 = por %p236, %p237
      %p239 = scmp.ne.s32.totalorder %s227, %s228
      %p240 = scmp.eq.s32.totalorder %s29, 5
      %p241 = por %p239, %p240
      %p243 = scmp.ne.s32.totalorder %s228, %s242
      %p244 = scmp.eq.s32.totalorder %s29, 0
      %p245 = por %p243, %p244
      %p246 = scmp.le.s32.totalorder 1, %s23
      %p247 = scmp.lt.s32.totalorder %s23, 7
      %p248 = pnand %p246, %p247
      %p249 = pneg %p248
      // Predicated region
      $region9: #{decoder_decode_steps.1} parent=5 // pred_check
        _
      $region10: #{decoder_decode_steps.1} parent=5 // pred_check_branch
        %251 = sbr.rel (%p248) target = $region12
      $region11: #{decoder_decode_steps.1} parent=5 // pred_region
        %s252 = ssub.s32 %s23, 1
        // Predicated region
        $region13: #{decoder_decode_steps.1} parent=11 // pred_check
          %p253 = pneg %p44
        $region14: #{decoder_decode_steps.1} parent=11 // pred_check_branch
          %255 = sbr.rel (%p253) target = $region16
        $region15: #{decoder_decode_steps.1} parent=11 // pred_region
          %257 = vsyncadd [#allocation8], 0
          %s259 = sshll.u32 %s0, 4
          %s260 = int_to_ptr.hbm [resolvable:$true] %s259
          %262 = dma.hbm_to_smem %s260, 128, [#allocation5], [#allocation8]
        $region16: #{decoder_decode_steps.1} parent=11 // pred_fallthru
          _
        // Predicated region
        $region17: #{decoder_decode_steps.1} parent=11 // pred_check
          %p263 = pneg %p65
        $region18: #{decoder_decode_steps.1} parent=11 // pred_check_branch
          %265 = sbr.rel (%p263) target = $region20
        $region19: #{decoder_decode_steps.1} parent=11 // pred_region
          _
        $region20: #{decoder_decode_steps.1} parent=11 // pred_fallthru
          _
        // Predicated region
        $region21: #{decoder_decode_steps.1} parent=11 // pred_check
          %p266 = pneg %p86
        $region22: #{decoder_decode_steps.1} parent=11 // pred_check_branch
          %268 = sbr.rel (%p266) target = $region24
        $region23: #{decoder_decode_steps.1} parent=11 // pred_region
          _
        $region24: #{decoder_decode_steps.1} parent=11 // pred_fallthru
          _
        // Predicated region
        $region25: #{decoder_decode_steps.1} parent=11 // pred_check
          %p269 = pneg %p107
        $region26: #{decoder_decode_steps.1} parent=11 // pred_check_branch
          %271 = sbr.rel (%p269) target = $region28
        $region27: #{decoder_decode_steps.1} parent=11 // pred_region
          %273 = vsyncadd [#allocation6], 0
          %s274 = sshll.u32 %s4, 4
          %s275 = int_to_ptr.hbm [resolvable:$true] %s274
          %s276 = sshll.u32 [#allocation9], 4
          %s277 = int_to_ptr.vmem [resolvable:$true] %s276
          %282 = dma.hbm_to_vmem [thread:$0]  %s275, 16384, %s277, [#allocation6], 256, 256, 16
        $region28: #{decoder_decode_steps.1} parent=11 // pred_fallthru
          _
        // Predicated region
        $region29: #{decoder_decode_steps.1} parent=11 // pred_check
          %p283 = pneg %p128
        $region30: #{decoder_decode_steps.1} parent=11 // pred_check_branch
          %285 = sbr.rel (%p283) target = $region32
        $region31: #{decoder_decode_steps.1} parent=11 // pred_region
          %287 = vsyncadd [#allocation11], 0
          %s288 = sshll.u32 %s5, 4
          %s289 = int_to_ptr.hbm [resolvable:$true] %s288
          %s290 = sshll.u32 [#allocation10], 4
          %s291 = int_to_ptr.vmem [resolvable:$true] %s290
          %296 = dma.hbm_to_vmem [thread:$0]  %s289, 128, %s291, [#allocation11], 64, 64, 4
        $region32: #{decoder_decode_steps.1} parent=11 // pred_fallthru
          _
        // Predicated region
        $region33: #{decoder_decode_steps.1} parent=11 // pred_check
          %p297 = pneg %p149
        $region34: #{decoder_decode_steps.1} parent=11 // pred_check_branch
          %299 = sbr.rel (%p297) target = $region36
        $region35: #{decoder_decode_steps.1} parent=11 // pred_region
          _
        $region36: #{decoder_decode_steps.1} parent=11 // pred_fallthru
          _
        // Predicated region
        $region37: #{decoder_decode_steps.1} parent=11 // pred_check
          %p300 = pneg %p170
        $region38: #{decoder_decode_steps.1} parent=11 // pred_check_branch
          %302 = sbr.rel (%p300) target = $region40
        $region39: #{decoder_decode_steps.1} parent=11 // pred_region
          _
        $region40: #{decoder_decode_steps.1} parent=11 // pred_fallthru
          _
      $region12: #{decoder_decode_steps.1} parent=5 // pred_fallthru
        _
      %p303 = scmp.lt.s32.totalorder %s23, 6
      // Predicated region
      $region41: #{decoder_decode_steps.1} parent=5 // pred_check
        %p304 = pneg %p303
      $region42: #{decoder_decode_steps.1} parent=5 // pred_check_branch
        %306 = sbr.rel (%p304) target = $region44
      $region43: #{decoder_decode_steps.1} parent=5 // pred_region
        _
      $region44: #{decoder_decode_steps.1} parent=5 // pred_fallthru
        _
      %p307 = scmp.le.s32.totalorder 1, %s23
      %p308 = scmp.lt.s32.totalorder %s23, 7
      %p309 = pnand %p307, %p308
      %p310 = pneg %p309
      // Predicated region
      $region45: #{decoder_decode_steps.1} parent=5 // pred_check
        _
      $region46: #{decoder_decode_steps.1} parent=5 // pred_check_branch
        %312 = sbr.rel (%p309) target = $region48
      $region47: #{decoder_decode_steps.1} parent=5 // pred_region
        %s313 = ssub.s32 %s23, 1
        // Predicated region
        $region49: #{decoder_decode_steps.1} parent=47 // pred_check
          %p314 = pneg %p44
        $region50: #{decoder_decode_steps.1} parent=47 // pred_check_branch
          %316 = sbr.rel (%p314) target = $region52
        $region51: #{decoder_decode_steps.1} parent=47 // pred_region
          %318 = dma.done [#allocation8], 128
        $region52: #{decoder_decode_steps.1} parent=47 // pred_fallthru
          _
        // Predicated region
        $region53: #{decoder_decode_steps.1} parent=47 // pred_check
          %p319 = pneg %p107
        $region54: #{decoder_decode_steps.1} parent=47 // pred_check_branch
          %321 = sbr.rel (%p319) target = $region56
        $region55: #{decoder_decode_steps.1} parent=47 // pred_region
          %323 = dma.done [#allocation6], 16384
        $region56: #{decoder_decode_steps.1} parent=47 // pred_fallthru
          _
        // Predicated region
        $region57: #{decoder_decode_steps.1} parent=47 // pred_check
          %p324 = pneg %p128
        $region58: #{decoder_decode_steps.1} parent=47 // pred_check_branch
          %326 = sbr.rel (%p324) target = $region60
        $region59: #{decoder_decode_steps.1} parent=47 // pred_region
          %328 = dma.done [#allocation11], 128
        $region60: #{decoder_decode_steps.1} parent=47 // pred_fallthru
          _
        %329 = sfence
        %p330 = pneg %p44
        %p331 = pneg %p41
        %p332 = pneg %p65
        %p333 = pneg %p62
        %p334 = pneg %p86
        %p335 = pneg %p83
        %p336 = pneg %p107
        %p337 = pneg %p104
        %p338 = pneg %p128
        %p339 = pneg %p125
        %p340 = pneg %p149
        %p341 = pneg %p146
        %p342 = pneg %p170
        %p343 = pneg %p167
        %p344 = pneg %p196
        %p345 = pneg %p193
        %s346 = sand.u32 %s183, 1
        %s347 = scalar_lea.sflag [#allocation7], %s346
        %s348 = sand.u32 %s183, 1
        %s349 = smul.addr %s348, 8
        %s350 = scalar_lea.vmem [#allocation12], %s349
        %p351 = pneg %p217
        %p352 = pneg %p214
        %p353 = pneg %p238
        %p354 = pneg %p235
        %p355 = scmp.eq.s32.totalorder %s28, 0
        // Predicated region
        $region61: #{decoder_decode_steps.1} parent=47 // pred_check
          %p356 = pneg %p355
        $region62: #{decoder_decode_steps.1} parent=47 // pred_check_branch
          %358 = sbr.rel (%p356) target = $region64
        $region63: #{decoder_decode_steps.1} parent=47 // pred_region
          %v359 = vld [vmem:[%s1] sm:$0xff]
          %v360 = vld [vmem:[%s1 + $0x8] sm:$0xff]
          %v361 = vpack.c.bf16 %v359, %v359
          %v362 = vpack.c.bf16 %v360, %v360
          %363 = vst [vmem:[#allocation4] sm:$0xf] %v361
          %364 = vst [vmem:[#allocation4 + $0x4] sm:$0xf] %v362
          %v365 = vld [vmem:[%s2] sm:$0xff]
          %v366 = vld [vmem:[%s2 + $0x8] sm:$0xff]
          %367 = vst [vmem:[%s10] sm:$0xff] %v365
          %368 = vst [vmem:[%s10 + $0x8] sm:$0xff] %v366
          %s369 = sld [smem:[#allocation5]]
          %s370 = scalar_lea.hbm %s3, %s369
          // Predicated region
          $region65: #{decoder_decode_steps.1} parent=63 // pred_check
            _
          $region66: #{decoder_decode_steps.1} parent=63 // pred_check_branch
            %372 = sbr.rel target = $region68
          $region67: #{decoder_decode_steps.1} parent=63 // pred_region
            %373 = sst [smem:[#allocation15]] [#allocation14]
            %374 = sst [smem:[#allocation16]] [#allocation13]
          $region68: #{decoder_decode_steps.1} parent=63 // pred_fallthru
            _
          %376 = shalt.err (0)
          %s378 = sshll.u32 %s370, 4
          %s379 = int_to_ptr.hbm [resolvable:$true] %s378
          %s380 = sshll.u32 [#allocation2], 4
          %s381 = int_to_ptr.vmem [resolvable:$true] %s380
          %383 = dma.hbm_to_vmem [thread:$0]  %s379, 16, %s381, [#allocation3]
          %s384 = sld [smem:[#allocation5 + $0x1]]
          %s385 = scalar_lea.hbm %s3, %s384
          %s386 = scalar_lea.vmem [#allocation2], 1
          %s387 = scalar_lea.sflag [#allocation3], 1
          // Predicated region
          $region69: #{decoder_decode_steps.1} parent=63 // pred_check
            _
          $region70: #{decoder_decode_steps.1} parent=63 // pred_check_branch
            %389 = sbr.rel target = $region72
          $region71: #{decoder_decode_steps.1} parent=63 // pred_region
            %390 = sst [smem:[#allocation15]] [#allocation18]
            %391 = sst [smem:[#allocation16]] [#allocation17]
          $region72: #{decoder_decode_steps.1} parent=63 // pred_fallthru
            _
          %393 = shalt.err (0)
          %s395 = sshll.u32 %s385, 4
          %s396 = int_to_ptr.hbm [resolvable:$true] %s395
          %s397 = sshll.u32 %s386, 4
          %s398 = int_to_ptr.vmem [resolvable:$true] %s397
          %400 = dma.hbm_to_vmem [thread:$0]  %s396, 16, %s398, %s387
          %s401 = sld [smem:[#allocation5 + $0x2]]
          %s402 = scalar_lea.hbm %s3, %s401
          %s403 = scalar_lea.vmem [#allocation2], 2
          %s404 = scalar_lea.sflag [#allocation3], 2
          // Predicated region
          $region73: #{decoder_decode_steps.1} parent=63 // pred_check
            _
          $region74: #{decoder_decode_steps.1} parent=63 // pred_check_branch
            %406 = sbr.rel target = $region76
          $region75: #{decoder_decode_steps.1} parent=63 // pred_region
            %407 = sst [smem:[#allocation15]] [#allocation20]
            %408 = sst [smem:[#allocation16]] [#allocation19]
          $region76: #{decoder_decode_steps.1} parent=63 // pred_fallthru
            _
          %410 = shalt.err (0)
          %s412 = sshll.u32 %s402, 4
          %s413 = int_to_ptr.hbm [resolvable:$true] %s412
          %s414 = sshll.u32 %s403, 4
          %s415 = int_to_ptr.vmem [resolvable:$true] %s414
          %417 = dma.hbm_to_vmem [thread:$0]  %s413, 16, %s415, %s404
          %s418 = sld [smem:[#allocation5 + $0x3]]
          %s419 = scalar_lea.hbm %s3, %s418
          %s420 = scalar_lea.vmem [#allocation2], 3
          %s421 = scalar_lea.sflag [#allocation3], 3
          // Predicated region
          $region77: #{decoder_decode_steps.1} parent=63 // pred_check
            _
          $region78: #{decoder_decode_steps.1} parent=63 // pred_check_branch
            %423 = sbr.rel target = $region80
          $region79: #{decoder_decode_steps.1} parent=63 // pred_region
            %424 = sst [smem:[#allocation15]] [#allocation22]
            %425 = sst [smem:[#allocation16]] [#allocation21]
          $region80: #{decoder_decode_steps.1} parent=63 // pred_fallthru
            _
          %427 = shalt.err (0)
          %s429 = sshll.u32 %s419, 4
          %s430 = int_to_ptr.hbm [resolvable:$true] %s429
          %s431 = sshll.u32 %s420, 4
          %s432 = int_to_ptr.vmem [resolvable:$true] %s431
          %434 = dma.hbm_to_vmem [thread:$0]  %s430, 16, %s432, %s421
          %s435 = sld [smem:[#allocation5 + $0x4]]
          %s436 = scalar_lea.hbm %s3, %s435
          %s437 = scalar_lea.vmem [#allocation2], 4
          %s438 = scalar_lea.sflag [#allocation3], 4
          // Predicated region
          $region81: #{decoder_decode_steps.1} parent=63 // pred_check
            _
          $region82: #{decoder_decode_steps.1} parent=63 // pred_check_branch
            %440 = sbr.rel target = $region84
          $region83: #{decoder_decode_steps.1} parent=63 // pred_region
            %441 = sst [smem:[#allocation15]] [#allocation24]
            %442 = sst [smem:[#allocation16]] [#allocation23]
          $region84: #{decoder_decode_steps.1} parent=63 // pred_fallthru
            _
          %444 = shalt.err (0)
          %s446 = sshll.u32 %s436, 4
          %s447 = int_to_ptr.hbm [resolvable:$true] %s446
          %s448 = sshll.u32 %s437, 4
          %s449 = int_to_ptr.vmem [resolvable:$true] %s448
          %451 = dma.hbm_to_vmem [thread:$0]  %s447, 16, %s449, %s438
          %s452 = sld [smem:[#allocation5 + $0x5]]
          %s453 = scalar_lea.hbm %s3, %s452
          %s454 = scalar_lea.vmem [#allocation2], 5
          %s455 = scalar_lea.sflag [#allocation3], 5
          // Predicated region
          $region85: #{decoder_decode_steps.1} parent=63 // pred_check
            _
          $region86: #{decoder_decode_steps.1} parent=63 // pred_check_branch
            %457 = sbr.rel target = $region88
          $region87: #{decoder_decode_steps.1} parent=63 // pred_region
            %458 = sst [smem:[#allocation15]] [#allocation26]
            %459 = sst [smem:[#allocation16]] [#allocation25]
          $region88: #{decoder_decode_steps.1} parent=63 // pred_fallthru
            _
          %461 = shalt.err (0)
          %s463 = sshll.u32 %s453, 4
          %s464 = int_to_ptr.hbm [resolvable:$true] %s463
          %s465 = sshll.u32 %s454, 4
          %s466 = int_to_ptr.vmem [resolvable:$true] %s465
          %468 = dma.hbm_to_vmem [thread:$0]  %s464, 16, %s466, %s455
          %s469 = sld [smem:[#allocation5 + $0x6]]
          %s470 = scalar_lea.hbm %s3, %s469
          %s471 = scalar_lea.vmem [#allocation2], 6
          %s472 = scalar_lea.sflag [#allocation3], 6
          // Predicated region
          $region89: #{decoder_decode_steps.1} parent=63 // pred_check
            _
          $region90: #{decoder_decode_steps.1} parent=63 // pred_check_branch
            %474 = sbr.rel target = $region92
          $region91: #{decoder_decode_steps.1} parent=63 // pred_region
            %475 = sst [smem:[#allocation15]] [#allocation28]
            %476 = sst [smem:[#allocation16]] [#allocation27]
          $region92: #{decoder_decode_steps.1} parent=63 // pred_fallthru
            _
          %478 = shalt.err (0)
          %s480 = sshll.u32 %s470, 4
          %s481 = int_to_ptr.hbm [resolvable:$true] %s480
          %s482 = sshll.u32 %s471, 4
          %s483 = int_to_ptr.vmem [resolvable:$true] %s482
          %485 = dma.hbm_to_vmem [thread:$0]  %s481, 16, %s483, %s472
          %s486 = sld [smem:[#allocation5 + $0x7]]
          %s487 = scalar_lea.hbm %s3, %s486
          %s488 = scalar_lea.vmem [#allocation2], 7
          %s489 = scalar_lea.sflag [#allocation3], 7
          // Predicated region
          $region93: #{decoder_decode_steps.1} parent=63 // pred_check
            _
          $region94: #{decoder_decode_steps.1} parent=63 // pred_check_branch
            %491 = sbr.rel target = $region96
          $region95: #{decoder_decode_steps.1} parent=63 // pred_region
            %492 = sst [smem:[#allocation15]] [#allocation30]
            %493 = sst [smem:[#allocation16]] [#allocation29]
          $region96: #{decoder_decode_steps.1} parent=63 // pred_fallthru
            _
          %495 = shalt.err (0)
          %s497 = sshll.u32 %s487, 4
          %s498 = int_to_ptr.hbm [resolvable:$true] %s497
          %s499 = sshll.u32 %s488, 4
          %s500 = int_to_ptr.vmem [resolvable:$true] %s499
          %502 = dma.hbm_to_vmem [thread:$0]  %s498, 16, %s500, %s489
        $region64: #{decoder_decode_steps.1} parent=47 // pred_fallthru
          _
        %p503 = scmp.lt.s32.totalorder %s28, 0
        %s504 = ssub.s32 0, %s28
        %s505 = scalar_select %p503, %s504, %s28
        %s506 = sand.u32 %s505, 1
        %s507 = ssub.s32 0, %s506
        %s508 = scalar_select %p503, %s507, %s506
        %p509 = scmp.ne.s32.totalorder %s508, 0
        %p510 = scmp.lt.s32.totalorder %s508, 0
        %p511 = pnand %p510, %p509
        %p512 = pneg %p511
        %s513 = sadd.s32 %s508, 2
        %s514 = scalar_select %p512, %s513, %s508
        %s515 = sadd.s32 %s28, 1
        %p516 = scmp.lt.s32.totalorder %s515, 6
        // Predicated region
        $region97: #{decoder_decode_steps.1} parent=47 // pred_check
          %p517 = pneg %p516
        $region98: #{decoder_decode_steps.1} parent=47 // pred_check_branch
          %519 = sbr.rel (%p517) target = $region100
        $region99: #{decoder_decode_steps.1} parent=47 // pred_region
          %s520 = ssub.s32 1, %s514
          %s521 = smul.u32 %s515, 128
          %s522 = sld [smem:[#allocation5 + %s521]]
          %s523 = scalar_lea.hbm %s3, %s522
          %s524 = smul.u32 %s520, 8
          %s525 = scalar_lea.vmem [#allocation2], %s524
          %s526 = scalar_lea.sflag [#allocation3], %s524
          // Predicated region
          $region101: #{decoder_decode_steps.1} parent=99 // pred_check
            _
          $region102: #{decoder_decode_steps.1} parent=99 // pred_check_branch
            %528 = sbr.rel target = $region104
          $region103: #{decoder_decode_steps.1} parent=99 // pred_region
            %529 = sst [smem:[#allocation15]] [#allocation32]
            %530 = sst [smem:[#allocation16]] [#allocation31]
          $region104: #{decoder_decode_steps.1} parent=99 // pred_fallthru
            _
          %532 = shalt.err (0)
          %s534 = sshll.u32 %s523, 4
          %s535 = int_to_ptr.hbm [resolvable:$true] %s534
          %s536 = sshll.u32 %s525, 4
          %s537 = int_to_ptr.vmem [resolvable:$true] %s536
          %539 = dma.hbm_to_vmem [thread:$0]  %s535, 16, %s537, %s526
          %s540 = sadd.s32 %s521, 1
          %s541 = sld [smem:[#allocation5 + %s540]]
          %s542 = scalar_lea.hbm %s3, %s541
          %s543 = sadd.s32 1, %s524
          %s544 = scalar_lea.vmem [#allocation2], %s543
          %s545 = scalar_lea.sflag [#allocation3], %s543
          // Predicated region
          $region105: #{decoder_decode_steps.1} parent=99 // pred_check
            _
          $region106: #{decoder_decode_steps.1} parent=99 // pred_check_branch
            %547 = sbr.rel target = $region108
          $region107: #{decoder_decode_steps.1} parent=99 // pred_region
            %548 = sst [smem:[#allocation15]] [#allocation34]
            %549 = sst [smem:[#allocation16]] [#allocation33]
          $region108: #{decoder_decode_steps.1} parent=99 // pred_fallthru
            _
          %551 = shalt.err (0)
          %s553 = sshll.u32 %s542, 4
          %s554 = int_to_ptr.hbm [resolvable:$true] %s553
          %s555 = sshll.u32 %s544, 4
          %s556 = int_to_ptr.vmem [resolvable:$true] %s555
          %558 = dma.hbm_to_vmem [thread:$0]  %s554, 16, %s556, %s545
          %s559 = sadd.s32 %s521, 2
          %s560 = sld [smem:[#allocation5 + %s559]]
          %s561 = scalar_lea.hbm %s3, %s560
          %s562 = sadd.s32 2, %s524
          %s563 = scalar_lea.vmem [#allocation2], %s562
          %s564 = scalar_lea.sflag [#allocation3], %s562
          // Predicated region
          $region109: #{decoder_decode_steps.1} parent=99 // pred_check
            _
          $region110: #{decoder_decode_steps.1} parent=99 // pred_check_branch
            %566 = sbr.rel target = $region112
          $region111: #{decoder_decode_steps.1} parent=99 // pred_region
            %567 = sst [smem:[#allocation15]] [#allocation36]
            %568 = sst [smem:[#allocation16]] [#allocation35]
          $region112: #{decoder_decode_steps.1} parent=99 // pred_fallthru
            _
          %570 = shalt.err (0)
          %s572 = sshll.u32 %s561, 4
          %s573 = int_to_ptr.hbm [resolvable:$true] %s572
          %s574 = sshll.u32 %s563, 4
          %s575 = int_to_ptr.vmem [resolvable:$true] %s574
          %577 = dma.hbm_to_vmem [thread:$0]  %s573, 16, %s575, %s564
          %s578 = sadd.s32 %s521, 3
          %s579 = sld [smem:[#allocation5 + %s578]]
          %s580 = scalar_lea.hbm %s3, %s579
          %s581 = sadd.s32 3, %s524
          %s582 = scalar_lea.vmem [#allocation2], %s581
          %s583 = scalar_lea.sflag [#allocation3], %s581
          // Predicated region
          $region113: #{decoder_decode_steps.1} parent=99 // pred_check
            _
          $region114: #{decoder_decode_steps.1} parent=99 // pred_check_branch
            %585 = sbr.rel target = $region116
          $region115: #{decoder_decode_steps.1} parent=99 // pred_region
            %586 = sst [smem:[#allocation15]] [#allocation38]
            %587 = sst [smem:[#allocation16]] [#allocation37]
          $region116: #{decoder_decode_steps.1} parent=99 // pred_fallthru
            _
          %589 = shalt.err (0)
          %s591 = sshll.u32 %s580, 4
          %s592 = int_to_ptr.hbm [resolvable:$true] %s591
          %s593 = sshll.u32 %s582, 4
          %s594 = int_to_ptr.vmem [resolvable:$true] %s593
          %596 = dma.hbm_to_vmem [thread:$0]  %s592, 16, %s594, %s583
          %s597 = sadd.s32 %s521, 4
          %s598 = sld [smem:[#allocation5 + %s597]]
          %s599 = scalar_lea.hbm %s3, %s598
          %s600 = sadd.s32 4, %s524
          %s601 = scalar_lea.vmem [#allocation2], %s600
          %s602 = scalar_lea.sflag [#allocation3], %s600
          // Predicated region
          $region117: #{decoder_decode_steps.1} parent=99 // pred_check
            _
          $region118: #{decoder_decode_steps.1} parent=99 // pred_check_branch
            %604 = sbr.rel target = $region120
          $region119: #{decoder_decode_steps.1} parent=99 // pred_region
            %605 = sst [smem:[#allocation15]] [#allocation40]
            %606 = sst [smem:[#allocation16]] [#allocation39]
          $region120: #{decoder_decode_steps.1} parent=99 // pred_fallthru
            _
          %608 = shalt.err (0)
          %s610 = sshll.u32 %s599, 4
          %s611 = int_to_ptr.hbm [resolvable:$true] %s610
          %s612 = sshll.u32 %s601, 4
          %s613 = int_to_ptr.vmem [resolvable:$true] %s612
          %615 = dma.hbm_to_vmem [thread:$0]  %s611, 16, %s613, %s602
          %s616 = sadd.s32 %s521, 5
          %s617 = sld [smem:[#allocation5 + %s616]]
          %s618 = scalar_lea.hbm %s3, %s617
          %s619 = sadd.s32 5, %s524
          %s620 = scalar_lea.vmem [#allocation2], %s619
          %s621 = scalar_lea.sflag [#allocation3], %s619
          // Predicated region
          $region121: #{decoder_decode_steps.1} parent=99 // pred_check
            _
          $region122: #{decoder_decode_steps.1} parent=99 // pred_check_branch
            %623 = sbr.rel target = $region124
          $region123: #{decoder_decode_steps.1} parent=99 // pred_region
            %624 = sst [smem:[#allocation15]] [#allocation42]
            %625 = sst [smem:[#allocation16]] [#allocation41]
          $region124: #{decoder_decode_steps.1} parent=99 // pred_fallthru
            _
          %627 = shalt.err (0)
          %s629 = sshll.u32 %s618, 4
          %s630 = int_to_ptr.hbm [resolvable:$true] %s629
          %s631 = sshll.u32 %s620, 4
          %s632 = int_to_ptr.vmem [resolvable:$true] %s631
          %634 = dma.hbm_to_vmem [thread:$0]  %s630, 16, %s632, %s621
          %s635 = sadd.s32 %s521, 6
          %s636 = sld [smem:[#allocation5 + %s635]]
          %s637 = scalar_lea.hbm %s3, %s636
          %s638 = sadd.s32 6, %s524
          %s639 = scalar_lea.vmem [#allocation2], %s638
          %s640 = scalar_lea.sflag [#allocation3], %s638
          // Predicated region
          $region125: #{decoder_decode_steps.1} parent=99 // pred_check
            _
          $region126: #{decoder_decode_steps.1} parent=99 // pred_check_branch
            %642 = sbr.rel target = $region128
          $region127: #{decoder_decode_steps.1} parent=99 // pred_region
            %643 = sst [smem:[#allocation15]] [#allocation44]
            %644 = sst [smem:[#allocation16]] [#allocation43]
          $region128: #{decoder_decode_steps.1} parent=99 // pred_fallthru
            _
          %646 = shalt.err (0)
          %s648 = sshll.u32 %s637, 4
          %s649 = int_to_ptr.hbm [resolvable:$true] %s648
          %s650 = sshll.u32 %s639, 4
          %s651 = int_to_ptr.vmem [resolvable:$true] %s650
          %653 = dma.hbm_to_vmem [thread:$0]  %s649, 16, %s651, %s640
          %s654 = sadd.s32 %s521, 7
          %s655 = sld [smem:[#allocation5 + %s654]]
          %s656 = scalar_lea.hbm %s3, %s655
          %s657 = sadd.s32 7, %s524
          %s658 = scalar_lea.vmem [#allocation2], %s657
          %s659 = scalar_lea.sflag [#allocation3], %s657
          // Predicated region
          $region129: #{decoder_decode_steps.1} parent=99 // pred_check
            _
          $region130: #{decoder_decode_steps.1} parent=99 // pred_check_branch
            %661 = sbr.rel target = $region132
          $region131: #{decoder_decode_steps.1} parent=99 // pred_region
            %662 = sst [smem:[#allocation15]] [#allocation46]
            %663 = sst [smem:[#allocation16]] [#allocation45]
          $region132: #{decoder_decode_steps.1} parent=99 // pred_fallthru
            _
          %665 = shalt.err (0)
          %s667 = sshll.u32 %s656, 4
          %s668 = int_to_ptr.hbm [resolvable:$true] %s667
          %s669 = sshll.u32 %s658, 4
          %s670 = int_to_ptr.vmem [resolvable:$true] %s669
          %672 = dma.hbm_to_vmem [thread:$0]  %s668, 16, %s670, %s659
        $region100: #{decoder_decode_steps.1} parent=47 // pred_fallthru
          _
        %s673 = smul.u32 %s514, 8
        %s674 = scalar_lea.sflag [#allocation3], %s673
        %s675 = smul.u32 1, 1
        %s676 = sshll.u32 %s675, 4
        %677 = dma.done %s674, %s676
        %s678 = sadd.s32 1, %s673
        %s679 = scalar_lea.sflag [#allocation3], %s678
        %s680 = sshll.u32 %s675, 4
        %681 = dma.done %s679, %s680
        %s682 = sadd.s32 2, %s673
        %s683 = scalar_lea.sflag [#allocation3], %s682
        %s684 = sshll.u32 %s675, 4
        %685 = dma.done %s683, %s684
        %s686 = sadd.s32 3, %s673
        %s687 = scalar_lea.sflag [#allocation3], %s686
        %s688 = sshll.u32 %s675, 4
        %689 = dma.done %s687, %s688
        %s690 = sadd.s32 4, %s673
        %s691 = scalar_lea.sflag [#allocation3], %s690
        %s692 = sshll.u32 %s675, 4
        %693 = dma.done %s691, %s692
        %s694 = sadd.s32 5, %s673
        %s695 = scalar_lea.sflag [#allocation3], %s694
        %s696 = sshll.u32 %s675, 4
        %697 = dma.done %s695, %s696
        %s698 = sadd.s32 6, %s673
        %s699 = scalar_lea.sflag [#allocation3], %s698
        %s700 = sshll.u32 %s675, 4
        %701 = dma.done %s699, %s700
        %s702 = sadd.s32 7, %s673
        %s703 = scalar_lea.sflag [#allocation3], %s702
        %s704 = sshll.u32 %s675, 4
        %705 = dma.done %s703, %s704
        %s706 = scalar_lea.vmem [#allocation2], %s673
        %v707 = vld [vmem:[%s706] sm:$0xff]
        %v708 = vpack.c.bf16 %v707, %v707
        %v709 = vld [vmem:[#allocation4] sm:$0xf]
        %v710 = vld [vmem:[%s10] sm:$0xff]
        %v711 = vld [vmem:[#allocation9] sm:$0xff]
        %v712 = vld [vmem:[#allocation9 + $0x8] sm:$0xff]
        %v713 = vld [vmem:[#allocation9 + $0x10] sm:$0xff]
        %v714 = vld [vmem:[#allocation9 + $0x18] sm:$0xff]
        %v715 = vld [vmem:[#allocation9 + $0x20] sm:$0xff]
        %v716 = vld [vmem:[#allocation9 + $0x28] sm:$0xff]
        %v717 = vld [vmem:[#allocation9 + $0x30] sm:$0xff]
        %v718 = vld [vmem:[#allocation9 + $0x38] sm:$0xff]
        %v719 = vld [vmem:[#allocation9 + $0x40] sm:$0xff]
        %v720 = vld [vmem:[#allocation9 + $0x48] sm:$0xff]
        %v721 = vld [vmem:[#allocation9 + $0x50] sm:$0xff]
        %v722 = vld [vmem:[#allocation9 + $0x58] sm:$0xff]
        %v723 = vld [vmem:[#allocation9 + $0x60] sm:$0xff]
        %v724 = vld [vmem:[#allocation9 + $0x68] sm:$0xff]
        %v725 = vld [vmem:[#allocation9 + $0x70] sm:$0xff]
        %v726 = vld [vmem:[#allocation9 + $0x78] sm:$0xff]
        %v727 = vld [vmem:[#allocation9 + $0x80] sm:$0xff]
        %v728 = vld [vmem:[#allocation9 + $0x88] sm:$0xff]
        %v729 = vld [vmem:[#allocation9 + $0x90] sm:$0xff]
        %v730 = vld [vmem:[#allocation9 + $0x98] sm:$0xff]
        %v731 = vld [vmem:[#allocation9 + $0xa0] sm:$0xff]
        %v732 = vld [vmem:[#allocation9 + $0xa8] sm:$0xff]
        %v733 = vld [vmem:[#allocation9 + $0xb0] sm:$0xff]
        %v734 = vld [vmem:[#allocation9 + $0xb8] sm:$0xff]
        %v735 = vld [vmem:[#allocation9 + $0xc0] sm:$0xff]
        %v736 = vld [vmem:[#allocation9 + $0xc8] sm:$0xff]
        %v737 = vld [vmem:[#allocation9 + $0xd0] sm:$0xff]
        %v738 = vld [vmem:[#allocation9 + $0xd8] sm:$0xff]
        %v739 = vld [vmem:[#allocation9 + $0xe0] sm:$0xff]
        %v740 = vld [vmem:[#allocation9 + $0xe8] sm:$0xff]
        %v741 = vld [vmem:[#allocation9 + $0xf0] sm:$0xff]
        %v742 = vld [vmem:[#allocation9 + $0xf8] sm:$0xff]
        %v743 = vld [vmem:[#allocation9 + $0x100] sm:$0xff]
        %v744 = vld [vmem:[#allocation9 + $0x108] sm:$0xff]
        %v745 = vld [vmem:[#allocation9 + $0x110] sm:$0xff]
        %v746 = vld [vmem:[#allocation9 + $0x118] sm:$0xff]
        %v747 = vld [vmem:[#allocation9 + $0x120] sm:$0xff]
        %v748 = vld [vmem:[#allocation9 + $0x128] sm:$0xff]
        %v749 = vld [vmem:[#allocation9 + $0x130] sm:$0xff]
        %v750 = vld [vmem:[#allocation9 + $0x138] sm:$0xff]
        %v751 = vld [vmem:[#allocation9 + $0x140] sm:$0xff]
        %v752 = vld [vmem:[#allocation9 + $0x148] sm:$0xff]
        %v753 = vld [vmem:[#allocation9 + $0x150] sm:$0xff]
        %v754 = vld [vmem:[#allocation9 + $0x158] sm:$0xff]
        %v755 = vld [vmem:[#allocation9 + $0x160] sm:$0xff]
        %v756 = vld [vmem:[#allocation9 + $0x168] sm:$0xff]
        %v757 = vld [vmem:[#allocation9 + $0x170] sm:$0xff]
        %v758 = vld [vmem:[#allocation9 + $0x178] sm:$0xff]
        %v759 = vld [vmem:[#allocation9 + $0x180] sm:$0xff]
        %v760 = vld [vmem:[#allocation9 + $0x188] sm:$0xff]
        %v761 = vld [vmem:[#allocation9 + $0x190] sm:$0xff]
        %v762 = vld [vmem:[#allocation9 + $0x198] sm:$0xff]
        %v763 = vld [vmem:[#allocation9 + $0x1a0] sm:$0xff]
        %v764 = vld [vmem:[#allocation9 + $0x1a8] sm:$0xff]
        %v765 = vld [vmem:[#allocation9 + $0x1b0] sm:$0xff]
        %v766 = vld [vmem:[#allocation9 + $0x1b8] sm:$0xff]
        %v767 = vld [vmem:[#allocation9 + $0x1c0] sm:$0xff]
        %v768 = vld [vmem:[#allocation9 + $0x1c8] sm:$0xff]
        %v769 = vld [vmem:[#allocation9 + $0x1d0] sm:$0xff]
        %v770 = vld [vmem:[#allocation9 + $0x1d8] sm:$0xff]
        %v771 = vld [vmem:[#allocation9 + $0x1e0] sm:$0xff]
        %v772 = vld [vmem:[#allocation9 + $0x1e8] sm:$0xff]
        %v773 = vld [vmem:[#allocation9 + $0x1f0] sm:$0xff]
        %v774 = vld [vmem:[#allocation9 + $0x1f8] sm:$0xff]
        %v775 = vld [vmem:[#allocation10] sm:$0xf]
        %v777 = vperm.slane %v775, 0
        %v778 = vperm.slane %v775, 1
        %v779 = vperm.slane %v775, 2
        %v780 = vperm.slane %v775, 3
        %v849 = vunpack.c.l.b16 %v711
        %v850 = vunpack.c.h.b16 %v711
        %v851 = vunpack.c.l.b16 %v712
        %v852 = vunpack.c.h.b16 %v712
        %v853 = vunpack.c.l.b16 %v713
        %v854 = vunpack.c.h.b16 %v713
        %v855 = vunpack.c.l.b16 %v714
        %v856 = vunpack.c.h.b16 %v714
        %v857 = vunpack.c.l.b16 %v715
        %v858 = vunpack.c.h.b16 %v715
        %v859 = vunpack.c.l.b16 %v716
        %v860 = vunpack.c.h.b16 %v716
        %v861 = vunpack.c.l.b16 %v717
        %v862 = vunpack.c.h.b16 %v717
        %v863 = vunpack.c.l.b16 %v718
        %v864 = vunpack.c.h.b16 %v718
        %v865 = vunpack.c.l.b16 %v719
        %v866 = vunpack.c.h.b16 %v719
        %v867 = vunpack.c.l.b16 %v720
        %v868 = vunpack.c.h.b16 %v720
        %v869 = vunpack.c.l.b16 %v721
        %v870 = vunpack.c.h.b16 %v721
        %v871 = vunpack.c.l.b16 %v722
        %v872 = vunpack.c.h.b16 %v722
        %v873 = vunpack.c.l.b16 %v723
        %v874 = vunpack.c.h.b16 %v723
        %v875 = vunpack.c.l.b16 %v724
        %v876 = vunpack.c.h.b16 %v724
        %v877 = vunpack.c.l.b16 %v725
        %v878 = vunpack.c.h.b16 %v725
        %v879 = vunpack.c.l.b16 %v726
        %v880 = vunpack.c.h.b16 %v726
        %v881 = vunpack.c.l.b16 %v727
        %v882 = vunpack.c.h.b16 %v727
        %v883 = vunpack.c.l.b16 %v728
        %v884 = vunpack.c.h.b16 %v728
        %v885 = vunpack.c.l.b16 %v729
        %v886 = vunpack.c.h.b16 %v729
        %v887 = vunpack.c.l.b16 %v730
        %v888 = vunpack.c.h.b16 %v730
        %v889 = vunpack.c.l.b16 %v731
        %v890 = vunpack.c.h.b16 %v731
        %v891 = vunpack.c.l.b16 %v732
        %v892 = vunpack.c.h.b16 %v732
        %v893 = vunpack.c.l.b16 %v733
        %v894 = vunpack.c.h.b16 %v733
        %v895 = vunpack.c.l.b16 %v734
        %v896 = vunpack.c.h.b16 %v734
        %v897 = vunpack.c.l.b16 %v735
        %v898 = vunpack.c.h.b16 %v735
        %v899 = vunpack.c.l.b16 %v736
        %v900 = vunpack.c.h.b16 %v736
        %v901 = vunpack.c.l.b16 %v737
        %v902 = vunpack.c.h.b16 %v737
        %v903 = vunpack.c.l.b16 %v738
        %v904 = vunpack.c.h.b16 %v738
        %v905 = vunpack.c.l.b16 %v739
        %v906 = vunpack.c.h.b16 %v739
        %v907 = vunpack.c.l.b16 %v740
        %v908 = vunpack.c.h.b16 %v740
        %v909 = vunpack.c.l.b16 %v741
        %v910 = vunpack.c.h.b16 %v741
        %v911 = vunpack.c.l.b16 %v742
        %v912 = vunpack.c.h.b16 %v742
        %v913 = vunpack.c.l.b16 %v743
        %v914 = vunpack.c.h.b16 %v743
        %v915 = vunpack.c.l.b16 %v744
        %v916 = vunpack.c.h.b16 %v744
        %v917 = vunpack.c.l.b16 %v745
        %v918 = vunpack.c.h.b16 %v745
        %v919 = vunpack.c.l.b16 %v746
        %v920 = vunpack.c.h.b16 %v746
        %v921 = vunpack.c.l.b16 %v747
        %v922 = vunpack.c.h.b16 %v747
        %v923 = vunpack.c.l.b16 %v748
        %v924 = vunpack.c.h.b16 %v748
        %v925 = vunpack.c.l.b16 %v749
        %v926 = vunpack.c.h.b16 %v749
        %v927 = vunpack.c.l.b16 %v750
        %v928 = vunpack.c.h.b16 %v750
        %v929 = vunpack.c.l.b16 %v751
        %v930 = vunpack.c.h.b16 %v751
        %v931 = vunpack.c.l.b16 %v752
        %v932 = vunpack.c.h.b16 %v752
        %v933 = vunpack.c.l.b16 %v753
        %v934 = vunpack.c.h.b16 %v753
        %v935 = vunpack.c.l.b16 %v754
        %v936 = vunpack.c.h.b16 %v754
        %v937 = vunpack.c.l.b16 %v755
        %v938 = vunpack.c.h.b16 %v755
        %v939 = vunpack.c.l.b16 %v756
        %v940 = vunpack.c.h.b16 %v756
        %v941 = vunpack.c.l.b16 %v757
        %v942 = vunpack.c.h.b16 %v757
        %v943 = vunpack.c.l.b16 %v758
        %v944 = vunpack.c.h.b16 %v758
        %v945 = vunpack.c.l.b16 %v759
        %v946 = vunpack.c.h.b16 %v759
        %v947 = vunpack.c.l.b16 %v760
        %v948 = vunpack.c.h.b16 %v760
        %v949 = vunpack.c.l.b16 %v761
        %v950 = vunpack.c.h.b16 %v761
        %v951 = vunpack.c.l.b16 %v762
        %v952 = vunpack.c.h.b16 %v762
        %v953 = vunpack.c.l.b16 %v763
        %v954 = vunpack.c.h.b16 %v763
        %v955 = vunpack.c.l.b16 %v764
        %v956 = vunpack.c.h.b16 %v764
        %v957 = vunpack.c.l.b16 %v765
        %v958 = vunpack.c.h.b16 %v765
        %v959 = vunpack.c.l.b16 %v766
        %v960 = vunpack.c.h.b16 %v766
        %v961 = vunpack.c.l.b16 %v767
        %v962 = vunpack.c.h.b16 %v767
        %v963 = vunpack.c.l.b16 %v768
        %v964 = vunpack.c.h.b16 %v768
        %v965 = vunpack.c.l.b16 %v769
        %v966 = vunpack.c.h.b16 %v769
        %v967 = vunpack.c.l.b16 %v770
        %v968 = vunpack.c.h.b16 %v770
        %v969 = vunpack.c.l.b16 %v771
        %v970 = vunpack.c.h.b16 %v771
        %v971 = vunpack.c.l.b16 %v772
        %v972 = vunpack.c.h.b16 %v772
        %v973 = vunpack.c.l.b16 %v773
        %v974 = vunpack.c.h.b16 %v773
        %v975 = vunpack.c.l.b16 %v774
        %v976 = vunpack.c.h.b16 %v774
        %v977 = vpack.c.b16 %v853, %v849
        %v978 = vpack.c.b16 %v854, %v850
        %v979 = vpack.c.b16 %v855, %v851
        %v980 = vpack.c.b16 %v856, %v852
        %v981 = vpack.c.b16 %v861, %v857
        %v982 = vpack.c.b16 %v862, %v858
        %v983 = vpack.c.b16 %v863, %v859
        %v984 = vpack.c.b16 %v864, %v860
        %v985 = vpack.c.b16 %v869, %v865
        %v986 = vpack.c.b16 %v870, %v866
        %v987 = vpack.c.b16 %v871, %v867
        %v988 = vpack.c.b16 %v872, %v868
        %v989 = vpack.c.b16 %v877, %v873
        %v990 = vpack.c.b16 %v878, %v874
        %v991 = vpack.c.b16 %v879, %v875
        %v992 = vpack.c.b16 %v880, %v876
        %v993 = vpack.c.b16 %v885, %v881
        %v994 = vpack.c.b16 %v886, %v882
        %v995 = vpack.c.b16 %v887, %v883
        %v996 = vpack.c.b16 %v888, %v884
        %v997 = vpack.c.b16 %v893, %v889
        %v998 = vpack.c.b16 %v894, %v890
        %v999 = vpack.c.b16 %v895, %v891
        %v1000 = vpack.c.b16 %v896, %v892
        %v1001 = vpack.c.b16 %v901, %v897
        %v1002 = vpack.c.b16 %v902, %v898
        %v1003 = vpack.c.b16 %v903, %v899
        %v1004 = vpack.c.b16 %v904, %v900
        %v1005 = vpack.c.b16 %v909, %v905
        %v1006 = vpack.c.b16 %v910, %v906
        %v1007 = vpack.c.b16 %v911, %v907
        %v1008 = vpack.c.b16 %v912, %v908
        %v1009 = vpack.c.b16 %v917, %v913
        %v1010 = vpack.c.b16 %v918, %v914
        %v1011 = vpack.c.b16 %v919, %v915
        %v1012 = vpack.c.b16 %v920, %v916
        %v1013 = vpack.c.b16 %v925, %v921
        %v1014 = vpack.c.b16 %v926, %v922
        %v1015 = vpack.c.b16 %v927, %v923
        %v1016 = vpack.c.b16 %v928, %v924
        %v1017 = vpack.c.b16 %v933, %v929
        %v1018 = vpack.c.b16 %v934, %v930
        %v1019 = vpack.c.b16 %v935, %v931
        %v1020 = vpack.c.b16 %v936, %v932
        %v1021 = vpack.c.b16 %v941, %v937
        %v1022 = vpack.c.b16 %v942, %v938
        %v1023 = vpack.c.b16 %v943, %v939
        %v1024 = vpack.c.b16 %v944, %v940
        %v1025 = vpack.c.b16 %v949, %v945
        %v1026 = vpack.c.b16 %v950, %v946
        %v1027 = vpack.c.b16 %v951, %v947
        %v1028 = vpack.c.b16 %v952, %v948
        %v1029 = vpack.c.b16 %v957, %v953
        %v1030 = vpack.c.b16 %v958, %v954
        %v1031 = vpack.c.b16 %v959, %v955
        %v1032 = vpack.c.b16 %v960, %v956
        %v1033 = vpack.c.b16 %v965, %v961
        %v1034 = vpack.c.b16 %v966, %v962
        %v1035 = vpack.c.b16 %v967, %v963
        %v1036 = vpack.c.b16 %v968, %v964
        %v1037 = vpack.c.b16 %v973, %v969
        %v1038 = vpack.c.b16 %v974, %v970
        %v1039 = vpack.c.b16 %v975, %v971
        %v1040 = vpack.c.b16 %v976, %v972
        %1105 = vmatpush.bf16.msra.mxu0 %v1005
        %1106 = vmatpush.bf16.msra.mxu0 %v1001
        %1107 = vmatpush.bf16.msra.mxu0 %v997
        %1108 = vmatpush.bf16.msra.mxu0 %v993
        %1109 = vmatpush.bf16.msra.mxu0 %v989
        %1110 = vmatpush.bf16.msra.mxu0 %v985
        %1111 = vmatpush.bf16.msra.mxu0 %v981
        %1112 = vmatpush.bf16.msra.mxu0 %v977
        %1113 = vmatmul.bf16.gmra.mxu0 %v708
        %v1114 = vpop.f32.mrf.mxu0
        %v1115 = vadd.f32 %v777, %v1114
        %v1116 = vpop.f32.mrf.mxu0
        %1117 = vdwg.mxu0
        %1118 = vmatpush.bf16.msra.mxu0 %v1037
        %1119 = vmatpush.bf16.msra.mxu0 %v1033
        %1120 = vmatpush.bf16.msra.mxu0 %v1029
        %1121 = vmatpush.bf16.msra.mxu0 %v1025
        %1122 = vmatpush.bf16.msra.mxu0 %v1021
        %1123 = vmatpush.bf16.msra.mxu0 %v1017
        %1124 = vmatpush.bf16.msra.mxu0 %v1013
        %1125 = vmatpush.bf16.msra.mxu0 %v1009
        %1126 = vmatmul.bf16.gmra.mxu0 %v709
        %v1127 = vpop.f32.mrf.mxu0
        %v1128 = vadd.f32 %v1115, %v1127
        %v1129 = vpop.f32.mrf.mxu0
        %1130 = vdwg.mxu0
        %1131 = vmatpush.bf16.msra.mxu0 %v1006
        %1132 = vmatpush.bf16.msra.mxu0 %v1002
        %1133 = vmatpush.bf16.msra.mxu0 %v998
        %1134 = vmatpush.bf16.msra.mxu0 %v994
        %1135 = vmatpush.bf16.msra.mxu0 %v990
        %1136 = vmatpush.bf16.msra.mxu0 %v986
        %1137 = vmatpush.bf16.msra.mxu0 %v982
        %1138 = vmatpush.bf16.msra.mxu0 %v978
        %1139 = vmatmul.bf16.gmra.mxu0 %v708
        %v1140 = vpop.f32.mrf.mxu0
        %v1141 = vadd.f32 %v778, %v1140
        %v1142 = vpop.f32.mrf.mxu0
        %1143 = vdwg.mxu0
        %1144 = vmatpush.bf16.msra.mxu0 %v1038
        %1145 = vmatpush.bf16.msra.mxu0 %v1034
        %1146 = vmatpush.bf16.msra.mxu0 %v1030
        %1147 = vmatpush.bf16.msra.mxu0 %v1026
        %1148 = vmatpush.bf16.msra.mxu0 %v1022
        %1149 = vmatpush.bf16.msra.mxu0 %v1018
        %1150 = vmatpush.bf16.msra.mxu0 %v1014
        %1151 = vmatpush.bf16.msra.mxu0 %v1010
        %1152 = vmatmul.bf16.gmra.mxu0 %v709
        %v1153 = vpop.f32.mrf.mxu0
        %v1154 = vadd.f32 %v1141, %v1153
        %v1155 = vpop.f32.mrf.mxu0
        %1156 = vdwg.mxu0
        %1157 = vmatpush.bf16.msra.mxu0 %v1007
        %1158 = vmatpush.bf16.msra.mxu0 %v1003
        %1159 = vmatpush.bf16.msra.mxu0 %v999
        %1160 = vmatpush.bf16.msra.mxu0 %v995
        %1161 = vmatpush.bf16.msra.mxu0 %v991
        %1162 = vmatpush.bf16.msra.mxu0 %v987
        %1163 = vmatpush.bf16.msra.mxu0 %v983
        %1164 = vmatpush.bf16.msra.mxu0 %v979
        %1165 = vmatmul.bf16.gmra.mxu0 %v708
        %v1166 = vpop.f32.mrf.mxu0
        %v1167 = vadd.f32 %v779, %v1166
        %v1168 = vpop.f32.mrf.mxu0
        %1169 = vdwg.mxu0
        %1170 = vmatpush.bf16.msra.mxu0 %v1039
        %1171 = vmatpush.bf16.msra.mxu0 %v1035
        %1172 = vmatpush.bf16.msra.mxu0 %v1031
        %1173 = vmatpush.bf16.msra.mxu0 %v1027
        %1174 = vmatpush.bf16.msra.mxu0 %v1023
        %1175 = vmatpush.bf16.msra.mxu0 %v1019
        %1176 = vmatpush.bf16.msra.mxu0 %v1015
        %1177 = vmatpush.bf16.msra.mxu0 %v1011
        %1178 = vmatmul.bf16.gmra.mxu0 %v709
        %v1179 = vpop.f32.mrf.mxu0
        %v1180 = vadd.f32 %v1167, %v1179
        %v1181 = vpop.f32.mrf.mxu0
        %1182 = vdwg.mxu0
        %1183 = vmatpush.bf16.msra.mxu0 %v1008
        %1184 = vmatpush.bf16.msra.mxu0 %v1004
        %1185 = vmatpush.bf16.msra.mxu0 %v1000
        %1186 = vmatpush.bf16.msra.mxu0 %v996
        %1187 = vmatpush.bf16.msra.mxu0 %v992
        %1188 = vmatpush.bf16.msra.mxu0 %v988
        %1189 = vmatpush.bf16.msra.mxu0 %v984
        %1190 = vmatpush.bf16.msra.mxu0 %v980
        %1191 = vmatmul.bf16.gmra.mxu0 %v708
        %v1192 = vpop.f32.mrf.mxu0
        %v1193 = vadd.f32 %v780, %v1192
        %v1194 = vpop.f32.mrf.mxu0
        %1195 = vdwg.mxu0
        %1196 = vmatpush.bf16.msra.mxu0 %v1040
        %1197 = vmatpush.bf16.msra.mxu0 %v1036
        %1198 = vmatpush.bf16.msra.mxu0 %v1032
        %1199 = vmatpush.bf16.msra.mxu0 %v1028
        %1200 = vmatpush.bf16.msra.mxu0 %v1024
        %1201 = vmatpush.bf16.msra.mxu0 %v1020
        %1202 = vmatpush.bf16.msra.mxu0 %v1016
        %1203 = vmatpush.bf16.msra.mxu0 %v1012
        %1204 = vmatmul.bf16.gmra.mxu0 %v709
        %v1205 = vpop.f32.mrf.mxu0
        %v1206 = vadd.f32 %v1193, %v1205
        %v1207 = vpop.f32.mrf.mxu0
        %1208 = vdwg.mxu0
        %v1209 = vxor.u32 %v1128, 2147483648
        %v1210 = vmul.f32 %v1209, 1.442695
        %v1211 = vpow.pop %v1210
        %v1212 = vadd.f32 %v1211, 1.0
        %v1213 = vrcp.pop %v1212
        %v1214 = vmul.f32 %v1212, %v1213
        %v1215 = vsub.f32 1.0, %v1214
        %v1216 = vmul.f32 %v1213, %v1215
        %v1217 = vadd.f32 %v1213, %v1216
        %vm1218 = vweird.f32 %v1212
        %vm1219 = vweird.f32 %v1213
        %vm1220 = vmor %vm1218, %vm1219
        %v1221 = vsel %vm1220, %v1213, %v1217
        %v1222 = vand.u32 2147483647, %v1212
        %vm1223 = vcmp.eq.f32.partialorder %v1222, 8.507059e+37
        %v1224 = vand.u32 %v1212, 2147483648
        %v1225 = vor.u32 1.1754944e-38, %v1224
        %v1226 = vsel %vm1223, %v1225, %v1221
        %v1227 = vmul.f32 1.0, %v1226
        %v1228 = vxor.u32 %v1154, 2147483648
        %v1229 = vmul.f32 %v1228, 1.442695
        %v1230 = vpow.pop %v1229
        %v1231 = vadd.f32 %v1230, 1.0
        %v1232 = vrcp.pop %v1231
        %v1233 = vmul.f32 %v1231, %v1232
        %v1234 = vsub.f32 1.0, %v1233
        %v1235 = vmul.f32 %v1232, %v1234
        %v1236 = vadd.f32 %v1232, %v1235
        %vm1237 = vweird.f32 %v1231
        %vm1238 = vweird.f32 %v1232
        %vm1239 = vmor %vm1237, %vm1238
        %v1240 = vsel %vm1239, %v1232, %v1236
        %v1241 = vand.u32 2147483647, %v1231
        %vm1242 = vcmp.eq.f32.partialorder %v1241, 8.507059e+37
        %v1243 = vand.u32 %v1231, 2147483648
        %v1244 = vor.u32 1.1754944e-38, %v1243
        %v1245 = vsel %vm1242, %v1244, %v1240
        %v1246 = vmul.f32 1.0, %v1245
        %v1247 = vtanh.pop %v1180
        %v1248 = vxor.u32 %v1206, 2147483648
        %v1249 = vmul.f32 %v1248, 1.442695
        %v1250 = vpow.pop %v1249
        %v1251 = vadd.f32 %v1250, 1.0
        %v1252 = vrcp.pop %v1251
        %v1253 = vmul.f32 %v1251, %v1252
        %v1254 = vsub.f32 1.0, %v1253
        %v1255 = vmul.f32 %v1252, %v1254
        %v1256 = vadd.f32 %v1252, %v1255
        %vm1257 = vweird.f32 %v1251
        %vm1258 = vweird.f32 %v1252
        %vm1259 = vmor %vm1257, %vm1258
        %v1260 = vsel %vm1259, %v1252, %v1256
        %v1261 = vand.u32 2147483647, %v1251
        %vm1262 = vcmp.eq.f32.partialorder %v1261, 8.507059e+37
        %v1263 = vand.u32 %v1251, 2147483648
        %v1264 = vor.u32 1.1754944e-38, %v1263
        %v1265 = vsel %vm1262, %v1264, %v1260
        %v1266 = vmul.f32 1.0, %v1265
        %v1267 = vmul.f32 %v1246, %v710
        %v1268 = vmul.f32 %v1227, %v1247
        %v1269 = vadd.f32 %v1267, %v1268
        %v1270 = vtanh.pop %v1269
        %v1271 = vmul.f32 %v1266, %v1270
        %1272 = vst [vmem:[%s10] sm:$0xff] %v1269
        %1273 = vst [vmem:[%s9] sm:$0xff] %v1271
        %v1274 = vpack.c.bf16 %v1271, %v1271
        %1275 = vst [vmem:[#allocation4] sm:$0xf] %v1274
        %s1276 = scalar_lea.vmem [#allocation4], 4
        %v1277 = vld [vmem:[%s1276] sm:$0xf]
        %s1278 = scalar_lea.vmem %s10, 8
        %v1279 = vld [vmem:[%s1278] sm:$0xff]
        %s1280 = scalar_lea.vmem [#allocation9], 512
        %v1281 = vld [vmem:[%s1280] sm:$0xff]
        %v1282 = vld [vmem:[%s1280 + $0x8] sm:$0xff]
        %v1283 = vld [vmem:[%s1280 + $0x10] sm:$0xff]
        %v1284 = vld [vmem:[%s1280 + $0x18] sm:$0xff]
        %v1285 = vld [vmem:[%s1280 + $0x20] sm:$0xff]
        %v1286 = vld [vmem:[%s1280 + $0x28] sm:$0xff]
        %v1287 = vld [vmem:[%s1280 + $0x30] sm:$0xff]
        %v1288 = vld [vmem:[%s1280 + $0x38] sm:$0xff]
        %v1289 = vld [vmem:[%s1280 + $0x40] sm:$0xff]
        %v1290 = vld [vmem:[%s1280 + $0x48] sm:$0xff]
        %v1291 = vld [vmem:[%s1280 + $0x50] sm:$0xff]
        %v1292 = vld [vmem:[%s1280 + $0x58] sm:$0xff]
        %v1293 = vld [vmem:[%s1280 + $0x60] sm:$0xff]
        %v1294 = vld [vmem:[%s1280 + $0x68] sm:$0xff]
        %v1295 = vld [vmem:[%s1280 + $0x70] sm:$0xff]
        %v1296 = vld [vmem:[%s1280 + $0x78] sm:$0xff]
        %v1297 = vld [vmem:[%s1280 + $0x80] sm:$0xff]
        %v1298 = vld [vmem:[%s1280 + $0x88] sm:$0xff]
        %v1299 = vld [vmem:[%s1280 + $0x90] sm:$0xff]
        %v1300 = vld [vmem:[%s1280 + $0x98] sm:$0xff]
        %v1301 = vld [vmem:[%s1280 + $0xa0] sm:$0xff]
        %v1302 = vld [vmem:[%s1280 + $0xa8] sm:$0xff]
        %v1303 = vld [vmem:[%s1280 + $0xb0] sm:$0xff]
        %v1304 = vld [vmem:[%s1280 + $0xb8] sm:$0xff]
        %v1305 = vld [vmem:[%s1280 + $0xc0] sm:$0xff]
        %v1306 = vld [vmem:[%s1280 + $0xc8] sm:$0xff]
        %v1307 = vld [vmem:[%s1280 + $0xd0] sm:$0xff]
        %v1308 = vld [vmem:[%s1280 + $0xd8] sm:$0xff]
        %v1309 = vld [vmem:[%s1280 + $0xe0] sm:$0xff]
        %v1310 = vld [vmem:[%s1280 + $0xe8] sm:$0xff]
        %v1311 = vld [vmem:[%s1280 + $0xf0] sm:$0xff]
        %v1312 = vld [vmem:[%s1280 + $0xf8] sm:$0xff]
        %v1313 = vld [vmem:[%s1280 + $0x100] sm:$0xff]
        %v1314 = vld [vmem:[%s1280 + $0x108] sm:$0xff]
        %v1315 = vld [vmem:[%s1280 + $0x110] sm:$0xff]
        %v1316 = vld [vmem:[%s1280 + $0x118] sm:$0xff]
        %v1317 = vld [vmem:[%s1280 + $0x120] sm:$0xff]
        %v1318 = vld [vmem:[%s1280 + $0x128] sm:$0xff]
        %v1319 = vld [vmem:[%s1280 + $0x130] sm:$0xff]
        %v1320 = vld [vmem:[%s1280 + $0x138] sm:$0xff]
        %v1321 = vld [vmem:[%s1280 + $0x140] sm:$0xff]
        %v1322 = vld [vmem:[%s1280 + $0x148] sm:$0xff]
        %v1323 = vld [vmem:[%s1280 + $0x150] sm:$0xff]
        %v1324 = vld [vmem:[%s1280 + $0x158] sm:$0xff]
        %v1325 = vld [vmem:[%s1280 + $0x160] sm:$0xff]
        %v1326 = vld [vmem:[%s1280 + $0x168] sm:$0xff]
        %v1327 = vld [vmem:[%s1280 + $0x170] sm:$0xff]
        %v1328 = vld [vmem:[%s1280 + $0x178] sm:$0xff]
        %v1329 = vld [vmem:[%s1280 + $0x180] sm:$0xff]
        %v1330 = vld [vmem:[%s1280 + $0x188] sm:$0xff]
        %v1331 = vld [vmem:[%s1280 + $0x190] sm:$0xff]
        %v1332 = vld [vmem:[%s1280 + $0x198] sm:$0xff]
        %v1333 = vld [vmem:[%s1280 + $0x1a0] sm:$0xff]
        %v1334 = vld [vmem:[%s1280 + $0x1a8] sm:$0xff]
        %v1335 = vld [vmem:[%s1280 + $0x1b0] sm:$0xff]
        %v1336 = vld [vmem:[%s1280 + $0x1b8] sm:$0xff]
        %v1337 = vld [vmem:[%s1280 + $0x1c0] sm:$0xff]
        %v1338 = vld [vmem:[%s1280 + $0x1c8] sm:$0xff]
        %v1339 = vld [vmem:[%s1280 + $0x1d0] sm:$0xff]
        %v1340 = vld [vmem:[%s1280 + $0x1d8] sm:$0xff]
        %v1341 = vld [vmem:[%s1280 + $0x1e0] sm:$0xff]
        %v1342 = vld [vmem:[%s1280 + $0x1e8] sm:$0xff]
        %v1343 = vld [vmem:[%s1280 + $0x1f0] sm:$0xff]
        %v1344 = vld [vmem:[%s1280 + $0x1f8] sm:$0xff]
        %s1345 = scalar_lea.vmem [#allocation10], 4
        %v1346 = vld [vmem:[%s1345] sm:$0xf]
        %v1348 = vperm.slane %v1346, 0
        %v1349 = vperm.slane %v1346, 1
        %v1350 = vperm.slane %v1346, 2
        %v1351 = vperm.slane %v1346, 3
        %v1420 = vunpack.c.l.b16 %v1281
        %v1421 = vunpack.c.h.b16 %v1281
        %v1422 = vunpack.c.l.b16 %v1282
        %v1423 = vunpack.c.h.b16 %v1282
        %v1424 = vunpack.c.l.b16 %v1283
        %v1425 = vunpack.c.h.b16 %v1283
        %v1426 = vunpack.c.l.b16 %v1284
        %v1427 = vunpack.c.h.b16 %v1284
        %v1428 = vunpack.c.l.b16 %v1285
        %v1429 = vunpack.c.h.b16 %v1285
        %v1430 = vunpack.c.l.b16 %v1286
        %v1431 = vunpack.c.h.b16 %v1286
        %v1432 = vunpack.c.l.b16 %v1287
        %v1433 = vunpack.c.h.b16 %v1287
        %v1434 = vunpack.c.l.b16 %v1288
        %v1435 = vunpack.c.h.b16 %v1288
        %v1436 = vunpack.c.l.b16 %v1289
        %v1437 = vunpack.c.h.b16 %v1289
        %v1438 = vunpack.c.l.b16 %v1290
        %v1439 = vunpack.c.h.b16 %v1290
        %v1440 = vunpack.c.l.b16 %v1291
        %v1441 = vunpack.c.h.b16 %v1291
        %v1442 = vunpack.c.l.b16 %v1292
        %v1443 = vunpack.c.h.b16 %v1292
        %v1444 = vunpack.c.l.b16 %v1293
        %v1445 = vunpack.c.h.b16 %v1293
        %v1446 = vunpack.c.l.b16 %v1294
        %v1447 = vunpack.c.h.b16 %v1294
        %v1448 = vunpack.c.l.b16 %v1295
        %v1449 = vunpack.c.h.b16 %v1295
        %v1450 = vunpack.c.l.b16 %v1296
        %v1451 = vunpack.c.h.b16 %v1296
        %v1452 = vunpack.c.l.b16 %v1297
        %v1453 = vunpack.c.h.b16 %v1297
        %v1454 = vunpack.c.l.b16 %v1298
        %v1455 = vunpack.c.h.b16 %v1298
        %v1456 = vunpack.c.l.b16 %v1299
        %v1457 = vunpack.c.h.b16 %v1299
        %v1458 = vunpack.c.l.b16 %v1300
        %v1459 = vunpack.c.h.b16 %v1300
        %v1460 = vunpack.c.l.b16 %v1301
        %v1461 = vunpack.c.h.b16 %v1301
        %v1462 = vunpack.c.l.b16 %v1302
        %v1463 = vunpack.c.h.b16 %v1302
        %v1464 = vunpack.c.l.b16 %v1303
        %v1465 = vunpack.c.h.b16 %v1303
        %v1466 = vunpack.c.l.b16 %v1304
        %v1467 = vunpack.c.h.b16 %v1304
        %v1468 = vunpack.c.l.b16 %v1305
        %v1469 = vunpack.c.h.b16 %v1305
        %v1470 = vunpack.c.l.b16 %v1306
        %v1471 = vunpack.c.h.b16 %v1306
        %v1472 = vunpack.c.l.b16 %v1307
        %v1473 = vunpack.c.h.b16 %v1307
        %v1474 = vunpack.c.l.b16 %v1308
        %v1475 = vunpack.c.h.b16 %v1308
        %v1476 = vunpack.c.l.b16 %v1309
        %v1477 = vunpack.c.h.b16 %v1309
        %v1478 = vunpack.c.l.b16 %v1310
        %v1479 = vunpack.c.h.b16 %v1310
        %v1480 = vunpack.c.l.b16 %v1311
        %v1481 = vunpack.c.h.b16 %v1311
        %v1482 = vunpack.c.l.b16 %v1312
        %v1483 = vunpack.c.h.b16 %v1312
        %v1484 = vunpack.c.l.b16 %v1313
        %v1485 = vunpack.c.h.b16 %v1313
        %v1486 = vunpack.c.l.b16 %v1314
        %v1487 = vunpack.c.h.b16 %v1314
        %v1488 = vunpack.c.l.b16 %v1315
        %v1489 = vunpack.c.h.b16 %v1315
        %v1490 = vunpack.c.l.b16 %v1316
        %v1491 = vunpack.c.h.b16 %v1316
        %v1492 = vunpack.c.l.b16 %v1317
        %v1493 = vunpack.c.h.b16 %v1317
        %v1494 = vunpack.c.l.b16 %v1318
        %v1495 = vunpack.c.h.b16 %v1318
        %v1496 = vunpack.c.l.b16 %v1319
        %v1497 = vunpack.c.h.b16 %v1319
        %v1498 = vunpack.c.l.b16 %v1320
        %v1499 = vunpack.c.h.b16 %v1320
        %v1500 = vunpack.c.l.b16 %v1321
        %v1501 = vunpack.c.h.b16 %v1321
        %v1502 = vunpack.c.l.b16 %v1322
        %v1503 = vunpack.c.h.b16 %v1322
        %v1504 = vunpack.c.l.b16 %v1323
        %v1505 = vunpack.c.h.b16 %v1323
        %v1506 = vunpack.c.l.b16 %v1324
        %v1507 = vunpack.c.h.b16 %v1324
        %v1508 = vunpack.c.l.b16 %v1325
        %v1509 = vunpack.c.h.b16 %v1325
        %v1510 = vunpack.c.l.b16 %v1326
        %v1511 = vunpack.c.h.b16 %v1326
        %v1512 = vunpack.c.l.b16 %v1327
        %v1513 = vunpack.c.h.b16 %v1327
        %v1514 = vunpack.c.l.b16 %v1328
        %v1515 = vunpack.c.h.b16 %v1328
        %v1516 = vunpack.c.l.b16 %v1329
        %v1517 = vunpack.c.h.b16 %v1329
        %v1518 = vunpack.c.l.b16 %v1330
        %v1519 = vunpack.c.h.b16 %v1330
        %v1520 = vunpack.c.l.b16 %v1331
        %v1521 = vunpack.c.h.b16 %v1331
        %v1522 = vunpack.c.l.b16 %v1332
        %v1523 = vunpack.c.h.b16 %v1332
        %v1524 = vunpack.c.l.b16 %v1333
        %v1525 = vunpack.c.h.b16 %v1333
        %v1526 = vunpack.c.l.b16 %v1334
        %v1527 = vunpack.c.h.b16 %v1334
        %v1528 = vunpack.c.l.b16 %v1335
        %v1529 = vunpack.c.h.b16 %v1335
        %v1530 = vunpack.c.l.b16 %v1336
        %v1531 = vunpack.c.h.b16 %v1336
        %v1532 = vunpack.c.l.b16 %v1337
        %v1533 = vunpack.c.h.b16 %v1337
        %v1534 = vunpack.c.l.b16 %v1338
        %v1535 = vunpack.c.h.b16 %v1338
        %v1536 = vunpack.c.l.b16 %v1339
        %v1537 = vunpack.c.h.b16 %v1339
        %v1538 = vunpack.c.l.b16 %v1340
        %v1539 = vunpack.c.h.b16 %v1340
        %v1540 = vunpack.c.l.b16 %v1341
        %v1541 = vunpack.c.h.b16 %v1341
        %v1542 = vunpack.c.l.b16 %v1342
        %v1543 = vunpack.c.h.b16 %v1342
        %v1544 = vunpack.c.l.b16 %v1343
        %v1545 = vunpack.c.h.b16 %v1343
        %v1546 = vunpack.c.l.b16 %v1344
        %v1547 = vunpack.c.h.b16 %v1344
        %v1548 = vpack.c.b16 %v1424, %v1420
        %v1549 = vpack.c.b16 %v1425, %v1421
        %v1550 = vpack.c.b16 %v1426, %v1422
        %v1551 = vpack.c.b16 %v1427, %v1423
        %v1552 = vpack.c.b16 %v1432, %v1428
        %v1553 = vpack.c.b16 %v1433, %v1429
        %v1554 = vpack.c.b16 %v1434, %v1430
        %v1555 = vpack.c.b16 %v1435, %v1431
        %v1556 = vpack.c.b16 %v1440, %v1436
        %v1557 = vpack.c.b16 %v1441, %v1437
        %v1558 = vpack.c.b16 %v1442, %v1438
        %v1559 = vpack.c.b16 %v1443, %v1439
        %v1560 = vpack.c.b16 %v1448, %v1444
        %v1561 = vpack.c.b16 %v1449, %v1445
        %v1562 = vpack.c.b16 %v1450, %v1446
        %v1563 = vpack.c.b16 %v1451, %v1447
        %v1564 = vpack.c.b16 %v1456, %v1452
        %v1565 = vpack.c.b16 %v1457, %v1453
        %v1566 = vpack.c.b16 %v1458, %v1454
        %v1567 = vpack.c.b16 %v1459, %v1455
        %v1568 = vpack.c.b16 %v1464, %v1460
        %v1569 = vpack.c.b16 %v1465, %v1461
        %v1570 = vpack.c.b16 %v1466, %v1462
        %v1571 = vpack.c.b16 %v1467, %v1463
        %v1572 = vpack.c.b16 %v1472, %v1468
        %v1573 = vpack.c.b16 %v1473, %v1469
        %v1574 = vpack.c.b16 %v1474, %v1470
        %v1575 = vpack.c.b16 %v1475, %v1471
        %v1576 = vpack.c.b16 %v1480, %v1476
        %v1577 = vpack.c.b16 %v1481, %v1477
        %v1578 = vpack.c.b16 %v1482, %v1478
        %v1579 = vpack.c.b16 %v1483, %v1479
        %v1580 = vpack.c.b16 %v1488, %v1484
        %v1581 = vpack.c.b16 %v1489, %v1485
        %v1582 = vpack.c.b16 %v1490, %v1486
        %v1583 = vpack.c.b16 %v1491, %v1487
        %v1584 = vpack.c.b16 %v1496, %v1492
        %v1585 = vpack.c.b16 %v1497, %v1493
        %v1586 = vpack.c.b16 %v1498, %v1494
        %v1587 = vpack.c.b16 %v1499, %v1495
        %v1588 = vpack.c.b16 %v1504, %v1500
        %v1589 = vpack.c.b16 %v1505, %v1501
        %v1590 = vpack.c.b16 %v1506, %v1502
        %v1591 = vpack.c.b16 %v1507, %v1503
        %v1592 = vpack.c.b16 %v1512, %v1508
        %v1593 = vpack.c.b16 %v1513, %v1509
        %v1594 = vpack.c.b16 %v1514, %v1510
        %v1595 = vpack.c.b16 %v1515, %v1511
        %v1596 = vpack.c.b16 %v1520, %v1516
        %v1597 = vpack.c.b16 %v1521, %v1517
        %v1598 = vpack.c.b16 %v1522, %v1518
        %v1599 = vpack.c.b16 %v1523, %v1519
        %v1600 = vpack.c.b16 %v1528, %v1524
        %v1601 = vpack.c.b16 %v1529, %v1525
        %v1602 = vpack.c.b16 %v1530, %v1526
        %v1603 = vpack.c.b16 %v1531, %v1527
        %v1604 = vpack.c.b16 %v1536, %v1532
        %v1605 = vpack.c.b16 %v1537, %v1533
        %v1606 = vpack.c.b16 %v1538, %v1534
        %v1607 = vpack.c.b16 %v1539, %v1535
        %v1608 = vpack.c.b16 %v1544, %v1540
        %v1609 = vpack.c.b16 %v1545, %v1541
        %v1610 = vpack.c.b16 %v1546, %v1542
        %v1611 = vpack.c.b16 %v1547, %v1543
        %1676 = vmatpush.bf16.msra.mxu0 %v1576
        %1677 = vmatpush.bf16.msra.mxu0 %v1572
        %1678 = vmatpush.bf16.msra.mxu0 %v1568
        %1679 = vmatpush.bf16.msra.mxu0 %v1564
        %1680 = vmatpush.bf16.msra.mxu0 %v1560
        %1681 = vmatpush.bf16.msra.mxu0 %v1556
        %1682 = vmatpush.bf16.msra.mxu0 %v1552
        %1683 = vmatpush.bf16.msra.mxu0 %v1548
        %1684 = vmatmul.bf16.gmra.mxu0 %v1274
        %v1685 = vpop.f32.mrf.mxu0
        %v1686 = vadd.f32 %v1348, %v1685
        %v1687 = vpop.f32.mrf.mxu0
        %1688 = vdwg.mxu0
        %1689 = vmatpush.bf16.msra.mxu0 %v1608
        %1690 = vmatpush.bf16.msra.mxu0 %v1604
        %1691 = vmatpush.bf16.msra.mxu0 %v1600
        %1692 = vmatpush.bf16.msra.mxu0 %v1596
        %1693 = vmatpush.bf16.msra.mxu0 %v1592
        %1694 = vmatpush.bf16.msra.mxu0 %v1588
        %1695 = vmatpush.bf16.msra.mxu0 %v1584
        %1696 = vmatpush.bf16.msra.mxu0 %v1580
        %1697 = vmatmul.bf16.gmra.mxu0 %v1277
        %v1698 = vpop.f32.mrf.mxu0
        %v1699 = vadd.f32 %v1686, %v1698
        %v1700 = vpop.f32.mrf.mxu0
        %1701 = vdwg.mxu0
        %1702 = vmatpush.bf16.msra.mxu0 %v1577
        %1703 = vmatpush.bf16.msra.mxu0 %v1573
        %1704 = vmatpush.bf16.msra.mxu0 %v1569
        %1705 = vmatpush.bf16.msra.mxu0 %v1565
        %1706 = vmatpush.bf16.msra.mxu0 %v1561
        %1707 = vmatpush.bf16.msra.mxu0 %v1557
        %1708 = vmatpush.bf16.msra.mxu0 %v1553
        %1709 = vmatpush.bf16.msra.mxu0 %v1549
        %1710 = vmatmul.bf16.gmra.mxu0 %v1274
        %v1711 = vpop.f32.mrf.mxu0
        %v1712 = vadd.f32 %v1349, %v1711
        %v1713 = vpop.f32.mrf.mxu0
        %1714 = vdwg.mxu0
        %1715 = vmatpush.bf16.msra.mxu0 %v1609
        %1716 = vmatpush.bf16.msra.mxu0 %v1605
        %1717 = vmatpush.bf16.msra.mxu0 %v1601
        %1718 = vmatpush.bf16.msra.mxu0 %v1597
        %1719 = vmatpush.bf16.msra.mxu0 %v1593
        %1720 = vmatpush.bf16.msra.mxu0 %v1589
        %1721 = vmatpush.bf16.msra.mxu0 %v1585
        %1722 = vmatpush.bf16.msra.mxu0 %v1581
        %1723 = vmatmul.bf16.gmra.mxu0 %v1277
        %v1724 = vpop.f32.mrf.mxu0
        %v1725 = vadd.f32 %v1712, %v1724
        %v1726 = vpop.f32.mrf.mxu0
        %1727 = vdwg.mxu0
        %1728 = vmatpush.bf16.msra.mxu0 %v1578
        %1729 = vmatpush.bf16.msra.mxu0 %v1574
        %1730 = vmatpush.bf16.msra.mxu0 %v1570
        %1731 = vmatpush.bf16.msra.mxu0 %v1566
        %1732 = vmatpush.bf16.msra.mxu0 %v1562
        %1733 = vmatpush.bf16.msra.mxu0 %v1558
        %1734 = vmatpush.bf16.msra.mxu0 %v1554
        %1735 = vmatpush.bf16.msra.mxu0 %v1550
        %1736 = vmatmul.bf16.gmra.mxu0 %v1274
        %v1737 = vpop.f32.mrf.mxu0
        %v1738 = vadd.f32 %v1350, %v1737
        %v1739 = vpop.f32.mrf.mxu0
        %1740 = vdwg.mxu0
        %1741 = vmatpush.bf16.msra.mxu0 %v1610
        %1742 = vmatpush.bf16.msra.mxu0 %v1606
        %1743 = vmatpush.bf16.msra.mxu0 %v1602
        %1744 = vmatpush.bf16.msra.mxu0 %v1598
        %1745 = vmatpush.bf16.msra.mxu0 %v1594
        %1746 = vmatpush.bf16.msra.mxu0 %v1590
        %1747 = vmatpush.bf16.msra.mxu0 %v1586
        %1748 = vmatpush.bf16.msra.mxu0 %v1582
        %1749 = vmatmul.bf16.gmra.mxu0 %v1277
        %v1750 = vpop.f32.mrf.mxu0
        %v1751 = vadd.f32 %v1738, %v1750
        %v1752 = vpop.f32.mrf.mxu0
        %1753 = vdwg.mxu0
        %1754 = vmatpush.bf16.msra.mxu0 %v1579
        %1755 = vmatpush.bf16.msra.mxu0 %v1575
        %1756 = vmatpush.bf16.msra.mxu0 %v1571
        %1757 = vmatpush.bf16.msra.mxu0 %v1567
        %1758 = vmatpush.bf16.msra.mxu0 %v1563
        %1759 = vmatpush.bf16.msra.mxu0 %v1559
        %1760 = vmatpush.bf16.msra.mxu0 %v1555
        %1761 = vmatpush.bf16.msra.mxu0 %v1551
        %1762 = vmatmul.bf16.gmra.mxu0 %v1274
        %v1763 = vpop.f32.mrf.mxu0
        %v1764 = vadd.f32 %v1351, %v1763
        %v1765 = vpop.f32.mrf.mxu0
        %1766 = vdwg.mxu0
        %1767 = vmatpush.bf16.msra.mxu0 %v1611
        %1768 = vmatpush.bf16.msra.mxu0 %v1607
        %1769 = vmatpush.bf16.msra.mxu0 %v1603
        %1770 = vmatpush.bf16.msra.mxu0 %v1599
        %1771 = vmatpush.bf16.msra.mxu0 %v1595
        %1772 = vmatpush.bf16.msra.mxu0 %v1591
        %1773 = vmatpush.bf16.msra.mxu0 %v1587
        %1774 = vmatpush.bf16.msra.mxu0 %v1583
        %1775 = vmatmul.bf16.gmra.mxu0 %v1277
        %v1776 = vpop.f32.mrf.mxu0
        %v1777 = vadd.f32 %v1764, %v1776
        %v1778 = vpop.f32.mrf.mxu0
        %1779 = vdwg.mxu0
        %v1780 = vxor.u32 %v1699, 2147483648
        %v1781 = vmul.f32 %v1780, 1.442695
        %v1782 = vpow.pop %v1781
        %v1783 = vadd.f32 %v1782, 1.0
        %v1784 = vrcp.pop %v1783
        %v1785 = vmul.f32 %v1783, %v1784
        %v1786 = vsub.f32 1.0, %v1785
        %v1787 = vmul.f32 %v1784, %v1786
        %v1788 = vadd.f32 %v1784, %v1787
        %vm1789 = vweird.f32 %v1783
        %vm1790 = vweird.f32 %v1784
        %vm1791 = vmor %vm1789, %vm1790
        %v1792 = vsel %vm1791, %v1784, %v1788
        %v1793 = vand.u32 2147483647, %v1783
        %vm1794 = vcmp.eq.f32.partialorder %v1793, 8.507059e+37
        %v1795 = vand.u32 %v1783, 2147483648
        %v1796 = vor.u32 1.1754944e-38, %v1795
        %v1797 = vsel %vm1794, %v1796, %v1792
        %v1798 = vmul.f32 1.0, %v1797
        %v1799 = vxor.u32 %v1725, 2147483648
        %v1800 = vmul.f32 %v1799, 1.442695
        %v1801 = vpow.pop %v1800
        %v1802 = vadd.f32 %v1801, 1.0
        %v1803 = vrcp.pop %v1802
        %v1804 = vmul.f32 %v1802, %v1803
        %v1805 = vsub.f32 1.0, %v1804
        %v1806 = vmul.f32 %v1803, %v1805
        %v1807 = vadd.f32 %v1803, %v1806
        %vm1808 = vweird.f32 %v1802
        %vm1809 = vweird.f32 %v1803
        %vm1810 = vmor %vm1808, %vm1809
        %v1811 = vsel %vm1810, %v1803, %v1807
        %v1812 = vand.u32 2147483647, %v1802
        %vm1813 = vcmp.eq.f32.partialorder %v1812, 8.507059e+37
        %v1814 = vand.u32 %v1802, 2147483648
        %v1815 = vor.u32 1.1754944e-38, %v1814
        %v1816 = vsel %vm1813, %v1815, %v1811
        %v1817 = vmul.f32 1.0, %v1816
        %v1818 = vtanh.pop %v1751
        %v1819 = vxor.u32 %v1777, 2147483648
        %v1820 = vmul.f32 %v1819, 1.442695
        %v1821 = vpow.pop %v1820
        %v1822 = vadd.f32 %v1821, 1.0
        %v1823 = vrcp.pop %v1822
        %v1824 = vmul.f32 %v1822, %v1823
        %v1825 = vsub.f32 1.0, %v1824
        %v1826 = vmul.f32 %v1823, %v1825
        %v1827 = vadd.f32 %v1823, %v1826
        %vm1828 = vweird.f32 %v1822
        %vm1829 = vweird.f32 %v1823
        %vm1830 = vmor %vm1828, %vm1829
        %v1831 = vsel %vm1830, %v1823, %v1827
        %v1832 = vand.u32 2147483647, %v1822
        %vm1833 = vcmp.eq.f32.partialorder %v1832, 8.507059e+37
        %v1834 = vand.u32 %v1822, 2147483648
        %v1835 = vor.u32 1.1754944e-38, %v1834
        %v1836 = vsel %vm1833, %v1835, %v1831
        %v1837 = vmul.f32 1.0, %v1836
        %v1838 = vmul.f32 %v1817, %v1279
        %v1839 = vmul.f32 %v1798, %v1818
        %v1840 = vadd.f32 %v1838, %v1839
        %v1841 = vtanh.pop %v1840
        %v1842 = vmul.f32 %v1837, %v1841
        %1843 = vst [vmem:[%s1278] sm:$0xff] %v1840
        %s1844 = scalar_lea.vmem %s9, 8
        %1845 = vst [vmem:[%s1844] sm:$0xff] %v1842
        %v1846 = vpack.c.bf16 %v1842, %v1842
        %1847 = vst [vmem:[%s1276] sm:$0xf] %v1846
        %v1848 = vld [vmem:[%s6] sm:$0xf]
        %v1849 = vld [vmem:[%s6 + $0x4] sm:$0xf]
        %v1850 = vld [vmem:[%s6 + $0x8] sm:$0xf]
        %v1851 = vld [vmem:[%s6 + $0xc] sm:$0xf]
        %v1852 = vld [vmem:[%s6 + $0x10] sm:$0xf]
        %v1853 = vld [vmem:[%s6 + $0x14] sm:$0xf]
        %v1854 = vld [vmem:[%s6 + $0x18] sm:$0xf]
        %v1855 = vld [vmem:[%s6 + $0x1c] sm:$0xf]
        %v1856 = vld [vmem:[%s6 + $0x20] sm:$0xf]
        %v1857 = vld [vmem:[%s6 + $0x24] sm:$0xf]
        %v1858 = vld [vmem:[%s6 + $0x28] sm:$0xf]
        %v1859 = vld [vmem:[%s6 + $0x2c] sm:$0xf]
        %v1860 = vld [vmem:[%s6 + $0x30] sm:$0xf]
        %v1861 = vld [vmem:[%s6 + $0x34] sm:$0xf]
        %v1862 = vld [vmem:[%s6 + $0x38] sm:$0xf]
        %v1863 = vld [vmem:[%s6 + $0x3c] sm:$0xf]
        %v1864 = vld [vmem:[%s7] sm:$0x1]
        %v1866 = vperm.slane %v1864, 0
        %v1884 = vunpack.c.l.b16 %v1848
        %v1885 = vunpack.c.l.b16 %v1849
        %v1886 = vunpack.c.l.b16 %v1850
        %v1887 = vunpack.c.l.b16 %v1851
        %v1888 = vunpack.c.l.b16 %v1852
        %v1889 = vunpack.c.l.b16 %v1853
        %v1890 = vunpack.c.l.b16 %v1854
        %v1891 = vunpack.c.l.b16 %v1855
        %v1892 = vunpack.c.l.b16 %v1856
        %v1893 = vunpack.c.l.b16 %v1857
        %v1894 = vunpack.c.l.b16 %v1858
        %v1895 = vunpack.c.l.b16 %v1859
        %v1896 = vunpack.c.l.b16 %v1860
        %v1897 = vunpack.c.l.b16 %v1861
        %v1898 = vunpack.c.l.b16 %v1862
        %v1899 = vunpack.c.l.b16 %v1863
        %v1900 = vpack.c.b16 %v1885, %v1884
        %v1901 = vpack.c.b16 %v1887, %v1886
        %v1902 = vpack.c.b16 %v1889, %v1888
        %v1903 = vpack.c.b16 %v1891, %v1890
        %v1904 = vpack.c.b16 %v1893, %v1892
        %v1905 = vpack.c.b16 %v1895, %v1894
        %v1906 = vpack.c.b16 %v1897, %v1896
        %v1907 = vpack.c.b16 %v1899, %v1898
        %1916 = vmatpush.bf16.msra.mxu0 %v1907
        %1917 = vmatpush.bf16.msra.mxu0 %v1906
        %1918 = vmatpush.bf16.msra.mxu0 %v1905
        %1919 = vmatpush.bf16.msra.mxu0 %v1904
        %1920 = vmatpush.bf16.msra.mxu0 %v1903
        %1921 = vmatpush.bf16.msra.mxu0 %v1902
        %1922 = vmatpush.bf16.msra.mxu0 %v1901
        %1923 = vmatpush.bf16.msra.mxu0 %v1900
        %1924 = vmatmul.bf16.gmra.mxu0 %v1846
        %v1925 = vpop.f32.mrf.mxu0
        %v1926 = vadd.f32 %v1866, %v1925
        %v1927 = vpop.f32.mrf.mxu0
        %1928 = vdwg.mxu0
        %1929 = vst [vmem:[%s350] sm:$0xff] %v1926
        %s1930 = sand.u32 %s183, 1
        %s1931 = scalar_lea.sflag [#allocation7], %s1930
        %s1932 = sand.u32 %s183, 1
        %s1933 = smul.addr %s1932, 8
        %s1934 = scalar_lea.vmem [#allocation12], %s1933
        // Predicated region
        $region133: #{decoder_decode_steps.1} parent=47 // pred_check
          %p1935 = pneg %p193
        $region134: #{decoder_decode_steps.1} parent=47 // pred_check_branch
          %1937 = sbr.rel (%p1935) target = $region136
        $region135: #{decoder_decode_steps.1} parent=47 // pred_region
          %1939 = vsyncadd %s1931, 0
          %s1940 = smul.addr %s28, 8
          %s1941 = scalar_lea.hbm %s8, %s1940
          %s1943 = sshll.u32 %s1934, 4
          %s1944 = int_to_ptr.vmem [resolvable:$true] %s1943
          %s1945 = sshll.u32 %s1941, 4
          %s1946 = int_to_ptr.hbm [resolvable:$true] %s1945
          %1948 = dma.vmem_to_hbm [thread:$0]  %s1944, 128, %s1946, %s1931
        $region136: #{decoder_decode_steps.1} parent=47 // pred_fallthru
          _
        // Predicated region
        $region137: #{decoder_decode_steps.1} parent=47 // pred_check
          %p1949 = pneg %p214
        $region138: #{decoder_decode_steps.1} parent=47 // pred_check_branch
          %1951 = sbr.rel (%p1949) target = $region140
        $region139: #{decoder_decode_steps.1} parent=47 // pred_region
          _
        $region140: #{decoder_decode_steps.1} parent=47 // pred_fallthru
          _
        // Predicated region
        $region141: #{decoder_decode_steps.1} parent=47 // pred_check
          %p1952 = pneg %p235
        $region142: #{decoder_decode_steps.1} parent=47 // pred_check_branch
          %1954 = sbr.rel (%p1952) target = $region144
        $region143: #{decoder_decode_steps.1} parent=47 // pred_region
          _
        $region144: #{decoder_decode_steps.1} parent=47 // pred_fallthru
          _
        // Predicated region
        $region145: #{decoder_decode_steps.1} parent=47 // pred_check
          %p1955 = pneg %p214
        $region146: #{decoder_decode_steps.1} parent=47 // pred_check_branch
          %1957 = sbr.rel (%p1955) target = $region148
        $region147: #{decoder_decode_steps.1} parent=47 // pred_region
          _
        $region148: #{decoder_decode_steps.1} parent=47 // pred_fallthru
          _
        // Predicated region
        $region149: #{decoder_decode_steps.1} parent=47 // pred_check
          %p1958 = pneg %p235
        $region150: #{decoder_decode_steps.1} parent=47 // pred_check_branch
          %1960 = sbr.rel (%p1958) target = $region152
        $region151: #{decoder_decode_steps.1} parent=47 // pred_region
          _
        $region152: #{decoder_decode_steps.1} parent=47 // pred_fallthru
          _
      $region48: #{decoder_decode_steps.1} parent=5 // pred_fallthru
        _
      %p1961 = scmp.le.s32.totalorder 2, %s23
      // Predicated region
      $region153: #{decoder_decode_steps.1} parent=5 // pred_check
        %p1962 = pneg %p1961
      $region154: #{decoder_decode_steps.1} parent=5 // pred_check_branch
        %1964 = sbr.rel (%p1962) target = $region156
      $region155: #{decoder_decode_steps.1} parent=5 // pred_region
        %s1965 = ssub.s32 %s23, 2
        // Predicated region
        $region157: #{decoder_decode_steps.1} parent=155 // pred_check
          %p1966 = pneg %p199
        $region158: #{decoder_decode_steps.1} parent=155 // pred_check_branch
          %1968 = sbr.rel (%p1966) target = $region160
        $region159: #{decoder_decode_steps.1} parent=155 // pred_region
          %s1969 = sand.u32 %s184, 1
          %s1970 = scalar_lea.sflag [#allocation7], %s1969
          %s1971 = sand.u32 %s184, 1
          %s1972 = smul.addr %s1971, 8
          %s1973 = scalar_lea.vmem [#allocation12], %s1972
          %1975 = dma.done %s1970, 128
        $region160: #{decoder_decode_steps.1} parent=155 // pred_fallthru
          _
      $region156: #{decoder_decode_steps.1} parent=5 // pred_fallthru
        _
    $region6: #{decoder_decode_steps.1} parent=1 // loop_footer
      %s27 = sadd.s32 1, %s23
    $region7: #{decoder_decode_steps.1} parent=1 // loop_footer_branch
      %22 = sbr.rel target = $region3
    $region8: #{decoder_decode_steps.1} parent=1 // loop_exit
      _
    %1976 = vsyncpa [#allocation6], 1
    %s1977 = scalar_lea.sflag [#allocation6], 1
    %1978 = vsyncpa %s1977, 1
    %1979 = vsyncpa [#allocation11], 1
    %1980 = vsyncpa [#allocation7], 1
    %s1981 = scalar_lea.sflag [#allocation7], 1
    %1982 = vsyncpa %s1981, 1
    %1983 = vsyncpa [#allocation8], 1
    %s1984 = scalar_lea.sflag [#allocation8], 1
    %1985 = vsyncpa %s1984, 1
  %1986 = vsyncmov [#allocation3]
  %s1987 = vpop.sfrf %1986
  %p1988 = scmp.eq.s32.totalorder %s1987, 0
  %p1989 = pneg %p1988
  %1991 = shalt.err (%p1989)
  %s1992 = scalar_lea.sflag [#allocation3], 1
  %1993 = vsyncmov %s1992
  %s1994 = vpop.sfrf %1993
  %p1995 = scmp.eq.s32.totalorder %s1994, 0
  %p1996 = pneg %p1995
  %1998 = shalt.err (%p1996)
  %s1999 = scalar_lea.sflag [#allocation3], 2
  %2000 = vsyncmov %s1999
  %s2001 = vpop.sfrf %2000
  %p2002 = scmp.eq.s32.totalorder %s2001, 0
  %p2003 = pneg %p2002
  %2005 = shalt.err (%p2003)
  %s2006 = scalar_lea.sflag [#allocation3], 3
  %2007 = vsyncmov %s2006
  %s2008 = vpop.sfrf %2007
  %p2009 = scmp.eq.s32.totalorder %s2008, 0
  %p2010 = pneg %p2009
  %2012 = shalt.err (%p2010)
  %s2013 = scalar_lea.sflag [#allocation3], 4
  %2014 = vsyncmov %s2013
  %s2015 = vpop.sfrf %2014
  %p2016 = scmp.eq.s32.totalorder %s2015, 0
  %p2017 = pneg %p2016
  %2019 = shalt.err (%p2017)
  %s2020 = scalar_lea.sflag [#allocation3], 5
  %2021 = vsyncmov %s2020
  %s2022 = vpop.sfrf %2021
  %p2023 = scmp.eq.s32.totalorder %s2022, 0
  %p2024 = pneg %p2023
  %2026 = shalt.err (%p2024)
  %s2027 = scalar_lea.sflag [#allocation3], 6
  %2028 = vsyncmov %s2027
  %s2029 = vpop.sfrf %2028
  %p2030 = scmp.eq.s32.totalorder %s2029, 0
  %p2031 = pneg %p2030
  %2033 = shalt.err (%p2031)
  %s2034 = scalar_lea.sflag [#allocation3], 7
  %2035 = vsyncmov %s2034
  %s2036 = vpop.sfrf %2035
  %p2037 = scmp.eq.s32.totalorder %s2036, 0
  %p2038 = pneg %p2037
  %2040 = shalt.err (%p2038)
  %s2041 = scalar_lea.sflag [#allocation3], 8
  %2042 = vsyncmov %s2041
  %s2043 = vpop.sfrf %2042
  %p2044 = scmp.eq.s32.totalorder %s2043, 0
  %p2045 = pneg %p2044
  %2047 = shalt.err (%p2045)
  %s2048 = scalar_lea.sflag [#allocation3], 9
  %2049 = vsyncmov %s2048
  %s2050 = vpop.sfrf %2049
  %p2051 = scmp.eq.s32.totalorder %s2050, 0
  %p2052 = pneg %p2051
  %2054 = shalt.err (%p2052)
  %s2055 = scalar_lea.sflag [#allocation3], 10
  %2056 = vsyncmov %s2055
  %s2057 = vpop.sfrf %2056
  %p2058 = scmp.eq.s32.totalorder %s2057, 0
  %p2059 = pneg %p2058
  %2061 = shalt.err (%p2059)
  %s2062 = scalar_lea.sflag [#allocation3], 11
  %2063 = vsyncmov %s2062
  %s2064 = vpop.sfrf %2063
  %p2065 = scmp.eq.s32.totalorder %s2064, 0
  %p2066 = pneg %p2065
  %2068 = shalt.err (%p2066)
  %s2069 = scalar_lea.sflag [#allocation3], 12
  %2070 = vsyncmov %s2069
  %s2071 = vpop.sfrf %2070
  %p2072 = scmp.eq.s32.totalorder %s2071, 0
  %p2073 = pneg %p2072
  %2075 = shalt.err (%p2073)
  %s2076 = scalar_lea.sflag [#allocation3], 13
  %2077 = vsyncmov %s2076
  %s2078 = vpop.sfrf %2077
  %p2079 = scmp.eq.s32.totalorder %s2078, 0
  %p2080 = pneg %p2079
  %2082 = shalt.err (%p2080)
  %s2083 = scalar_lea.sflag [#allocation3], 14
  %2084 = vsyncmov %s2083
  %s2085 = vpop.sfrf %2084
  %p2086 = scmp.eq.s32.totalorder %s2085, 0
  %p2087 = pneg %p2086
  %2089 = shalt.err (%p2087)
  %s2090 = scalar_lea.sflag [#allocation3], 15
  %2091 = vsyncmov %s2090
  %s2092 = vpop.sfrf %2091
  %p2093 = scmp.eq.s32.totalorder %s2092, 0
  %p2094 = pneg %p2093
  %2096 = shalt.err (%p2094)

</llo_original>
